<compile_context>
chip_gen: v7x
topology: tpu7x:2x2x1
jax: 0.10.0
libtpu: 0.0.40
codegen_flags: <defaults>
</compile_context>

<pallas_src>
import functools

import jax
import jax.numpy as jnp
from jax import lax
from jax.experimental import pallas as pl
from jax.experimental.pallas import tpu as pltpu

INPUT_SIZE = 13
HIDDEN_SIZE = 50
FC_HIDDEN = 25
OUTPUT_SIZE = 1

HIDDEN_PAD = 128   # each gate gets its own 128-lane block
FC_PAD = 128       # fc hidden padded to one lane block
OUT_PAD = 128      # lane-dense output (real value in column 0)
TIME_CHUNK = 32    # timesteps per grid step (bounds VMEM + unroll)


def _lstm_kernel(T, Tc, Bp,
                 x_ref, wih1_ref, whh1_ref, b1_ref,
                 w2_ref, b2_ref,
                 wfc1_ref, bfc1_ref, wfc2_ref, bfc2_ref,
                 out_ref,
                 xg_ref, state_ref):
    Hp = HIDDEN_PAD
    chunk = pl.program_id(0)

    # ---- init persistent state scratch on the first chunk -------------------
    @pl.when(chunk == 0)
    def _():
        state_ref[...] = jnp.zeros_like(state_ref)

    # ---- Phase 1 (per chunk, non-recurrent): layer-1 input projection -------
    # (Tc*Bp, I) @ (I, 4*Hp) + b1 for all timesteps of this chunk.
    xg_ref[...] = (jnp.dot(x_ref[...], wih1_ref[...],
                           preferred_element_type=jnp.float32)
                   + b1_ref[...])

    # Hoist the bias broadcast out of the recurrence loop.
    b2 = jnp.broadcast_to(b2_ref[...], (Bp, 4 * Hp))

    def sigmoid(x):
        # EUP-cheaper than jax.nn.sigmoid: 1 tanh + 1 FMA vs exp + divide.
        return 0.5 * jnp.tanh(0.5 * x) + 0.5

    def gates_to_hc(gates, c_prev):
        # PyTorch gate order [i, f, g, o]; each gate is a clean 128-lane block.
        i_g = sigmoid(gates[:, 0 * Hp:1 * Hp])
        f_g = sigmoid(gates[:, 1 * Hp:2 * Hp])
        g_g = jnp.tanh(gates[:, 2 * Hp:3 * Hp])
        o_g = sigmoid(gates[:, 3 * Hp:4 * Hp])
        c_new = f_g * c_prev + i_g * g_g
        h_new = o_g * jnp.tanh(c_new)
        return h_new, c_new

    t0 = chunk * Tc

    # ---- Phase 2: sequential recurrence, states live in vregs as carries ----
    def step(t, carry):
        h1, c1, h2, c2 = carry
        row = pl.multiple_of(t * Bp, Bp)
        xg = xg_ref[pl.ds(row, Bp), :]                        # (Bp, 4*Hp)
        gates1 = xg + jnp.dot(h1, whh1_ref[...],
                              preferred_element_type=jnp.float32)
        h1n, c1n = gates_to_hc(gates1, c1)
        # TODO(synk): nn.LSTM dropout=0.2 between layers only fires in train();
        # eval-mode semantics (identity) are reproduced here.
        hcat = jnp.concatenate([h1n, h2], axis=1)             # (Bp, 2*Hp)
        gates2 = jnp.dot(hcat, w2_ref[...],
                         preferred_element_type=jnp.float32) + b2
        h2n, c2n = gates_to_hc(gates2, c2)
        if T % Tc != 0:
            # Mask padded tail timesteps so the state is left unchanged.
            valid = (t0 + t) < T
            h1n = jnp.where(valid, h1n, h1)
            c1n = jnp.where(valid, c1n, c1)
            h2n = jnp.where(valid, h2n, h2)
            c2n = jnp.where(valid, c2n, c2)
        return h1n, c1n, h2n, c2n

    carry0 = (state_ref[0], state_ref[1], state_ref[2], state_ref[3])
    h1, c1, h2, c2 = lax.fori_loop(0, Tc, step, carry0, unroll=True)

    # Persist state across chunks.
    state_ref[0] = h1
    state_ref[1] = c1
    state_ref[2] = h2
    state_ref[3] = c2

    # ---- Phase 3 (last chunk only): FC head, lane-dense / padded ------------
    @pl.when(chunk == pl.num_programs(0) - 1)
    def _():
        z = jnp.maximum(jnp.dot(h2, wfc1_ref[...],
                                preferred_element_type=jnp.float32)
                        + bfc1_ref[...], 0.0)
        out_ref[...] = (jnp.dot(z, wfc2_ref[...],
                                preferred_element_type=jnp.float32)
                        + bfc2_ref[...])


def _pack_params(params):
    """Pad weights so every gate / feature block is 128-lane aligned.

    All padding is exact zeros (see invariant at the top of the file)."""
    (wih1, whh1, b1, wih2, whh2, b2, wfc1, bfc1, wfc2, bfc2) = params
    H, Hp = HIDDEN_SIZE, HIDDEN_PAD

    def pad_gate_cols(w):
        # (K, 4*H) -> (K, 4*Hp), gate g lands at columns [g*Hp, g*Hp+H).
        K = w.shape[0]
        out = jnp.zeros((K, 4, Hp), w.dtype).at[:, :, :H].set(
            w.reshape(K, 4, H))
        return out.reshape(K, 4 * Hp)

    def pad_rows(w, Kp):
        return jnp.zeros((Kp, w.shape[1]), w.dtype).at[:w.shape[0]].set(w)

    wih1_p = pad_gate_cols(wih1)                           # (I, 4*Hp)
    whh1_p = pad_rows(pad_gate_cols(whh1), Hp)             # (Hp, 4*Hp)
    b1_p = pad_gate_cols(b1)                               # (1, 4*Hp)
    wih2_p = pad_rows(pad_gate_cols(wih2), Hp)             # (Hp, 4*Hp)
    whh2_p = pad_rows(pad_gate_cols(whh2), Hp)             # (Hp, 4*Hp)
    w2_p = jnp.concatenate([wih2_p, whh2_p], axis=0)       # (2*Hp, 4*Hp)
    b2_p = pad_gate_cols(b2)                               # (1, 4*Hp)

    wfc1_p = jnp.zeros((Hp, FC_PAD), wfc1.dtype).at[:H, :FC_HIDDEN].set(wfc1)
    bfc1_p = jnp.zeros((1, FC_PAD), bfc1.dtype).at[:, :FC_HIDDEN].set(bfc1)
    wfc2_p = jnp.zeros((FC_PAD, OUT_PAD),
                       wfc2.dtype).at[:FC_HIDDEN, :OUTPUT_SIZE].set(wfc2)
    bfc2_p = jnp.zeros((1, OUT_PAD), bfc2.dtype).at[:, :OUTPUT_SIZE].set(bfc2)

    return (wih1_p, whh1_p, b1_p, w2_p, b2_p, wfc1_p, bfc1_p, wfc2_p, bfc2_p)


@jax.jit
def lstm_model_forward(x, params):
    """x: (B, T, INPUT_SIZE) float32 -> (B, OUTPUT_SIZE) float32."""
    B, T, I = x.shape
    Bp = max(8, ((B + 7) // 8) * 8)                        # sublane-pad batch
    Tc = min(T, TIME_CHUNK)                                # timesteps / chunk
    n_chunks = (T + Tc - 1) // Tc
    T_pad = n_chunks * Tc

    # Layout plumbing only: time-major, batch+time padded, flat (T_pad*Bp, I).
    x_tm = jnp.transpose(x, (1, 0, 2))                     # (T, B, I)
    x_tm = jnp.pad(x_tm, ((0, T_pad - T), (0, Bp - B), (0, 0)))
    x2d = x_tm.reshape(T_pad * Bp, I)

    packed = _pack_params(params)

    kernel = functools.partial(_lstm_kernel, T, Tc, Bp)

    def fixed(shape):
        return pl.BlockSpec(shape, lambda c: (0,) * len(shape))

    # Explicit VMEM budget: inputs (double-buffered) + output + scratch.
    weight_bytes = sum(int(w.size) * w.dtype.itemsize for w in packed)
    x_chunk_bytes = Tc * Bp * I * 4
    out_bytes = Bp * OUT_PAD * 4
    scratch_bytes = (Tc * Bp * 4 * HIDDEN_PAD + 4 * Bp * HIDDEN_PAD) * 4
    vmem_estimate = int(2 * (weight_bytes + x_chunk_bytes + out_bytes)
                        + scratch_bytes + (4 << 20))
    vmem_limit = max(vmem_estimate, 32 << 20)              # safe on v5e/v6e/v7x

    grid_spec = pltpu.PrefetchScalarGridSpec(
        num_scalar_prefetch=0,
        grid=(n_chunks,),
        in_specs=[
            pl.BlockSpec((Tc * Bp, I), lambda c: (c, 0)),  # x (one time chunk)
            fixed((I, 4 * HIDDEN_PAD)),                    # Wih1^T (padded)
            fixed((HIDDEN_PAD, 4 * HIDDEN_PAD)),           # Whh1^T (padded)
            fixed((1, 4 * HIDDEN_PAD)),                    # b1 (= b_ih1+b_hh1)
            fixed((2 * HIDDEN_PAD, 4 * HIDDEN_PAD)),       # [Wih2;Whh2]^T
            fixed((1, 4 * HIDDEN_PAD)),                    # b2
            fixed((HIDDEN_PAD, FC_PAD)),                   # fc1 W^T (padded)
            fixed((1, FC_PAD)),                            # fc1 b
            fixed((FC_PAD, OUT_PAD)),                      # fc2 W^T (padded)
            fixed((1, OUT_PAD)),                           # fc2 b
        ],
        out_specs=fixed((Bp, OUT_PAD)),
        scratch_shapes=[
            pltpu.VMEM((Tc * Bp, 4 * HIDDEN_PAD), jnp.float32),  # per-chunk xg
            pltpu.VMEM((4, Bp, HIDDEN_PAD), jnp.float32),        # h1,c1,h2,c2
        ],
    )

    out_p = pl.pallas_call(
        kernel,
        out_shape=jax.ShapeDtypeStruct((Bp, OUT_PAD), jnp.float32),
        grid_spec=grid_spec,
        compiler_params=pltpu.CompilerParams(
            dimension_semantics=("arbitrary",),
            vmem_limit_bytes=vmem_limit),
    )(x2d, *packed)

    return out_p[:B, :OUTPUT_SIZE]


def init_params(key):
    """Deterministic parameter init (uniform, PyTorch-style bounds)."""
    H, I = HIDDEN_SIZE, INPUT_SIZE
    k = 1.0 / jnp.sqrt(jnp.float32(H))
    keys = jax.random.split(key, 12)

    def u(kk, shape, bound):
        return jax.random.uniform(kk, shape, jnp.float32, -bound, bound)

    # Layer 1 (PyTorch stores W_ih: (4H, I), W_hh: (4H, H); we pre-transpose).
    wih1 = u(keys[0], (I, 4 * H), k)
    whh1 = u(keys[1], (H, 4 * H), k)
    b1 = u(keys[2], (1, 4 * H), k) + u(keys[3], (1, 4 * H), k)  # b_ih + b_hh
    # Layer 2 (input is hidden of layer 1).
    wih2 = u(keys[4], (H, 4 * H), k)
    whh2 = u(keys[5], (H, 4 * H), k)
    b2 = u(keys[6], (1, 4 * H), k) + u(keys[7], (1, 4 * H), k)
    # FC head.
    kfc1 = 1.0 / jnp.sqrt(jnp.float32(H))
    kfc2 = 1.0 / jnp.sqrt(jnp.float32(FC_HIDDEN))
    wfc1 = u(keys[8], (H, FC_HIDDEN), kfc1)
    bfc1 = u(keys[9], (1, FC_HIDDEN), kfc1)
    wfc2 = u(keys[10], (FC_HIDDEN, OUTPUT_SIZE), kfc2)
    bfc2 = u(keys[11], (1, OUTPUT_SIZE), kfc2)
    return (wih1, whh1, b1, wih2, whh2, b2, wfc1, bfc1, wfc2, bfc2)


def reference_forward(x, params):
    """Pure-JAX reference matching the PyTorch eval-mode forward."""
    (wih1, whh1, b1, wih2, whh2, b2, wfc1, bfc1, wfc2, bfc2) = params
    B, T, _ = x.shape
    H = HIDDEN_SIZE

    def cell(x_t, h, c, wih, whh, b):
        g = x_t @ wih + h @ whh + b
        i = jax.nn.sigmoid(g[:, 0 * H:1 * H])
        f = jax.nn.sigmoid(g[:, 1 * H:2 * H])
        gg = jnp.tanh(g[:, 2 * H:3 * H])
        o = jax.nn.sigmoid(g[:, 3 * H:4 * H])
        c_new = f * c + i * gg
        return o * jnp.tanh(c_new), c_new

    h1 = c1 = h2 = c2 = jnp.zeros((B, H), jnp.float32)
    for t in range(T):
        h1, c1 = cell(x[:, t, :], h1, c1, wih1, whh1, b1)
        h2, c2 = cell(h1, h2, c2, wih2, whh2, b2)
    z = jnp.maximum(h2 @ wfc1 + bfc1, 0.0)
    return z @ wfc2 + bfc2


if __name__ == "__main__":
    key = jax.random.PRNGKey(0)
    kx, kp = jax.random.split(key)

    B, T = 4, 8
    x = jax.random.normal(kx, (B, T, INPUT_SIZE), jnp.float32)
    params = init_params(kp)

    out = lstm_model_forward(x, params)
    out = jax.block_until_ready(out)

    ref = reference_forward(x, params)
    assert out.shape == (B, OUTPUT_SIZE)
    assert jnp.allclose(out, ref, rtol=1e-3, atol=1e-3), (out, ref)

    print("KERNEL_OK")
</pallas_src>

<mosaic_0001>
module attributes {stable_mosaic.version = 11 : i64} {
  func.func @_lstm_kernel(%arg0: i32, %arg1: memref<64x13xf32, #tpu.memory_space<vmem>>, %arg2: memref<13x512xf32, #tpu.memory_space<vmem>>, %arg3: memref<128x512xf32, #tpu.memory_space<vmem>>, %arg4: memref<1x512xf32, #tpu.memory_space<vmem>>, %arg5: memref<256x512xf32, #tpu.memory_space<vmem>>, %arg6: memref<1x512xf32, #tpu.memory_space<vmem>>, %arg7: memref<128x128xf32, #tpu.memory_space<vmem>>, %arg8: memref<1x128xf32, #tpu.memory_space<vmem>>, %arg9: memref<128x128xf32, #tpu.memory_space<vmem>>, %arg10: memref<1x128xf32, #tpu.memory_space<vmem>>, %arg11: memref<8x128xf32, #tpu.memory_space<vmem>>, %arg12: memref<64x512xf32, #tpu.memory_space<vmem>>, %arg13: memref<4x8x128xf32, #tpu.memory_space<vmem>>) attributes {dimension_semantics = [#tpu.dimension_semantics<arbitrary>], iteration_bounds = array<i64: 1>, scalar_prefetch = 0 : i64, scratch_operands = 2 : i64, tpu.core_type = #tpu.core_type<tc>, window_params = [{transform_indices = @transform_0, window_bounds = array<i64: 64, 13>}, {pipeline_mode = #tpu.pipeline_mode<synchronous>, transform_indices = @transform_1, window_bounds = array<i64: 13, 512>}, {pipeline_mode = #tpu.pipeline_mode<synchronous>, transform_indices = @transform_2, window_bounds = array<i64: 128, 512>}, {pipeline_mode = #tpu.pipeline_mode<synchronous>, transform_indices = @transform_3, window_bounds = array<i64: 1, 512>}, {pipeline_mode = #tpu.pipeline_mode<synchronous>, transform_indices = @transform_4, window_bounds = array<i64: 256, 512>}, {pipeline_mode = #tpu.pipeline_mode<synchronous>, transform_indices = @transform_5, window_bounds = array<i64: 1, 512>}, {pipeline_mode = #tpu.pipeline_mode<synchronous>, transform_indices = @transform_6, window_bounds = array<i64: 128, 128>}, {pipeline_mode = #tpu.pipeline_mode<synchronous>, transform_indices = @transform_7, window_bounds = array<i64: 1, 128>}, {pipeline_mode = #tpu.pipeline_mode<synchronous>, transform_indices = @transform_8, window_bounds = array<i64: 128, 128>}, {pipeline_mode = #tpu.pipeline_mode<synchronous>, transform_indices = @transform_9, window_bounds = array<i64: 1, 128>}, {pipeline_mode = #tpu.pipeline_mode<synchronous>, transform_indices = @transform_10, window_bounds = array<i64: 8, 128>}]} {
    %c0_i32 = arith.constant 0 : i32
    %0 = arith.cmpi eq, %arg0, %c0_i32 : i32
    %1 = arith.extui %0 : i1 to i32
    %c0_i32_0 = arith.constant 0 : i32
    %2 = arith.cmpi ne, %1, %c0_i32_0 : i32
    scf.if %2 {
      %cst_242 = arith.constant 0.000000e+00 : f32
      %620 = vector.broadcast %cst_242 : f32 to vector<4x8x128xf32>
      %c0_243 = arith.constant 0 : index
      %c0_244 = arith.constant 0 : index
      %c0_245 = arith.constant 0 : index
      %621 = vector.load %arg13[%c0_243, %c0_244, %c0_245] : memref<4x8x128xf32, #tpu.memory_space<vmem>>, vector<4x8x128xf32>
      tpu.vector_store %arg13[%c0_243, %c0_244, %c0_245], %620 {strides = array<i32>} : memref<4x8x128xf32, #tpu.memory_space<vmem>>, vector<4x8x128xf32>,
    } else {
    }
    %c0 = arith.constant 0 : index
    %c0_1 = arith.constant 0 : index
    %3 = vector.load %arg1[%c0, %c0_1] : memref<64x13xf32, #tpu.memory_space<vmem>>, vector<64x13xf32>
    %c0_2 = arith.constant 0 : index
    %c0_3 = arith.constant 0 : index
    %4 = vector.load %arg2[%c0_2, %c0_3] : memref<13x512xf32, #tpu.memory_space<vmem>>, vector<13x512xf32>
    %cst = arith.constant dense<0.000000e+00> : vector<64x512xf32>
    %5 = tpu.matmul %3, %4, %cst {dimension_numbers = #tpu.dot_dimension_numbers<[1], [0], [0], [1], [0, 0, 1, 1], [], []>} : vector<64x13xf32>, vector<13x512xf32>, vector<64x512xf32> -> vector<64x512xf32>
    %c0_4 = arith.constant 0 : index
    %c0_5 = arith.constant 0 : index
    %6 = vector.load %arg4[%c0_4, %c0_5] : memref<1x512xf32, #tpu.memory_space<vmem>>, vector<1x512xf32>
    %7 = vector.broadcast %6 : vector<1x512xf32> to vector<64x512xf32>
    %8 = arith.addf %5, %7 : vector<64x512xf32>
    %c0_6 = arith.constant 0 : index
    %c0_7 = arith.constant 0 : index
    %9 = vector.load %arg12[%c0_6, %c0_7] : memref<64x512xf32, #tpu.memory_space<vmem>>, vector<64x512xf32>
    tpu.vector_store %arg12[%c0_6, %c0_7], %8 {strides = array<i32>} : memref<64x512xf32, #tpu.memory_space<vmem>>, vector<64x512xf32>,
    %c0_8 = arith.constant 0 : index
    %c0_9 = arith.constant 0 : index
    %10 = vector.load %arg6[%c0_8, %c0_9] : memref<1x512xf32, #tpu.memory_space<vmem>>, vector<1x512xf32>
    %11 = vector.shape_cast %10 : vector<1x512xf32> to vector<1x512xf32>
    %12 = vector.broadcast %11 : vector<1x512xf32> to vector<8x512xf32>
    %c0_10 = arith.constant 0 : index
    %c0_11 = arith.constant 0 : index
    %c0_12 = arith.constant 0 : index
    %13 = vector.load %arg13[%c0_10, %c0_11, %c0_12] : memref<4x8x128xf32, #tpu.memory_space<vmem>>, vector<1x8x128xf32>
    %14 = vector.shape_cast %13 : vector<1x8x128xf32> to vector<8x128xf32>
    %c1 = arith.constant 1 : index
    %c0_13 = arith.constant 0 : index
    %c0_14 = arith.constant 0 : index
    %15 = vector.load %arg13[%c1, %c0_13, %c0_14] : memref<4x8x128xf32, #tpu.memory_space<vmem>>, vector<1x8x128xf32>
    %16 = vector.shape_cast %15 : vector<1x8x128xf32> to vector<8x128xf32>
    %c2 = arith.constant 2 : index
    %c0_15 = arith.constant 0 : index
    %c0_16 = arith.constant 0 : index
    %17 = vector.load %arg13[%c2, %c0_15, %c0_16] : memref<4x8x128xf32, #tpu.memory_space<vmem>>, vector<1x8x128xf32>
    %18 = vector.shape_cast %17 : vector<1x8x128xf32> to vector<8x128xf32>
    %c3 = arith.constant 3 : index
    %c0_17 = arith.constant 0 : index
    %c0_18 = arith.constant 0 : index
    %19 = vector.load %arg13[%c3, %c0_17, %c0_18] : memref<4x8x128xf32, #tpu.memory_space<vmem>>, vector<1x8x128xf32>
    %20 = vector.shape_cast %19 : vector<1x8x128xf32> to vector<8x128xf32>
    %c0_i32_19 = arith.constant 0 : i32
    %c8_i32 = arith.constant 8 : i32
    %21 = arith.muli %c0_i32_19, %c8_i32 : i32
    %22 = tpu.assume_multiple %21, 8 : i32
    %23 = arith.index_cast %22 : i32 to index
    %c0_20 = arith.constant 0 : index
    %24 = vector.load %arg12[%23, %c0_20] : memref<64x512xf32, #tpu.memory_space<vmem>>, vector<8x512xf32>
    %c0_21 = arith.constant 0 : index
    %c0_22 = arith.constant 0 : index
    %25 = vector.load %arg3[%c0_21, %c0_22] : memref<128x512xf32, #tpu.memory_space<vmem>>, vector<128x512xf32>
    %cst_23 = arith.constant dense<0.000000e+00> : vector<8x512xf32>
    %26 = tpu.matmul %14, %25, %cst_23 {dimension_numbers = #tpu.dot_dimension_numbers<[1], [0], [0], [1], [0, 0, 1, 1], [], []>} : vector<8x128xf32>, vector<128x512xf32>, vector<8x512xf32> -> vector<8x512xf32>
    %27 = arith.addf %24, %26 : vector<8x512xf32>
    %28 = vector.extract_strided_slice %27 {offsets = [0, 0], sizes = [8, 128], strides = [1, 1]} : vector<8x512xf32> to vector<8x128xf32>
    %cst_24 = arith.constant 5.000000e-01 : f32
    %29 = vector.broadcast %cst_24 : f32 to vector<8x128xf32>
    %30 = arith.mulf %29, %28 : vector<8x128xf32>
    %31 = math.tanh %30 : vector<8x128xf32>
    %cst_25 = arith.constant 5.000000e-01 : f32
    %32 = vector.broadcast %cst_25 : f32 to vector<8x128xf32>
    %33 = arith.mulf %32, %31 : vector<8x128xf32>
    %cst_26 = arith.constant 5.000000e-01 : f32
    %34 = vector.broadcast %cst_26 : f32 to vector<8x128xf32>
    %35 = arith.addf %33, %34 : vector<8x128xf32>
    %36 = vector.extract_strided_slice %27 {offsets = [0, 128], sizes = [8, 128], strides = [1, 1]} : vector<8x512xf32> to vector<8x128xf32>
    %cst_27 = arith.constant 5.000000e-01 : f32
    %37 = vector.broadcast %cst_27 : f32 to vector<8x128xf32>
    %38 = arith.mulf %37, %36 : vector<8x128xf32>
    %39 = math.tanh %38 : vector<8x128xf32>
    %cst_28 = arith.constant 5.000000e-01 : f32
    %40 = vector.broadcast %cst_28 : f32 to vector<8x128xf32>
    %41 = arith.mulf %40, %39 : vector<8x128xf32>
    %cst_29 = arith.constant 5.000000e-01 : f32
    %42 = vector.broadcast %cst_29 : f32 to vector<8x128xf32>
    %43 = arith.addf %41, %42 : vector<8x128xf32>
    %44 = vector.extract_strided_slice %27 {offsets = [0, 256], sizes = [8, 128], strides = [1, 1]} : vector<8x512xf32> to vector<8x128xf32>
    %45 = math.tanh %44 : vector<8x128xf32>
    %46 = vector.extract_strided_slice %27 {offsets = [0, 384], sizes = [8, 128], strides = [1, 1]} : vector<8x512xf32> to vector<8x128xf32>
    %cst_30 = arith.constant 5.000000e-01 : f32
    %47 = vector.broadcast %cst_30 : f32 to vector<8x128xf32>
    %48 = arith.mulf %47, %46 : vector<8x128xf32>
    %49 = math.tanh %48 : vector<8x128xf32>
    %cst_31 = arith.constant 5.000000e-01 : f32
    %50 = vector.broadcast %cst_31 : f32 to vector<8x128xf32>
    %51 = arith.mulf %50, %49 : vector<8x128xf32>
    %cst_32 = arith.constant 5.000000e-01 : f32
    %52 = vector.broadcast %cst_32 : f32 to vector<8x128xf32>
    %53 = arith.addf %51, %52 : vector<8x128xf32>
    %54 = arith.mulf %43, %16 : vector<8x128xf32>
    %55 = arith.mulf %35, %45 : vector<8x128xf32>
    %56 = arith.addf %54, %55 : vector<8x128xf32>
    %57 = math.tanh %56 : vector<8x128xf32>
    %58 = arith.mulf %53, %57 : vector<8x128xf32>
    %59 = tpu.concatenate %58, %18 in 1 : vector<8x128xf32>, vector<8x128xf32> -> vector<8x256xf32>
    %c0_33 = arith.constant 0 : index
    %c0_34 = arith.constant 0 : index
    %60 = vector.load %arg5[%c0_33, %c0_34] : memref<256x512xf32, #tpu.memory_space<vmem>>, vector<256x512xf32>
    %cst_35 = arith.constant dense<0.000000e+00> : vector<8x512xf32>
    %61 = tpu.matmul %59, %60, %cst_35 {dimension_numbers = #tpu.dot_dimension_numbers<[1], [0], [0], [1], [0, 0, 1, 1], [], []>} : vector<8x256xf32>, vector<256x512xf32>, vector<8x512xf32> -> vector<8x512xf32>
    %62 = arith.addf %61, %12 : vector<8x512xf32>
    %63 = vector.extract_strided_slice %62 {offsets = [0, 0], sizes = [8, 128], strides = [1, 1]} : vector<8x512xf32> to vector<8x128xf32>
    %cst_36 = arith.constant 5.000000e-01 : f32
    %64 = vector.broadcast %cst_36 : f32 to vector<8x128xf32>
    %65 = arith.mulf %64, %63 : vector<8x128xf32>
    %66 = math.tanh %65 : vector<8x128xf32>
    %cst_37 = arith.constant 5.000000e-01 : f32
    %67 = vector.broadcast %cst_37 : f32 to vector<8x128xf32>
    %68 = arith.mulf %67, %66 : vector<8x128xf32>
    %cst_38 = arith.constant 5.000000e-01 : f32
    %69 = vector.broadcast %cst_38 : f32 to vector<8x128xf32>
    %70 = arith.addf %68, %69 : vector<8x128xf32>
    %71 = vector.extract_strided_slice %62 {offsets = [0, 128], sizes = [8, 128], strides = [1, 1]} : vector<8x512xf32> to vector<8x128xf32>
    %cst_39 = arith.constant 5.000000e-01 : f32
    %72 = vector.broadcast %cst_39 : f32 to vector<8x128xf32>
    %73 = arith.mulf %72, %71 : vector<8x128xf32>
    %74 = math.tanh %73 : vector<8x128xf32>
    %cst_40 = arith.constant 5.000000e-01 : f32
    %75 = vector.broadcast %cst_40 : f32 to vector<8x128xf32>
    %76 = arith.mulf %75, %74 : vector<8x128xf32>
    %cst_41 = arith.constant 5.000000e-01 : f32
    %77 = vector.broadcast %cst_41 : f32 to vector<8x128xf32>
    %78 = arith.addf %76, %77 : vector<8x128xf32>
    %79 = vector.extract_strided_slice %62 {offsets = [0, 256], sizes = [8, 128], strides = [1, 1]} : vector<8x512xf32> to vector<8x128xf32>
    %80 = math.tanh %79 : vector<8x128xf32>
    %81 = vector.extract_strided_slice %62 {offsets = [0, 384], sizes = [8, 128], strides = [1, 1]} : vector<8x512xf32> to vector<8x128xf32>
    %cst_42 = arith.constant 5.000000e-01 : f32
    %82 = vector.broadcast %cst_42 : f32 to vector<8x128xf32>
    %83 = arith.mulf %82, %81 : vector<8x128xf32>
    %84 = math.tanh %83 : vector<8x128xf32>
    %cst_43 = arith.constant 5.000000e-01 : f32
    %85 = vector.broadcast %cst_43 : f32 to vector<8x128xf32>
    %86 = arith.mulf %85, %84 : vector<8x128xf32>
    %cst_44 = arith.constant 5.000000e-01 : f32
    %87 = vector.broadcast %cst_44 : f32 to vector<8x128xf32>
    %88 = arith.addf %86, %87 : vector<8x128xf32>
    %89 = arith.mulf %78, %20 : vector<8x128xf32>
    %90 = arith.mulf %70, %80 : vector<8x128xf32>
    %91 = arith.addf %89, %90 : vector<8x128xf32>
    %92 = math.tanh %91 : vector<8x128xf32>
    %93 = arith.mulf %88, %92 : vector<8x128xf32>
    %c1_i32 = arith.constant 1 : i32
    %c8_i32_45 = arith.constant 8 : i32
    %94 = arith.muli %c1_i32, %c8_i32_45 : i32
    %95 = tpu.assume_multiple %94, 8 : i32
    %96 = arith.index_cast %95 : i32 to index
    %c0_46 = arith.constant 0 : index
    %97 = vector.load %arg12[%96, %c0_46] : memref<64x512xf32, #tpu.memory_space<vmem>>, vector<8x512xf32>
    %c0_47 = arith.constant 0 : index
    %c0_48 = arith.constant 0 : index
    %98 = vector.load %arg3[%c0_47, %c0_48] : memref<128x512xf32, #tpu.memory_space<vmem>>, vector<128x512xf32>
    %cst_49 = arith.constant dense<0.000000e+00> : vector<8x512xf32>
    %99 = tpu.matmul %58, %98, %cst_49 {dimension_numbers = #tpu.dot_dimension_numbers<[1], [0], [0], [1], [0, 0, 1, 1], [], []>} : vector<8x128xf32>, vector<128x512xf32>, vector<8x512xf32> -> vector<8x512xf32>
    %100 = arith.addf %97, %99 : vector<8x512xf32>
    %101 = vector.extract_strided_slice %100 {offsets = [0, 0], sizes = [8, 128], strides = [1, 1]} : vector<8x512xf32> to vector<8x128xf32>
    %cst_50 = arith.constant 5.000000e-01 : f32
    %102 = vector.broadcast %cst_50 : f32 to vector<8x128xf32>
    %103 = arith.mulf %102, %101 : vector<8x128xf32>
    %104 = math.tanh %103 : vector<8x128xf32>
    %cst_51 = arith.constant 5.000000e-01 : f32
    %105 = vector.broadcast %cst_51 : f32 to vector<8x128xf32>
    %106 = arith.mulf %105, %104 : vector<8x128xf32>
    %cst_52 = arith.constant 5.000000e-01 : f32
    %107 = vector.broadcast %cst_52 : f32 to vector<8x128xf32>
    %108 = arith.addf %106, %107 : vector<8x128xf32>
    %109 = vector.extract_strided_slice %100 {offsets = [0, 128], sizes = [8, 128], strides = [1, 1]} : vector<8x512xf32> to vector<8x128xf32>
    %cst_53 = arith.constant 5.000000e-01 : f32
    %110 = vector.broadcast %cst_53 : f32 to vector<8x128xf32>
    %111 = arith.mulf %110, %109 : vector<8x128xf32>
    %112 = math.tanh %111 : vector<8x128xf32>
    %cst_54 = arith.constant 5.000000e-01 : f32
    %113 = vector.broadcast %cst_54 : f32 to vector<8x128xf32>
    %114 = arith.mulf %113, %112 : vector<8x128xf32>
    %cst_55 = arith.constant 5.000000e-01 : f32
    %115 = vector.broadcast %cst_55 : f32 to vector<8x128xf32>
    %116 = arith.addf %114, %115 : vector<8x128xf32>
    %117 = vector.extract_strided_slice %100 {offsets = [0, 256], sizes = [8, 128], strides = [1, 1]} : vector<8x512xf32> to vector<8x128xf32>
    %118 = math.tanh %117 : vector<8x128xf32>
    %119 = vector.extract_strided_slice %100 {offsets = [0, 384], sizes = [8, 128], strides = [1, 1]} : vector<8x512xf32> to vector<8x128xf32>
    %cst_56 = arith.constant 5.000000e-01 : f32
    %120 = vector.broadcast %cst_56 : f32 to vector<8x128xf32>
    %121 = arith.mulf %120, %119 : vector<8x128xf32>
    %122 = math.tanh %121 : vector<8x128xf32>
    %cst_57 = arith.constant 5.000000e-01 : f32
    %123 = vector.broadcast %cst_57 : f32 to vector<8x128xf32>
    %124 = arith.mulf %123, %122 : vector<8x128xf32>
    %cst_58 = arith.constant 5.000000e-01 : f32
    %125 = vector.broadcast %cst_58 : f32 to vector<8x128xf32>
    %126 = arith.addf %124, %125 : vector<8x128xf32>
    %127 = arith.mulf %116, %56 : vector<8x128xf32>
    %128 = arith.mulf %108, %118 : vector<8x128xf32>
    %129 = arith.addf %127, %128 : vector<8x128xf32>
    %130 = math.tanh %129 : vector<8x128xf32>
    %131 = arith.mulf %126, %130 : vector<8x128xf32>
    %132 = tpu.concatenate %131, %93 in 1 : vector<8x128xf32>, vector<8x128xf32> -> vector<8x256xf32>
    %c0_59 = arith.constant 0 : index
    %c0_60 = arith.constant 0 : index
    %133 = vector.load %arg5[%c0_59, %c0_60] : memref<256x512xf32, #tpu.memory_space<vmem>>, vector<256x512xf32>
    %cst_61 = arith.constant dense<0.000000e+00> : vector<8x512xf32>
    %134 = tpu.matmul %132, %133, %cst_61 {dimension_numbers = #tpu.dot_dimension_numbers<[1], [0], [0], [1], [0, 0, 1, 1], [], []>} : vector<8x256xf32>, vector<256x512xf32>, vector<8x512xf32> -> vector<8x512xf32>
    %135 = arith.addf %134, %12 : vector<8x512xf32>
    %136 = vector.extract_strided_slice %135 {offsets = [0, 0], sizes = [8, 128], strides = [1, 1]} : vector<8x512xf32> to vector<8x128xf32>
    %cst_62 = arith.constant 5.000000e-01 : f32
    %137 = vector.broadcast %cst_62 : f32 to vector<8x128xf32>
    %138 = arith.mulf %137, %136 : vector<8x128xf32>
    %139 = math.tanh %138 : vector<8x128xf32>
    %cst_63 = arith.constant 5.000000e-01 : f32
    %140 = vector.broadcast %cst_63 : f32 to vector<8x128xf32>
    %141 = arith.mulf %140, %139 : vector<8x128xf32>
    %cst_64 = arith.constant 5.000000e-01 : f32
    %142 = vector.broadcast %cst_64 : f32 to vector<8x128xf32>
    %143 = arith.addf %141, %142 : vector<8x128xf32>
    %144 = vector.extract_strided_slice %135 {offsets = [0, 128], sizes = [8, 128], strides = [1, 1]} : vector<8x512xf32> to vector<8x128xf32>
    %cst_65 = arith.constant 5.000000e-01 : f32
    %145 = vector.broadcast %cst_65 : f32 to vector<8x128xf32>
    %146 = arith.mulf %145, %144 : vector<8x128xf32>
    %147 = math.tanh %146 : vector<8x128xf32>
    %cst_66 = arith.constant 5.000000e-01 : f32
    %148 = vector.broadcast %cst_66 : f32 to vector<8x128xf32>
    %149 = arith.mulf %148, %147 : vector<8x128xf32>
    %cst_67 = arith.constant 5.000000e-01 : f32
    %150 = vector.broadcast %cst_67 : f32 to vector<8x128xf32>
    %151 = arith.addf %149, %150 : vector<8x128xf32>
    %152 = vector.extract_strided_slice %135 {offsets = [0, 256], sizes = [8, 128], strides = [1, 1]} : vector<8x512xf32> to vector<8x128xf32>
    %153 = math.tanh %152 : vector<8x128xf32>
    %154 = vector.extract_strided_slice %135 {offsets = [0, 384], sizes = [8, 128], strides = [1, 1]} : vector<8x512xf32> to vector<8x128xf32>
    %cst_68 = arith.constant 5.000000e-01 : f32
    %155 = vector.broadcast %cst_68 : f32 to vector<8x128xf32>
    %156 = arith.mulf %155, %154 : vector<8x128xf32>
    %157 = math.tanh %156 : vector<8x128xf32>
    %cst_69 = arith.constant 5.000000e-01 : f32
    %158 = vector.broadcast %cst_69 : f32 to vector<8x128xf32>
    %159 = arith.mulf %158, %157 : vector<8x128xf32>
    %cst_70 = arith.constant 5.000000e-01 : f32
    %160 = vector.broadcast %cst_70 : f32 to vector<8x128xf32>
    %161 = arith.addf %159, %160 : vector<8x128xf32>
    %162 = arith.mulf %151, %91 : vector<8x128xf32>
    %163 = arith.mulf %143, %153 : vector<8x128xf32>
    %164 = arith.addf %162, %163 : vector<8x128xf32>
    %165 = math.tanh %164 : vector<8x128xf32>
    %166 = arith.mulf %161, %165 : vector<8x128xf32>
    %c2_i32 = arith.constant 2 : i32
    %c8_i32_71 = arith.constant 8 : i32
    %167 = arith.muli %c2_i32, %c8_i32_71 : i32
    %168 = tpu.assume_multiple %167, 8 : i32
    %169 = arith.index_cast %168 : i32 to index
    %c0_72 = arith.constant 0 : index
    %170 = vector.load %arg12[%169, %c0_72] : memref<64x512xf32, #tpu.memory_space<vmem>>, vector<8x512xf32>
    %c0_73 = arith.constant 0 : index
    %c0_74 = arith.constant 0 : index
    %171 = vector.load %arg3[%c0_73, %c0_74] : memref<128x512xf32, #tpu.memory_space<vmem>>, vector<128x512xf32>
    %cst_75 = arith.constant dense<0.000000e+00> : vector<8x512xf32>
    %172 = tpu.matmul %131, %171, %cst_75 {dimension_numbers = #tpu.dot_dimension_numbers<[1], [0], [0], [1], [0, 0, 1, 1], [], []>} : vector<8x128xf32>, vector<128x512xf32>, vector<8x512xf32> -> vector<8x512xf32>
    %173 = arith.addf %170, %172 : vector<8x512xf32>
    %174 = vector.extract_strided_slice %173 {offsets = [0, 0], sizes = [8, 128], strides = [1, 1]} : vector<8x512xf32> to vector<8x128xf32>
    %cst_76 = arith.constant 5.000000e-01 : f32
    %175 = vector.broadcast %cst_76 : f32 to vector<8x128xf32>
    %176 = arith.mulf %175, %174 : vector<8x128xf32>
    %177 = math.tanh %176 : vector<8x128xf32>
    %cst_77 = arith.constant 5.000000e-01 : f32
    %178 = vector.broadcast %cst_77 : f32 to vector<8x128xf32>
    %179 = arith.mulf %178, %177 : vector<8x128xf32>
    %cst_78 = arith.constant 5.000000e-01 : f32
    %180 = vector.broadcast %cst_78 : f32 to vector<8x128xf32>
    %181 = arith.addf %179, %180 : vector<8x128xf32>
    %182 = vector.extract_strided_slice %173 {offsets = [0, 128], sizes = [8, 128], strides = [1, 1]} : vector<8x512xf32> to vector<8x128xf32>
    %cst_79 = arith.constant 5.000000e-01 : f32
    %183 = vector.broadcast %cst_79 : f32 to vector<8x128xf32>
    %184 = arith.mulf %183, %182 : vector<8x128xf32>
    %185 = math.tanh %184 : vector<8x128xf32>
    %cst_80 = arith.constant 5.000000e-01 : f32
    %186 = vector.broadcast %cst_80 : f32 to vector<8x128xf32>
    %187 = arith.mulf %186, %185 : vector<8x128xf32>
    %cst_81 = arith.constant 5.000000e-01 : f32
    %188 = vector.broadcast %cst_81 : f32 to vector<8x128xf32>
    %189 = arith.addf %187, %188 : vector<8x128xf32>
    %190 = vector.extract_strided_slice %173 {offsets = [0, 256], sizes = [8, 128], strides = [1, 1]} : vector<8x512xf32> to vector<8x128xf32>
    %191 = math.tanh %190 : vector<8x128xf32>
    %192 = vector.extract_strided_slice %173 {offsets = [0, 384], sizes = [8, 128], strides = [1, 1]} : vector<8x512xf32> to vector<8x128xf32>
    %cst_82 = arith.constant 5.000000e-01 : f32
    %193 = vector.broadcast %cst_82 : f32 to vector<8x128xf32>
    %194 = arith.mulf %193, %192 : vector<8x128xf32>
    %195 = math.tanh %194 : vector<8x128xf32>
    %cst_83 = arith.constant 5.000000e-01 : f32
    %196 = vector.broadcast %cst_83 : f32 to vector<8x128xf32>
    %197 = arith.mulf %196, %195 : vector<8x128xf32>
    %cst_84 = arith.constant 5.000000e-01 : f32
    %198 = vector.broadcast %cst_84 : f32 to vector<8x128xf32>
    %199 = arith.addf %197, %198 : vector<8x128xf32>
    %200 = arith.mulf %189, %129 : vector<8x128xf32>
    %201 = arith.mulf %181, %191 : vector<8x128xf32>
    %202 = arith.addf %200, %201 : vector<8x128xf32>
    %203 = math.tanh %202 : vector<8x128xf32>
    %204 = arith.mulf %199, %203 : vector<8x128xf32>
    %205 = tpu.concatenate %204, %166 in 1 : vector<8x128xf32>, vector<8x128xf32> -> vector<8x256xf32>
    %c0_85 = arith.constant 0 : index
    %c0_86 = arith.constant 0 : index
    %206 = vector.load %arg5[%c0_85, %c0_86] : memref<256x512xf32, #tpu.memory_space<vmem>>, vector<256x512xf32>
    %cst_87 = arith.constant dense<0.000000e+00> : vector<8x512xf32>
    %207 = tpu.matmul %205, %206, %cst_87 {dimension_numbers = #tpu.dot_dimension_numbers<[1], [0], [0], [1], [0, 0, 1, 1], [], []>} : vector<8x256xf32>, vector<256x512xf32>, vector<8x512xf32> -> vector<8x512xf32>
    %208 = arith.addf %207, %12 : vector<8x512xf32>
    %209 = vector.extract_strided_slice %208 {offsets = [0, 0], sizes = [8, 128], strides = [1, 1]} : vector<8x512xf32> to vector<8x128xf32>
    %cst_88 = arith.constant 5.000000e-01 : f32
    %210 = vector.broadcast %cst_88 : f32 to vector<8x128xf32>
    %211 = arith.mulf %210, %209 : vector<8x128xf32>
    %212 = math.tanh %211 : vector<8x128xf32>
    %cst_89 = arith.constant 5.000000e-01 : f32
    %213 = vector.broadcast %cst_89 : f32 to vector<8x128xf32>
    %214 = arith.mulf %213, %212 : vector<8x128xf32>
    %cst_90 = arith.constant 5.000000e-01 : f32
    %215 = vector.broadcast %cst_90 : f32 to vector<8x128xf32>
    %216 = arith.addf %214, %215 : vector<8x128xf32>
    %217 = vector.extract_strided_slice %208 {offsets = [0, 128], sizes = [8, 128], strides = [1, 1]} : vector<8x512xf32> to vector<8x128xf32>
    %cst_91 = arith.constant 5.000000e-01 : f32
    %218 = vector.broadcast %cst_91 : f32 to vector<8x128xf32>
    %219 = arith.mulf %218, %217 : vector<8x128xf32>
    %220 = math.tanh %219 : vector<8x128xf32>
    %cst_92 = arith.constant 5.000000e-01 : f32
    %221 = vector.broadcast %cst_92 : f32 to vector<8x128xf32>
    %222 = arith.mulf %221, %220 : vector<8x128xf32>
    %cst_93 = arith.constant 5.000000e-01 : f32
    %223 = vector.broadcast %cst_93 : f32 to vector<8x128xf32>
    %224 = arith.addf %222, %223 : vector<8x128xf32>
    %225 = vector.extract_strided_slice %208 {offsets = [0, 256], sizes = [8, 128], strides = [1, 1]} : vector<8x512xf32> to vector<8x128xf32>
    %226 = math.tanh %225 : vector<8x128xf32>
    %227 = vector.extract_strided_slice %208 {offsets = [0, 384], sizes = [8, 128], strides = [1, 1]} : vector<8x512xf32> to vector<8x128xf32>
    %cst_94 = arith.constant 5.000000e-01 : f32
    %228 = vector.broadcast %cst_94 : f32 to vector<8x128xf32>
    %229 = arith.mulf %228, %227 : vector<8x128xf32>
    %230 = math.tanh %229 : vector<8x128xf32>
    %cst_95 = arith.constant 5.000000e-01 : f32
    %231 = vector.broadcast %cst_95 : f32 to vector<8x128xf32>
    %232 = arith.mulf %231, %230 : vector<8x128xf32>
    %cst_96 = arith.constant 5.000000e-01 : f32
    %233 = vector.broadcast %cst_96 : f32 to vector<8x128xf32>
    %234 = arith.addf %232, %233 : vector<8x128xf32>
    %235 = arith.mulf %224, %164 : vector<8x128xf32>
    %236 = arith.mulf %216, %226 : vector<8x128xf32>
    %237 = arith.addf %235, %236 : vector<8x128xf32>
    %238 = math.tanh %237 : vector<8x128xf32>
    %239 = arith.mulf %234, %238 : vector<8x128xf32>
    %c3_i32 = arith.constant 3 : i32
    %c8_i32_97 = arith.constant 8 : i32
    %240 = arith.muli %c3_i32, %c8_i32_97 : i32
    %241 = tpu.assume_multiple %240, 8 : i32
    %242 = arith.index_cast %241 : i32 to index
    %c0_98 = arith.constant 0 : index
    %243 = vector.load %arg12[%242, %c0_98] : memref<64x512xf32, #tpu.memory_space<vmem>>, vector<8x512xf32>
    %c0_99 = arith.constant 0 : index
    %c0_100 = arith.constant 0 : index
    %244 = vector.load %arg3[%c0_99, %c0_100] : memref<128x512xf32, #tpu.memory_space<vmem>>, vector<128x512xf32>
    %cst_101 = arith.constant dense<0.000000e+00> : vector<8x512xf32>
    %245 = tpu.matmul %204, %244, %cst_101 {dimension_numbers = #tpu.dot_dimension_numbers<[1], [0], [0], [1], [0, 0, 1, 1], [], []>} : vector<8x128xf32>, vector<128x512xf32>, vector<8x512xf32> -> vector<8x512xf32>
    %246 = arith.addf %243, %245 : vector<8x512xf32>
    %247 = vector.extract_strided_slice %246 {offsets = [0, 0], sizes = [8, 128], strides = [1, 1]} : vector<8x512xf32> to vector<8x128xf32>
    %cst_102 = arith.constant 5.000000e-01 : f32
    %248 = vector.broadcast %cst_102 : f32 to vector<8x128xf32>
    %249 = arith.mulf %248, %247 : vector<8x128xf32>
    %250 = math.tanh %249 : vector<8x128xf32>
    %cst_103 = arith.constant 5.000000e-01 : f32
    %251 = vector.broadcast %cst_103 : f32 to vector<8x128xf32>
    %252 = arith.mulf %251, %250 : vector<8x128xf32>
    %cst_104 = arith.constant 5.000000e-01 : f32
    %253 = vector.broadcast %cst_104 : f32 to vector<8x128xf32>
    %254 = arith.addf %252, %253 : vector<8x128xf32>
    %255 = vector.extract_strided_slice %246 {offsets = [0, 128], sizes = [8, 128], strides = [1, 1]} : vector<8x512xf32> to vector<8x128xf32>
    %cst_105 = arith.constant 5.000000e-01 : f32
    %256 = vector.broadcast %cst_105 : f32 to vector<8x128xf32>
    %257 = arith.mulf %256, %255 : vector<8x128xf32>
    %258 = math.tanh %257 : vector<8x128xf32>
    %cst_106 = arith.constant 5.000000e-01 : f32
    %259 = vector.broadcast %cst_106 : f32 to vector<8x128xf32>
    %260 = arith.mulf %259, %258 : vector<8x128xf32>
    %cst_107 = arith.constant 5.000000e-01 : f32
    %261 = vector.broadcast %cst_107 : f32 to vector<8x128xf32>
    %262 = arith.addf %260, %261 : vector<8x128xf32>
    %263 = vector.extract_strided_slice %246 {offsets = [0, 256], sizes = [8, 128], strides = [1, 1]} : vector<8x512xf32> to vector<8x128xf32>
    %264 = math.tanh %263 : vector<8x128xf32>
    %265 = vector.extract_strided_slice %246 {offsets = [0, 384], sizes = [8, 128], strides = [1, 1]} : vector<8x512xf32> to vector<8x128xf32>
    %cst_108 = arith.constant 5.000000e-01 : f32
    %266 = vector.broadcast %cst_108 : f32 to vector<8x128xf32>
    %267 = arith.mulf %266, %265 : vector<8x128xf32>
    %268 = math.tanh %267 : vector<8x128xf32>
    %cst_109 = arith.constant 5.000000e-01 : f32
    %269 = vector.broadcast %cst_109 : f32 to vector<8x128xf32>
    %270 = arith.mulf %269, %268 : vector<8x128xf32>
    %cst_110 = arith.constant 5.000000e-01 : f32
    %271 = vector.broadcast %cst_110 : f32 to vector<8x128xf32>
    %272 = arith.addf %270, %271 : vector<8x128xf32>
    %273 = arith.mulf %262, %202 : vector<8x128xf32>
    %274 = arith.mulf %254, %264 : vector<8x128xf32>
    %275 = arith.addf %273, %274 : vector<8x128xf32>
    %276 = math.tanh %275 : vector<8x128xf32>
    %277 = arith.mulf %272, %276 : vector<8x128xf32>
    %278 = tpu.concatenate %277, %239 in 1 : vector<8x128xf32>, vector<8x128xf32> -> vector<8x256xf32>
    %c0_111 = arith.constant 0 : index
    %c0_112 = arith.constant 0 : index
    %279 = vector.load %arg5[%c0_111, %c0_112] : memref<256x512xf32, #tpu.memory_space<vmem>>, vector<256x512xf32>
    %cst_113 = arith.constant dense<0.000000e+00> : vector<8x512xf32>
    %280 = tpu.matmul %278, %279, %cst_113 {dimension_numbers = #tpu.dot_dimension_numbers<[1], [0], [0], [1], [0, 0, 1, 1], [], []>} : vector<8x256xf32>, vector<256x512xf32>, vector<8x512xf32> -> vector<8x512xf32>
    %281 = arith.addf %280, %12 : vector<8x512xf32>
    %282 = vector.extract_strided_slice %281 {offsets = [0, 0], sizes = [8, 128], strides = [1, 1]} : vector<8x512xf32> to vector<8x128xf32>
    %cst_114 = arith.constant 5.000000e-01 : f32
    %283 = vector.broadcast %cst_114 : f32 to vector<8x128xf32>
    %284 = arith.mulf %283, %282 : vector<8x128xf32>
    %285 = math.tanh %284 : vector<8x128xf32>
    %cst_115 = arith.constant 5.000000e-01 : f32
    %286 = vector.broadcast %cst_115 : f32 to vector<8x128xf32>
    %287 = arith.mulf %286, %285 : vector<8x128xf32>
    %cst_116 = arith.constant 5.000000e-01 : f32
    %288 = vector.broadcast %cst_116 : f32 to vector<8x128xf32>
    %289 = arith.addf %287, %288 : vector<8x128xf32>
    %290 = vector.extract_strided_slice %281 {offsets = [0, 128], sizes = [8, 128], strides = [1, 1]} : vector<8x512xf32> to vector<8x128xf32>
    %cst_117 = arith.constant 5.000000e-01 : f32
    %291 = vector.broadcast %cst_117 : f32 to vector<8x128xf32>
    %292 = arith.mulf %291, %290 : vector<8x128xf32>
    %293 = math.tanh %292 : vector<8x128xf32>
    %cst_118 = arith.constant 5.000000e-01 : f32
    %294 = vector.broadcast %cst_118 : f32 to vector<8x128xf32>
    %295 = arith.mulf %294, %293 : vector<8x128xf32>
    %cst_119 = arith.constant 5.000000e-01 : f32
    %296 = vector.broadcast %cst_119 : f32 to vector<8x128xf32>
    %297 = arith.addf %295, %296 : vector<8x128xf32>
    %298 = vector.extract_strided_slice %281 {offsets = [0, 256], sizes = [8, 128], strides = [1, 1]} : vector<8x512xf32> to vector<8x128xf32>
    %299 = math.tanh %298 : vector<8x128xf32>
    %300 = vector.extract_strided_slice %281 {offsets = [0, 384], sizes = [8, 128], strides = [1, 1]} : vector<8x512xf32> to vector<8x128xf32>
    %cst_120 = arith.constant 5.000000e-01 : f32
    %301 = vector.broadcast %cst_120 : f32 to vector<8x128xf32>
    %302 = arith.mulf %301, %300 : vector<8x128xf32>
    %303 = math.tanh %302 : vector<8x128xf32>
    %cst_121 = arith.constant 5.000000e-01 : f32
    %304 = vector.broadcast %cst_121 : f32 to vector<8x128xf32>
    %305 = arith.mulf %304, %303 : vector<8x128xf32>
    %cst_122 = arith.constant 5.000000e-01 : f32
    %306 = vector.broadcast %cst_122 : f32 to vector<8x128xf32>
    %307 = arith.addf %305, %306 : vector<8x128xf32>
    %308 = arith.mulf %297, %237 : vector<8x128xf32>
    %309 = arith.mulf %289, %299 : vector<8x128xf32>
    %310 = arith.addf %308, %309 : vector<8x128xf32>
    %311 = math.tanh %310 : vector<8x128xf32>
    %312 = arith.mulf %307, %311 : vector<8x128xf32>
    %c4_i32 = arith.constant 4 : i32
    %c8_i32_123 = arith.constant 8 : i32
    %313 = arith.muli %c4_i32, %c8_i32_123 : i32
    %314 = tpu.assume_multiple %313, 8 : i32
    %315 = arith.index_cast %314 : i32 to index
    %c0_124 = arith.constant 0 : index
    %316 = vector.load %arg12[%315, %c0_124] : memref<64x512xf32, #tpu.memory_space<vmem>>, vector<8x512xf32>
    %c0_125 = arith.constant 0 : index
    %c0_126 = arith.constant 0 : index
    %317 = vector.load %arg3[%c0_125, %c0_126] : memref<128x512xf32, #tpu.memory_space<vmem>>, vector<128x512xf32>
    %cst_127 = arith.constant dense<0.000000e+00> : vector<8x512xf32>
    %318 = tpu.matmul %277, %317, %cst_127 {dimension_numbers = #tpu.dot_dimension_numbers<[1], [0], [0], [1], [0, 0, 1, 1], [], []>} : vector<8x128xf32>, vector<128x512xf32>, vector<8x512xf32> -> vector<8x512xf32>
    %319 = arith.addf %316, %318 : vector<8x512xf32>
    %320 = vector.extract_strided_slice %319 {offsets = [0, 0], sizes = [8, 128], strides = [1, 1]} : vector<8x512xf32> to vector<8x128xf32>
    %cst_128 = arith.constant 5.000000e-01 : f32
    %321 = vector.broadcast %cst_128 : f32 to vector<8x128xf32>
    %322 = arith.mulf %321, %320 : vector<8x128xf32>
    %323 = math.tanh %322 : vector<8x128xf32>
    %cst_129 = arith.constant 5.000000e-01 : f32
    %324 = vector.broadcast %cst_129 : f32 to vector<8x128xf32>
    %325 = arith.mulf %324, %323 : vector<8x128xf32>
    %cst_130 = arith.constant 5.000000e-01 : f32
    %326 = vector.broadcast %cst_130 : f32 to vector<8x128xf32>
    %327 = arith.addf %325, %326 : vector<8x128xf32>
    %328 = vector.extract_strided_slice %319 {offsets = [0, 128], sizes = [8, 128], strides = [1, 1]} : vector<8x512xf32> to vector<8x128xf32>
    %cst_131 = arith.constant 5.000000e-01 : f32
    %329 = vector.broadcast %cst_131 : f32 to vector<8x128xf32>
    %330 = arith.mulf %329, %328 : vector<8x128xf32>
    %331 = math.tanh %330 : vector<8x128xf32>
    %cst_132 = arith.constant 5.000000e-01 : f32
    %332 = vector.broadcast %cst_132 : f32 to vector<8x128xf32>
    %333 = arith.mulf %332, %331 : vector<8x128xf32>
    %cst_133 = arith.constant 5.000000e-01 : f32
    %334 = vector.broadcast %cst_133 : f32 to vector<8x128xf32>
    %335 = arith.addf %333, %334 : vector<8x128xf32>
    %336 = vector.extract_strided_slice %319 {offsets = [0, 256], sizes = [8, 128], strides = [1, 1]} : vector<8x512xf32> to vector<8x128xf32>
    %337 = math.tanh %336 : vector<8x128xf32>
    %338 = vector.extract_strided_slice %319 {offsets = [0, 384], sizes = [8, 128], strides = [1, 1]} : vector<8x512xf32> to vector<8x128xf32>
    %cst_134 = arith.constant 5.000000e-01 : f32
    %339 = vector.broadcast %cst_134 : f32 to vector<8x128xf32>
    %340 = arith.mulf %339, %338 : vector<8x128xf32>
    %341 = math.tanh %340 : vector<8x128xf32>
    %cst_135 = arith.constant 5.000000e-01 : f32
    %342 = vector.broadcast %cst_135 : f32 to vector<8x128xf32>
    %343 = arith.mulf %342, %341 : vector<8x128xf32>
    %cst_136 = arith.constant 5.000000e-01 : f32
    %344 = vector.broadcast %cst_136 : f32 to vector<8x128xf32>
    %345 = arith.addf %343, %344 : vector<8x128xf32>
    %346 = arith.mulf %335, %275 : vector<8x128xf32>
    %347 = arith.mulf %327, %337 : vector<8x128xf32>
    %348 = arith.addf %346, %347 : vector<8x128xf32>
    %349 = math.tanh %348 : vector<8x128xf32>
    %350 = arith.mulf %345, %349 : vector<8x128xf32>
    %351 = tpu.concatenate %350, %312 in 1 : vector<8x128xf32>, vector<8x128xf32> -> vector<8x256xf32>
    %c0_137 = arith.constant 0 : index
    %c0_138 = arith.constant 0 : index
    %352 = vector.load %arg5[%c0_137, %c0_138] : memref<256x512xf32, #tpu.memory_space<vmem>>, vector<256x512xf32>
    %cst_139 = arith.constant dense<0.000000e+00> : vector<8x512xf32>
    %353 = tpu.matmul %351, %352, %cst_139 {dimension_numbers = #tpu.dot_dimension_numbers<[1], [0], [0], [1], [0, 0, 1, 1], [], []>} : vector<8x256xf32>, vector<256x512xf32>, vector<8x512xf32> -> vector<8x512xf32>
    %354 = arith.addf %353, %12 : vector<8x512xf32>
    %355 = vector.extract_strided_slice %354 {offsets = [0, 0], sizes = [8, 128], strides = [1, 1]} : vector<8x512xf32> to vector<8x128xf32>
    %cst_140 = arith.constant 5.000000e-01 : f32
    %356 = vector.broadcast %cst_140 : f32 to vector<8x128xf32>
    %357 = arith.mulf %356, %355 : vector<8x128xf32>
    %358 = math.tanh %357 : vector<8x128xf32>
    %cst_141 = arith.constant 5.000000e-01 : f32
    %359 = vector.broadcast %cst_141 : f32 to vector<8x128xf32>
    %360 = arith.mulf %359, %358 : vector<8x128xf32>
    %cst_142 = arith.constant 5.000000e-01 : f32
    %361 = vector.broadcast %cst_142 : f32 to vector<8x128xf32>
    %362 = arith.addf %360, %361 : vector<8x128xf32>
    %363 = vector.extract_strided_slice %354 {offsets = [0, 128], sizes = [8, 128], strides = [1, 1]} : vector<8x512xf32> to vector<8x128xf32>
    %cst_143 = arith.constant 5.000000e-01 : f32
    %364 = vector.broadcast %cst_143 : f32 to vector<8x128xf32>
    %365 = arith.mulf %364, %363 : vector<8x128xf32>
    %366 = math.tanh %365 : vector<8x128xf32>
    %cst_144 = arith.constant 5.000000e-01 : f32
    %367 = vector.broadcast %cst_144 : f32 to vector<8x128xf32>
    %368 = arith.mulf %367, %366 : vector<8x128xf32>
    %cst_145 = arith.constant 5.000000e-01 : f32
    %369 = vector.broadcast %cst_145 : f32 to vector<8x128xf32>
    %370 = arith.addf %368, %369 : vector<8x128xf32>
    %371 = vector.extract_strided_slice %354 {offsets = [0, 256], sizes = [8, 128], strides = [1, 1]} : vector<8x512xf32> to vector<8x128xf32>
    %372 = math.tanh %371 : vector<8x128xf32>
    %373 = vector.extract_strided_slice %354 {offsets = [0, 384], sizes = [8, 128], strides = [1, 1]} : vector<8x512xf32> to vector<8x128xf32>
    %cst_146 = arith.constant 5.000000e-01 : f32
    %374 = vector.broadcast %cst_146 : f32 to vector<8x128xf32>
    %375 = arith.mulf %374, %373 : vector<8x128xf32>
    %376 = math.tanh %375 : vector<8x128xf32>
    %cst_147 = arith.constant 5.000000e-01 : f32
    %377 = vector.broadcast %cst_147 : f32 to vector<8x128xf32>
    %378 = arith.mulf %377, %376 : vector<8x128xf32>
    %cst_148 = arith.constant 5.000000e-01 : f32
    %379 = vector.broadcast %cst_148 : f32 to vector<8x128xf32>
    %380 = arith.addf %378, %379 : vector<8x128xf32>
    %381 = arith.mulf %370, %310 : vector<8x128xf32>
    %382 = arith.mulf %362, %372 : vector<8x128xf32>
    %383 = arith.addf %381, %382 : vector<8x128xf32>
    %384 = math.tanh %383 : vector<8x128xf32>
    %385 = arith.mulf %380, %384 : vector<8x128xf32>
    %c5_i32 = arith.constant 5 : i32
    %c8_i32_149 = arith.constant 8 : i32
    %386 = arith.muli %c5_i32, %c8_i32_149 : i32
    %387 = tpu.assume_multiple %386, 8 : i32
    %388 = arith.index_cast %387 : i32 to index
    %c0_150 = arith.constant 0 : index
    %389 = vector.load %arg12[%388, %c0_150] : memref<64x512xf32, #tpu.memory_space<vmem>>, vector<8x512xf32>
    %c0_151 = arith.constant 0 : index
    %c0_152 = arith.constant 0 : index
    %390 = vector.load %arg3[%c0_151, %c0_152] : memref<128x512xf32, #tpu.memory_space<vmem>>, vector<128x512xf32>
    %cst_153 = arith.constant dense<0.000000e+00> : vector<8x512xf32>
    %391 = tpu.matmul %350, %390, %cst_153 {dimension_numbers = #tpu.dot_dimension_numbers<[1], [0], [0], [1], [0, 0, 1, 1], [], []>} : vector<8x128xf32>, vector<128x512xf32>, vector<8x512xf32> -> vector<8x512xf32>
    %392 = arith.addf %389, %391 : vector<8x512xf32>
    %393 = vector.extract_strided_slice %392 {offsets = [0, 0], sizes = [8, 128], strides = [1, 1]} : vector<8x512xf32> to vector<8x128xf32>
    %cst_154 = arith.constant 5.000000e-01 : f32
    %394 = vector.broadcast %cst_154 : f32 to vector<8x128xf32>
    %395 = arith.mulf %394, %393 : vector<8x128xf32>
    %396 = math.tanh %395 : vector<8x128xf32>
    %cst_155 = arith.constant 5.000000e-01 : f32
    %397 = vector.broadcast %cst_155 : f32 to vector<8x128xf32>
    %398 = arith.mulf %397, %396 : vector<8x128xf32>
    %cst_156 = arith.constant 5.000000e-01 : f32
    %399 = vector.broadcast %cst_156 : f32 to vector<8x128xf32>
    %400 = arith.addf %398, %399 : vector<8x128xf32>
    %401 = vector.extract_strided_slice %392 {offsets = [0, 128], sizes = [8, 128], strides = [1, 1]} : vector<8x512xf32> to vector<8x128xf32>
    %cst_157 = arith.constant 5.000000e-01 : f32
    %402 = vector.broadcast %cst_157 : f32 to vector<8x128xf32>
    %403 = arith.mulf %402, %401 : vector<8x128xf32>
    %404 = math.tanh %403 : vector<8x128xf32>
    %cst_158 = arith.constant 5.000000e-01 : f32
    %405 = vector.broadcast %cst_158 : f32 to vector<8x128xf32>
    %406 = arith.mulf %405, %404 : vector<8x128xf32>
    %cst_159 = arith.constant 5.000000e-01 : f32
    %407 = vector.broadcast %cst_159 : f32 to vector<8x128xf32>
    %408 = arith.addf %406, %407 : vector<8x128xf32>
    %409 = vector.extract_strided_slice %392 {offsets = [0, 256], sizes = [8, 128], strides = [1, 1]} : vector<8x512xf32> to vector<8x128xf32>
    %410 = math.tanh %409 : vector<8x128xf32>
    %411 = vector.extract_strided_slice %392 {offsets = [0, 384], sizes = [8, 128], strides = [1, 1]} : vector<8x512xf32> to vector<8x128xf32>
    %cst_160 = arith.constant 5.000000e-01 : f32
    %412 = vector.broadcast %cst_160 : f32 to vector<8x128xf32>
    %413 = arith.mulf %412, %411 : vector<8x128xf32>
    %414 = math.tanh %413 : vector<8x128xf32>
    %cst_161 = arith.constant 5.000000e-01 : f32
    %415 = vector.broadcast %cst_161 : f32 to vector<8x128xf32>
    %416 = arith.mulf %415, %414 : vector<8x128xf32>
    %cst_162 = arith.constant 5.000000e-01 : f32
    %417 = vector.broadcast %cst_162 : f32 to vector<8x128xf32>
    %418 = arith.addf %416, %417 : vector<8x128xf32>
    %419 = arith.mulf %408, %348 : vector<8x128xf32>
    %420 = arith.mulf %400, %410 : vector<8x128xf32>
    %421 = arith.addf %419, %420 : vector<8x128xf32>
    %422 = math.tanh %421 : vector<8x128xf32>
    %423 = arith.mulf %418, %422 : vector<8x128xf32>
    %424 = tpu.concatenate %423, %385 in 1 : vector<8x128xf32>, vector<8x128xf32> -> vector<8x256xf32>
    %c0_163 = arith.constant 0 : index
    %c0_164 = arith.constant 0 : index
    %425 = vector.load %arg5[%c0_163, %c0_164] : memref<256x512xf32, #tpu.memory_space<vmem>>, vector<256x512xf32>
    %cst_165 = arith.constant dense<0.000000e+00> : vector<8x512xf32>
    %426 = tpu.matmul %424, %425, %cst_165 {dimension_numbers = #tpu.dot_dimension_numbers<[1], [0], [0], [1], [0, 0, 1, 1], [], []>} : vector<8x256xf32>, vector<256x512xf32>, vector<8x512xf32> -> vector<8x512xf32>
    %427 = arith.addf %426, %12 : vector<8x512xf32>
    %428 = vector.extract_strided_slice %427 {offsets = [0, 0], sizes = [8, 128], strides = [1, 1]} : vector<8x512xf32> to vector<8x128xf32>
    %cst_166 = arith.constant 5.000000e-01 : f32
    %429 = vector.broadcast %cst_166 : f32 to vector<8x128xf32>
    %430 = arith.mulf %429, %428 : vector<8x128xf32>
    %431 = math.tanh %430 : vector<8x128xf32>
    %cst_167 = arith.constant 5.000000e-01 : f32
    %432 = vector.broadcast %cst_167 : f32 to vector<8x128xf32>
    %433 = arith.mulf %432, %431 : vector<8x128xf32>
    %cst_168 = arith.constant 5.000000e-01 : f32
    %434 = vector.broadcast %cst_168 : f32 to vector<8x128xf32>
    %435 = arith.addf %433, %434 : vector<8x128xf32>
    %436 = vector.extract_strided_slice %427 {offsets = [0, 128], sizes = [8, 128], strides = [1, 1]} : vector<8x512xf32> to vector<8x128xf32>
    %cst_169 = arith.constant 5.000000e-01 : f32
    %437 = vector.broadcast %cst_169 : f32 to vector<8x128xf32>
    %438 = arith.mulf %437, %436 : vector<8x128xf32>
    %439 = math.tanh %438 : vector<8x128xf32>
    %cst_170 = arith.constant 5.000000e-01 : f32
    %440 = vector.broadcast %cst_170 : f32 to vector<8x128xf32>
    %441 = arith.mulf %440, %439 : vector<8x128xf32>
    %cst_171 = arith.constant 5.000000e-01 : f32
    %442 = vector.broadcast %cst_171 : f32 to vector<8x128xf32>
    %443 = arith.addf %441, %442 : vector<8x128xf32>
    %444 = vector.extract_strided_slice %427 {offsets = [0, 256], sizes = [8, 128], strides = [1, 1]} : vector<8x512xf32> to vector<8x128xf32>
    %445 = math.tanh %444 : vector<8x128xf32>
    %446 = vector.extract_strided_slice %427 {offsets = [0, 384], sizes = [8, 128], strides = [1, 1]} : vector<8x512xf32> to vector<8x128xf32>
    %cst_172 = arith.constant 5.000000e-01 : f32
    %447 = vector.broadcast %cst_172 : f32 to vector<8x128xf32>
    %448 = arith.mulf %447, %446 : vector<8x128xf32>
    %449 = math.tanh %448 : vector<8x128xf32>
    %cst_173 = arith.constant 5.000000e-01 : f32
    %450 = vector.broadcast %cst_173 : f32 to vector<8x128xf32>
    %451 = arith.mulf %450, %449 : vector<8x128xf32>
    %cst_174 = arith.constant 5.000000e-01 : f32
    %452 = vector.broadcast %cst_174 : f32 to vector<8x128xf32>
    %453 = arith.addf %451, %452 : vector<8x128xf32>
    %454 = arith.mulf %443, %383 : vector<8x128xf32>
    %455 = arith.mulf %435, %445 : vector<8x128xf32>
    %456 = arith.addf %454, %455 : vector<8x128xf32>
    %457 = math.tanh %456 : vector<8x128xf32>
    %458 = arith.mulf %453, %457 : vector<8x128xf32>
    %c6_i32 = arith.constant 6 : i32
    %c8_i32_175 = arith.constant 8 : i32
    %459 = arith.muli %c6_i32, %c8_i32_175 : i32
    %460 = tpu.assume_multiple %459, 8 : i32
    %461 = arith.index_cast %460 : i32 to index
    %c0_176 = arith.constant 0 : index
    %462 = vector.load %arg12[%461, %c0_176] : memref<64x512xf32, #tpu.memory_space<vmem>>, vector<8x512xf32>
    %c0_177 = arith.constant 0 : index
    %c0_178 = arith.constant 0 : index
    %463 = vector.load %arg3[%c0_177, %c0_178] : memref<128x512xf32, #tpu.memory_space<vmem>>, vector<128x512xf32>
    %cst_179 = arith.constant dense<0.000000e+00> : vector<8x512xf32>
    %464 = tpu.matmul %423, %463, %cst_179 {dimension_numbers = #tpu.dot_dimension_numbers<[1], [0], [0], [1], [0, 0, 1, 1], [], []>} : vector<8x128xf32>, vector<128x512xf32>, vector<8x512xf32> -> vector<8x512xf32>
    %465 = arith.addf %462, %464 : vector<8x512xf32>
    %466 = vector.extract_strided_slice %465 {offsets = [0, 0], sizes = [8, 128], strides = [1, 1]} : vector<8x512xf32> to vector<8x128xf32>
    %cst_180 = arith.constant 5.000000e-01 : f32
    %467 = vector.broadcast %cst_180 : f32 to vector<8x128xf32>
    %468 = arith.mulf %467, %466 : vector<8x128xf32>
    %469 = math.tanh %468 : vector<8x128xf32>
    %cst_181 = arith.constant 5.000000e-01 : f32
    %470 = vector.broadcast %cst_181 : f32 to vector<8x128xf32>
    %471 = arith.mulf %470, %469 : vector<8x128xf32>
    %cst_182 = arith.constant 5.000000e-01 : f32
    %472 = vector.broadcast %cst_182 : f32 to vector<8x128xf32>
    %473 = arith.addf %471, %472 : vector<8x128xf32>
    %474 = vector.extract_strided_slice %465 {offsets = [0, 128], sizes = [8, 128], strides = [1, 1]} : vector<8x512xf32> to vector<8x128xf32>
    %cst_183 = arith.constant 5.000000e-01 : f32
    %475 = vector.broadcast %cst_183 : f32 to vector<8x128xf32>
    %476 = arith.mulf %475, %474 : vector<8x128xf32>
    %477 = math.tanh %476 : vector<8x128xf32>
    %cst_184 = arith.constant 5.000000e-01 : f32
    %478 = vector.broadcast %cst_184 : f32 to vector<8x128xf32>
    %479 = arith.mulf %478, %477 : vector<8x128xf32>
    %cst_185 = arith.constant 5.000000e-01 : f32
    %480 = vector.broadcast %cst_185 : f32 to vector<8x128xf32>
    %481 = arith.addf %479, %480 : vector<8x128xf32>
    %482 = vector.extract_strided_slice %465 {offsets = [0, 256], sizes = [8, 128], strides = [1, 1]} : vector<8x512xf32> to vector<8x128xf32>
    %483 = math.tanh %482 : vector<8x128xf32>
    %484 = vector.extract_strided_slice %465 {offsets = [0, 384], sizes = [8, 128], strides = [1, 1]} : vector<8x512xf32> to vector<8x128xf32>
    %cst_186 = arith.constant 5.000000e-01 : f32
    %485 = vector.broadcast %cst_186 : f32 to vector<8x128xf32>
    %486 = arith.mulf %485, %484 : vector<8x128xf32>
    %487 = math.tanh %486 : vector<8x128xf32>
    %cst_187 = arith.constant 5.000000e-01 : f32
    %488 = vector.broadcast %cst_187 : f32 to vector<8x128xf32>
    %489 = arith.mulf %488, %487 : vector<8x128xf32>
    %cst_188 = arith.constant 5.000000e-01 : f32
    %490 = vector.broadcast %cst_188 : f32 to vector<8x128xf32>
    %491 = arith.addf %489, %490 : vector<8x128xf32>
    %492 = arith.mulf %481, %421 : vector<8x128xf32>
    %493 = arith.mulf %473, %483 : vector<8x128xf32>
    %494 = arith.addf %492, %493 : vector<8x128xf32>
    %495 = math.tanh %494 : vector<8x128xf32>
    %496 = arith.mulf %491, %495 : vector<8x128xf32>
    %497 = tpu.concatenate %496, %458 in 1 : vector<8x128xf32>, vector<8x128xf32> -> vector<8x256xf32>
    %c0_189 = arith.constant 0 : index
    %c0_190 = arith.constant 0 : index
    %498 = vector.load %arg5[%c0_189, %c0_190] : memref<256x512xf32, #tpu.memory_space<vmem>>, vector<256x512xf32>
    %cst_191 = arith.constant dense<0.000000e+00> : vector<8x512xf32>
    %499 = tpu.matmul %497, %498, %cst_191 {dimension_numbers = #tpu.dot_dimension_numbers<[1], [0], [0], [1], [0, 0, 1, 1], [], []>} : vector<8x256xf32>, vector<256x512xf32>, vector<8x512xf32> -> vector<8x512xf32>
    %500 = arith.addf %499, %12 : vector<8x512xf32>
    %501 = vector.extract_strided_slice %500 {offsets = [0, 0], sizes = [8, 128], strides = [1, 1]} : vector<8x512xf32> to vector<8x128xf32>
    %cst_192 = arith.constant 5.000000e-01 : f32
    %502 = vector.broadcast %cst_192 : f32 to vector<8x128xf32>
    %503 = arith.mulf %502, %501 : vector<8x128xf32>
    %504 = math.tanh %503 : vector<8x128xf32>
    %cst_193 = arith.constant 5.000000e-01 : f32
    %505 = vector.broadcast %cst_193 : f32 to vector<8x128xf32>
    %506 = arith.mulf %505, %504 : vector<8x128xf32>
    %cst_194 = arith.constant 5.000000e-01 : f32
    %507 = vector.broadcast %cst_194 : f32 to vector<8x128xf32>
    %508 = arith.addf %506, %507 : vector<8x128xf32>
    %509 = vector.extract_strided_slice %500 {offsets = [0, 128], sizes = [8, 128], strides = [1, 1]} : vector<8x512xf32> to vector<8x128xf32>
    %cst_195 = arith.constant 5.000000e-01 : f32
    %510 = vector.broadcast %cst_195 : f32 to vector<8x128xf32>
    %511 = arith.mulf %510, %509 : vector<8x128xf32>
    %512 = math.tanh %511 : vector<8x128xf32>
    %cst_196 = arith.constant 5.000000e-01 : f32
    %513 = vector.broadcast %cst_196 : f32 to vector<8x128xf32>
    %514 = arith.mulf %513, %512 : vector<8x128xf32>
    %cst_197 = arith.constant 5.000000e-01 : f32
    %515 = vector.broadcast %cst_197 : f32 to vector<8x128xf32>
    %516 = arith.addf %514, %515 : vector<8x128xf32>
    %517 = vector.extract_strided_slice %500 {offsets = [0, 256], sizes = [8, 128], strides = [1, 1]} : vector<8x512xf32> to vector<8x128xf32>
    %518 = math.tanh %517 : vector<8x128xf32>
    %519 = vector.extract_strided_slice %500 {offsets = [0, 384], sizes = [8, 128], strides = [1, 1]} : vector<8x512xf32> to vector<8x128xf32>
    %cst_198 = arith.constant 5.000000e-01 : f32
    %520 = vector.broadcast %cst_198 : f32 to vector<8x128xf32>
    %521 = arith.mulf %520, %519 : vector<8x128xf32>
    %522 = math.tanh %521 : vector<8x128xf32>
    %cst_199 = arith.constant 5.000000e-01 : f32
    %523 = vector.broadcast %cst_199 : f32 to vector<8x128xf32>
    %524 = arith.mulf %523, %522 : vector<8x128xf32>
    %cst_200 = arith.constant 5.000000e-01 : f32
    %525 = vector.broadcast %cst_200 : f32 to vector<8x128xf32>
    %526 = arith.addf %524, %525 : vector<8x128xf32>
    %527 = arith.mulf %516, %456 : vector<8x128xf32>
    %528 = arith.mulf %508, %518 : vector<8x128xf32>
    %529 = arith.addf %527, %528 : vector<8x128xf32>
    %530 = math.tanh %529 : vector<8x128xf32>
    %531 = arith.mulf %526, %530 : vector<8x128xf32>
    %c7_i32 = arith.constant 7 : i32
    %c8_i32_201 = arith.constant 8 : i32
    %532 = arith.muli %c7_i32, %c8_i32_201 : i32
    %533 = tpu.assume_multiple %532, 8 : i32
    %534 = arith.index_cast %533 : i32 to index
    %c0_202 = arith.constant 0 : index
    %535 = vector.load %arg12[%534, %c0_202] : memref<64x512xf32, #tpu.memory_space<vmem>>, vector<8x512xf32>
    %c0_203 = arith.constant 0 : index
    %c0_204 = arith.constant 0 : index
    %536 = vector.load %arg3[%c0_203, %c0_204] : memref<128x512xf32, #tpu.memory_space<vmem>>, vector<128x512xf32>
    %cst_205 = arith.constant dense<0.000000e+00> : vector<8x512xf32>
    %537 = tpu.matmul %496, %536, %cst_205 {dimension_numbers = #tpu.dot_dimension_numbers<[1], [0], [0], [1], [0, 0, 1, 1], [], []>} : vector<8x128xf32>, vector<128x512xf32>, vector<8x512xf32> -> vector<8x512xf32>
    %538 = arith.addf %535, %537 : vector<8x512xf32>
    %539 = vector.extract_strided_slice %538 {offsets = [0, 0], sizes = [8, 128], strides = [1, 1]} : vector<8x512xf32> to vector<8x128xf32>
    %cst_206 = arith.constant 5.000000e-01 : f32
    %540 = vector.broadcast %cst_206 : f32 to vector<8x128xf32>
    %541 = arith.mulf %540, %539 : vector<8x128xf32>
    %542 = math.tanh %541 : vector<8x128xf32>
    %cst_207 = arith.constant 5.000000e-01 : f32
    %543 = vector.broadcast %cst_207 : f32 to vector<8x128xf32>
    %544 = arith.mulf %543, %542 : vector<8x128xf32>
    %cst_208 = arith.constant 5.000000e-01 : f32
    %545 = vector.broadcast %cst_208 : f32 to vector<8x128xf32>
    %546 = arith.addf %544, %545 : vector<8x128xf32>
    %547 = vector.extract_strided_slice %538 {offsets = [0, 128], sizes = [8, 128], strides = [1, 1]} : vector<8x512xf32> to vector<8x128xf32>
    %cst_209 = arith.constant 5.000000e-01 : f32
    %548 = vector.broadcast %cst_209 : f32 to vector<8x128xf32>
    %549 = arith.mulf %548, %547 : vector<8x128xf32>
    %550 = math.tanh %549 : vector<8x128xf32>
    %cst_210 = arith.constant 5.000000e-01 : f32
    %551 = vector.broadcast %cst_210 : f32 to vector<8x128xf32>
    %552 = arith.mulf %551, %550 : vector<8x128xf32>
    %cst_211 = arith.constant 5.000000e-01 : f32
    %553 = vector.broadcast %cst_211 : f32 to vector<8x128xf32>
    %554 = arith.addf %552, %553 : vector<8x128xf32>
    %555 = vector.extract_strided_slice %538 {offsets = [0, 256], sizes = [8, 128], strides = [1, 1]} : vector<8x512xf32> to vector<8x128xf32>
    %556 = math.tanh %555 : vector<8x128xf32>
    %557 = vector.extract_strided_slice %538 {offsets = [0, 384], sizes = [8, 128], strides = [1, 1]} : vector<8x512xf32> to vector<8x128xf32>
    %cst_212 = arith.constant 5.000000e-01 : f32
    %558 = vector.broadcast %cst_212 : f32 to vector<8x128xf32>
    %559 = arith.mulf %558, %557 : vector<8x128xf32>
    %560 = math.tanh %559 : vector<8x128xf32>
    %cst_213 = arith.constant 5.000000e-01 : f32
    %561 = vector.broadcast %cst_213 : f32 to vector<8x128xf32>
    %562 = arith.mulf %561, %560 : vector<8x128xf32>
    %cst_214 = arith.constant 5.000000e-01 : f32
    %563 = vector.broadcast %cst_214 : f32 to vector<8x128xf32>
    %564 = arith.addf %562, %563 : vector<8x128xf32>
    %565 = arith.mulf %554, %494 : vector<8x128xf32>
    %566 = arith.mulf %546, %556 : vector<8x128xf32>
    %567 = arith.addf %565, %566 : vector<8x128xf32>
    %568 = math.tanh %567 : vector<8x128xf32>
    %569 = arith.mulf %564, %568 : vector<8x128xf32>
    %570 = tpu.concatenate %569, %531 in 1 : vector<8x128xf32>, vector<8x128xf32> -> vector<8x256xf32>
    %c0_215 = arith.constant 0 : index
    %c0_216 = arith.constant 0 : index
    %571 = vector.load %arg5[%c0_215, %c0_216] : memref<256x512xf32, #tpu.memory_space<vmem>>, vector<256x512xf32>
    %cst_217 = arith.constant dense<0.000000e+00> : vector<8x512xf32>
    %572 = tpu.matmul %570, %571, %cst_217 {dimension_numbers = #tpu.dot_dimension_numbers<[1], [0], [0], [1], [0, 0, 1, 1], [], []>} : vector<8x256xf32>, vector<256x512xf32>, vector<8x512xf32> -> vector<8x512xf32>
    %573 = arith.addf %572, %12 : vector<8x512xf32>
    %574 = vector.extract_strided_slice %573 {offsets = [0, 0], sizes = [8, 128], strides = [1, 1]} : vector<8x512xf32> to vector<8x128xf32>
    %cst_218 = arith.constant 5.000000e-01 : f32
    %575 = vector.broadcast %cst_218 : f32 to vector<8x128xf32>
    %576 = arith.mulf %575, %574 : vector<8x128xf32>
    %577 = math.tanh %576 : vector<8x128xf32>
    %cst_219 = arith.constant 5.000000e-01 : f32
    %578 = vector.broadcast %cst_219 : f32 to vector<8x128xf32>
    %579 = arith.mulf %578, %577 : vector<8x128xf32>
    %cst_220 = arith.constant 5.000000e-01 : f32
    %580 = vector.broadcast %cst_220 : f32 to vector<8x128xf32>
    %581 = arith.addf %579, %580 : vector<8x128xf32>
    %582 = vector.extract_strided_slice %573 {offsets = [0, 128], sizes = [8, 128], strides = [1, 1]} : vector<8x512xf32> to vector<8x128xf32>
    %cst_221 = arith.constant 5.000000e-01 : f32
    %583 = vector.broadcast %cst_221 : f32 to vector<8x128xf32>
    %584 = arith.mulf %583, %582 : vector<8x128xf32>
    %585 = math.tanh %584 : vector<8x128xf32>
    %cst_222 = arith.constant 5.000000e-01 : f32
    %586 = vector.broadcast %cst_222 : f32 to vector<8x128xf32>
    %587 = arith.mulf %586, %585 : vector<8x128xf32>
    %cst_223 = arith.constant 5.000000e-01 : f32
    %588 = vector.broadcast %cst_223 : f32 to vector<8x128xf32>
    %589 = arith.addf %587, %588 : vector<8x128xf32>
    %590 = vector.extract_strided_slice %573 {offsets = [0, 256], sizes = [8, 128], strides = [1, 1]} : vector<8x512xf32> to vector<8x128xf32>
    %591 = math.tanh %590 : vector<8x128xf32>
    %592 = vector.extract_strided_slice %573 {offsets = [0, 384], sizes = [8, 128], strides = [1, 1]} : vector<8x512xf32> to vector<8x128xf32>
    %cst_224 = arith.constant 5.000000e-01 : f32
    %593 = vector.broadcast %cst_224 : f32 to vector<8x128xf32>
    %594 = arith.mulf %593, %592 : vector<8x128xf32>
    %595 = math.tanh %594 : vector<8x128xf32>
    %cst_225 = arith.constant 5.000000e-01 : f32
    %596 = vector.broadcast %cst_225 : f32 to vector<8x128xf32>
    %597 = arith.mulf %596, %595 : vector<8x128xf32>
    %cst_226 = arith.constant 5.000000e-01 : f32
    %598 = vector.broadcast %cst_226 : f32 to vector<8x128xf32>
    %599 = arith.addf %597, %598 : vector<8x128xf32>
    %600 = arith.mulf %589, %529 : vector<8x128xf32>
    %601 = arith.mulf %581, %591 : vector<8x128xf32>
    %602 = arith.addf %600, %601 : vector<8x128xf32>
    %603 = math.tanh %602 : vector<8x128xf32>
    %604 = arith.mulf %599, %603 : vector<8x128xf32>
    %c8_i32_227 = arith.constant 8 : i32
    %c0_228 = arith.constant 0 : index
    %c0_229 = arith.constant 0 : index
    %c0_230 = arith.constant 0 : index
    %605 = vector.load %arg13[%c0_228, %c0_229, %c0_230] : memref<4x8x128xf32, #tpu.memory_space<vmem>>, vector<1x8x128xf32>
    %606 = vector.shape_cast %605 : vector<1x8x128xf32> to vector<8x128xf32>
    %607 = vector.shape_cast %569 : vector<8x128xf32> to vector<1x8x128xf32>
    tpu.vector_store %arg13[%c0_228, %c0_229, %c0_230], %607 {strides = array<i32>} : memref<4x8x128xf32, #tpu.memory_space<vmem>>, vector<1x8x128xf32>,
    %c1_231 = arith.constant 1 : index
    %c0_232 = arith.constant 0 : index
    %c0_233 = arith.constant 0 : index
    %608 = vector.load %arg13[%c1_231, %c0_232, %c0_233] : memref<4x8x128xf32, #tpu.memory_space<vmem>>, vector<1x8x128xf32>
    %609 = vector.shape_cast %608 : vector<1x8x128xf32> to vector<8x128xf32>
    %610 = vector.shape_cast %567 : vector<8x128xf32> to vector<1x8x128xf32>
    tpu.vector_store %arg13[%c1_231, %c0_232, %c0_233], %610 {strides = array<i32>} : memref<4x8x128xf32, #tpu.memory_space<vmem>>, vector<1x8x128xf32>,
    %c2_234 = arith.constant 2 : index
    %c0_235 = arith.constant 0 : index
    %c0_236 = arith.constant 0 : index
    %611 = vector.load %arg13[%c2_234, %c0_235, %c0_236] : memref<4x8x128xf32, #tpu.memory_space<vmem>>, vector<1x8x128xf32>
    %612 = vector.shape_cast %611 : vector<1x8x128xf32> to vector<8x128xf32>
    %613 = vector.shape_cast %604 : vector<8x128xf32> to vector<1x8x128xf32>
    tpu.vector_store %arg13[%c2_234, %c0_235, %c0_236], %613 {strides = array<i32>} : memref<4x8x128xf32, #tpu.memory_space<vmem>>, vector<1x8x128xf32>,
    %c3_237 = arith.constant 3 : index
    %c0_238 = arith.constant 0 : index
    %c0_239 = arith.constant 0 : index
    %614 = vector.load %arg13[%c3_237, %c0_238, %c0_239] : memref<4x8x128xf32, #tpu.memory_space<vmem>>, vector<1x8x128xf32>
    %615 = vector.shape_cast %614 : vector<1x8x128xf32> to vector<8x128xf32>
    %616 = vector.shape_cast %602 : vector<8x128xf32> to vector<1x8x128xf32>
    tpu.vector_store %arg13[%c3_237, %c0_238, %c0_239], %616 {strides = array<i32>} : memref<4x8x128xf32, #tpu.memory_space<vmem>>, vector<1x8x128xf32>,
    %c0_i32_240 = arith.constant 0 : i32
    %617 = arith.cmpi eq, %arg0, %c0_i32_240 : i32
    %618 = arith.extui %617 : i1 to i32
    %c0_i32_241 = arith.constant 0 : i32
    %619 = arith.cmpi ne, %618, %c0_i32_241 : i32
    scf.if %619 {
      %c0_242 = arith.constant 0 : index
      %c0_243 = arith.constant 0 : index
      %620 = vector.load %arg7[%c0_242, %c0_243] : memref<128x128xf32, #tpu.memory_space<vmem>>, vector<128x128xf32>
      %cst_244 = arith.constant dense<0.000000e+00> : vector<8x128xf32>
      %621 = tpu.matmul %604, %620, %cst_244 {dimension_numbers = #tpu.dot_dimension_numbers<[1], [0], [0], [1], [0, 0, 1, 1], [], []>} : vector<8x128xf32>, vector<128x128xf32>, vector<8x128xf32> -> vector<8x128xf32>
      %c0_245 = arith.constant 0 : index
      %c0_246 = arith.constant 0 : index
      %622 = vector.load %arg8[%c0_245, %c0_246] : memref<1x128xf32, #tpu.memory_space<vmem>>, vector<1x128xf32>
      %623 = vector.broadcast %622 : vector<1x128xf32> to vector<8x128xf32>
      %624 = arith.addf %621, %623 : vector<8x128xf32>
      %cst_247 = arith.constant 0.000000e+00 : f32
      %625 = vector.broadcast %cst_247 : f32 to vector<8x128xf32>
      %626 = arith.maximumf %624, %625 : vector<8x128xf32>
      %c0_248 = arith.constant 0 : index
      %c0_249 = arith.constant 0 : index
      %627 = vector.load %arg9[%c0_248, %c0_249] : memref<128x128xf32, #tpu.memory_space<vmem>>, vector<128x128xf32>
      %cst_250 = arith.constant dense<0.000000e+00> : vector<8x128xf32>
      %628 = tpu.matmul %626, %627, %cst_250 {dimension_numbers = #tpu.dot_dimension_numbers<[1], [0], [0], [1], [0, 0, 1, 1], [], []>} : vector<8x128xf32>, vector<128x128xf32>, vector<8x128xf32> -> vector<8x128xf32>
      %c0_251 = arith.constant 0 : index
      %c0_252 = arith.constant 0 : index
      %629 = vector.load %arg10[%c0_251, %c0_252] : memref<1x128xf32, #tpu.memory_space<vmem>>, vector<1x128xf32>
      %630 = vector.broadcast %629 : vector<1x128xf32> to vector<8x128xf32>
      %631 = arith.addf %628, %630 : vector<8x128xf32>
      %c0_253 = arith.constant 0 : index
      %c0_254 = arith.constant 0 : index
      %632 = vector.load %arg11[%c0_253, %c0_254] : memref<8x128xf32, #tpu.memory_space<vmem>>, vector<8x128xf32>
      tpu.vector_store %arg11[%c0_253, %c0_254], %631 {strides = array<i32>} : memref<8x128xf32, #tpu.memory_space<vmem>>, vector<8x128xf32>,
    } else {
    }
    return
  }
  func.func @transform_0(%arg0: i32) -> (i32, i32) {
    %c0_i32 = arith.constant 0 : i32
    %c0_i32_0 = arith.constant 0 : i32
    return %arg0, %c0_i32 : i32, i32
  }
  func.func @transform_1(%arg0: i32) -> (i32, i32) {
    %c0_i32 = arith.constant 0 : i32
    %c0_i32_0 = arith.constant 0 : i32
    %c0_i32_1 = arith.constant 0 : i32
    return %c0_i32, %c0_i32_0 : i32, i32
  }
  func.func @transform_2(%arg0: i32) -> (i32, i32) {
    %c0_i32 = arith.constant 0 : i32
    %c0_i32_0 = arith.constant 0 : i32
    %c0_i32_1 = arith.constant 0 : i32
    return %c0_i32, %c0_i32_0 : i32, i32
  }
  func.func @transform_3(%arg0: i32) -> (i32, i32) {
    %c0_i32 = arith.constant 0 : i32
    %c0_i32_0 = arith.constant 0 : i32
    %c0_i32_1 = arith.constant 0 : i32
    return %c0_i32, %c0_i32_0 : i32, i32
  }
  func.func @transform_4(%arg0: i32) -> (i32, i32) {
    %c0_i32 = arith.constant 0 : i32
    %c0_i32_0 = arith.constant 0 : i32
    %c0_i32_1 = arith.constant 0 : i32
    return %c0_i32, %c0_i32_0 : i32, i32
  }
  func.func @transform_5(%arg0: i32) -> (i32, i32) {
    %c0_i32 = arith.constant 0 : i32
    %c0_i32_0 = arith.constant 0 : i32
    %c0_i32_1 = arith.constant 0 : i32
    return %c0_i32, %c0_i32_0 : i32, i32
  }
  func.func @transform_6(%arg0: i32) -> (i32, i32) {
    %c0_i32 = arith.constant 0 : i32
    %c0_i32_0 = arith.constant 0 : i32
    %c0_i32_1 = arith.constant 0 : i32
    return %c0_i32, %c0_i32_0 : i32, i32
  }
  func.func @transform_7(%arg0: i32) -> (i32, i32) {
    %c0_i32 = arith.constant 0 : i32
    %c0_i32_0 = arith.constant 0 : i32
    %c0_i32_1 = arith.constant 0 : i32
    return %c0_i32, %c0_i32_0 : i32, i32
  }
  func.func @transform_8(%arg0: i32) -> (i32, i32) {
    %c0_i32 = arith.constant 0 : i32
    %c0_i32_0 = arith.constant 0 : i32
    %c0_i32_1 = arith.constant 0 : i32
    return %c0_i32, %c0_i32_0 : i32, i32
  }
  func.func @transform_9(%arg0: i32) -> (i32, i32) {
    %c0_i32 = arith.constant 0 : i32
    %c0_i32_0 = arith.constant 0 : i32
    %c0_i32_1 = arith.constant 0 : i32
    return %c0_i32, %c0_i32_0 : i32, i32
  }
  func.func @transform_10(%arg0: i32) -> (i32, i32) {
    %c0_i32 = arith.constant 0 : i32
    %c0_i32_0 = arith.constant 0 : i32
    %c0_i32_1 = arith.constant 0 : i32
    return %c0_i32, %c0_i32_0 : i32, i32
  }
}

</mosaic_0001>

<llo_original>
// kernel: lstm_model_forward.1
$region0: #{lstm_model_forward.1}
  #allocation0 [shape = 'u32[]', space=smem, size = 0x4, offset = 0x4, fixed_abs, tag = 'smem constant byte address 0x4 - core index']
  #allocation1 [shape = 'u32[144,128]{1,0:T(1,128)}', space=vmem, size = 0x12000, scoped, tag = 'internal scratch']
  #allocation2 [shape = 'f32[64,512]{1,0:T(8,128)}', space=vmem, size = 0x20000, scoped, tag = 'scratch operand']
  #allocation3 [shape = 'f32[4,8,128]{2,1,0:T(8,128)}', space=vmem, size = 0x4000, scoped, tag = 'scratch operand']
  %s0 = inlined_call_operand.vmem [shape: f32[64,13], index: 0, kind: input, shape index: {}]
  %s1 = inlined_call_operand.vmem [shape: f32[13,512], index: 1, kind: input, shape index: {}]
  %s2 = inlined_call_operand.vmem [shape: f32[128,512], index: 2, kind: input, shape index: {}]
  %s3 = inlined_call_operand.vmem [shape: f32[1,512], index: 3, kind: input, shape index: {}]
  %s4 = inlined_call_operand.vmem [shape: f32[256,512], index: 4, kind: input, shape index: {}]
  %s5 = inlined_call_operand.vmem [shape: f32[1,512], index: 5, kind: input, shape index: {}]
  %s6 = inlined_call_operand.vmem [shape: f32[128,128], index: 6, kind: input, shape index: {}]
  %s7 = inlined_call_operand.vmem [shape: f32[1,128], index: 7, kind: input, shape index: {}]
  %s8 = inlined_call_operand.vmem [shape: f32[128,128], index: 8, kind: input, shape index: {}]
  %s9 = inlined_call_operand.vmem [shape: f32[1,128], index: 9, kind: input, shape index: {}]
  %s10 = inlined_call_operand.vmem [shape: f32[8,128], index: 10, kind: output, shape index: {}]
  %s11 = sld [smem:[#allocation0]]
  $region58: #{lstm_model_forward.1} parent=0
    _
  %s13 = ssub.s32 1, %s11
  %s14 = scalar_select 0, %s13, %s11
  // Predicated region
  $region2: #{lstm_model_forward.1} parent=0 // pred_check
    _
  $region3: #{lstm_model_forward.1} parent=0 // pred_check_branch
    %16 = sbr.rel (0) target = $region5
  $region4: #{lstm_model_forward.1} parent=0 // pred_region
    _
  $region5: #{lstm_model_forward.1} parent=0 // pred_fallthru
    _
  // Predicated region
  $region6: #{lstm_model_forward.1} parent=0 // pred_check
    _
  $region7: #{lstm_model_forward.1} parent=0 // pred_check_branch
    %18 = sbr.rel (0) target = $region9
  $region8: #{lstm_model_forward.1} parent=0 // pred_region
    _
  $region9: #{lstm_model_forward.1} parent=0 // pred_fallthru
    _
  // Predicated region
  $region10: #{lstm_model_forward.1} parent=0 // pred_check
    _
  $region11: #{lstm_model_forward.1} parent=0 // pred_check_branch
    %20 = sbr.rel (0) target = $region13
  $region12: #{lstm_model_forward.1} parent=0 // pred_region
    _
  $region13: #{lstm_model_forward.1} parent=0 // pred_fallthru
    _
  // Predicated region
  $region14: #{lstm_model_forward.1} parent=0 // pred_check
    _
  $region15: #{lstm_model_forward.1} parent=0 // pred_check_branch
    %22 = sbr.rel (0) target = $region17
  $region16: #{lstm_model_forward.1} parent=0 // pred_region
    _
  $region17: #{lstm_model_forward.1} parent=0 // pred_fallthru
    _
  // Predicated region
  $region18: #{lstm_model_forward.1} parent=0 // pred_check
    _
  $region19: #{lstm_model_forward.1} parent=0 // pred_check_branch
    %24 = sbr.rel (0) target = $region21
  $region20: #{lstm_model_forward.1} parent=0 // pred_region
    _
  $region21: #{lstm_model_forward.1} parent=0 // pred_fallthru
    _
  // Predicated region
  $region22: #{lstm_model_forward.1} parent=0 // pred_check
    _
  $region23: #{lstm_model_forward.1} parent=0 // pred_check_branch
    %26 = sbr.rel (0) target = $region25
  $region24: #{lstm_model_forward.1} parent=0 // pred_region
    _
  $region25: #{lstm_model_forward.1} parent=0 // pred_fallthru
    _
  // Predicated region
  $region26: #{lstm_model_forward.1} parent=0 // pred_check
    _
  $region27: #{lstm_model_forward.1} parent=0 // pred_check_branch
    %28 = sbr.rel (0) target = $region29
  $region28: #{lstm_model_forward.1} parent=0 // pred_region
    _
  $region29: #{lstm_model_forward.1} parent=0 // pred_fallthru
    _
  // Predicated region
  $region30: #{lstm_model_forward.1} parent=0 // pred_check
    _
  $region31: #{lstm_model_forward.1} parent=0 // pred_check_branch
    %30 = sbr.rel (0) target = $region33
  $region32: #{lstm_model_forward.1} parent=0 // pred_region
    _
  $region33: #{lstm_model_forward.1} parent=0 // pred_fallthru
    _
  // Predicated region
  $region34: #{lstm_model_forward.1} parent=0 // pred_check
    _
  $region35: #{lstm_model_forward.1} parent=0 // pred_check_branch
    %32 = sbr.rel (0) target = $region37
  $region36: #{lstm_model_forward.1} parent=0 // pred_region
    _
  $region37: #{lstm_model_forward.1} parent=0 // pred_fallthru
    _
  // Predicated region
  $region38: #{lstm_model_forward.1} parent=0 // pred_check
    _
  $region39: #{lstm_model_forward.1} parent=0 // pred_check_branch
    %34 = sbr.rel (0) target = $region41
  $region40: #{lstm_model_forward.1} parent=0 // pred_region
    _
  $region41: #{lstm_model_forward.1} parent=0 // pred_fallthru
    _
  %p35 = scmp.eq.s32.totalorder 0, 0
  // Predicated region
  $region42: #{lstm_model_forward.1} parent=0 // pred_check
    %p36 = pneg %p35
  $region43: #{lstm_model_forward.1} parent=0 // pred_check_branch
    %38 = sbr.rel (%p36) target = $region45
  $region44: #{lstm_model_forward.1} parent=0 // pred_region
    %39 = vst [vmem:[#allocation3] sm:$0xff] 0.0
    %40 = vst [vmem:[#allocation3 + $0x8] sm:$0xff] 0.0
    %41 = vst [vmem:[#allocation3 + $0x10] sm:$0xff] 0.0
    %42 = vst [vmem:[#allocation3 + $0x18] sm:$0xff] 0.0
  $region45: #{lstm_model_forward.1} parent=0 // pred_fallthru
    _
  %v43 = vld [vmem:[%s0] sm:$0xff]
  %v44 = vld [vmem:[%s0 + $0x8] sm:$0xff]
  %v45 = vld [vmem:[%s0 + $0x10] sm:$0xff]
  %v46 = vld [vmem:[%s0 + $0x18] sm:$0xff]
  %v47 = vld [vmem:[%s0 + $0x20] sm:$0xff]
  %v48 = vld [vmem:[%s0 + $0x28] sm:$0xff]
  %v49 = vld [vmem:[%s0 + $0x30] sm:$0xff]
  %v50 = vld [vmem:[%s0 + $0x38] sm:$0xff]
  %v51 = vld [vmem:[%s1] sm:$0xff]
  %v52 = vld [vmem:[%s1 + $0x8] sm:$0xff]
  %v53 = vld [vmem:[%s1 + $0x10] sm:$0xff]
  %v54 = vld [vmem:[%s1 + $0x18] sm:$0xff]
  %v55 = vld [vmem:[%s1 + $0x20] sm:$0x1f]
  %v56 = vld [vmem:[%s1 + $0x28] sm:$0x1f]
  %v57 = vld [vmem:[%s1 + $0x30] sm:$0x1f]
  %v58 = vld [vmem:[%s1 + $0x38] sm:$0x1f]
  %v59 = vld [vmem:[%s3] sm:$0xf]
  %v61 = vlaneseq
  %v62 = vshrl.u32 %v61, 7
  %v63 = vsub.s32 0, %v62
  %v64 = vrot.slane %v59, %v63
  %v65 = vlaneseq
  %v66 = vshrl.u32 %v65, 7
  %v67 = vsub.s32 1, %v66
  %v68 = vrot.slane %v59, %v67
  %v69 = vlaneseq
  %v70 = vshrl.u32 %v69, 7
  %v71 = vsub.s32 2, %v70
  %v72 = vrot.slane %v59, %v71
  %v73 = vlaneseq
  %v74 = vshrl.u32 %v73, 7
  %v75 = vsub.s32 3, %v74
  %v76 = vrot.slane %v59, %v75
  %vm81 = vcmask 105472
  %v83 = vsel %vm81, %v43, 0
  %v86 = vsel %vm81, %v44, 0
  %v89 = vsel %vm81, %v45, 0
  %v92 = vsel %vm81, %v46, 0
  %v95 = vsel %vm81, %v47, 0
  %v98 = vsel %vm81, %v48, 0
  %v101 = vsel %vm81, %v49, 0
  %v104 = vsel %vm81, %v50, 0
  %vm106 = vcmask 1044480
  %v108 = vsel %vm106, %v55, 0
  %v111 = vsel %vm106, %v56, 0
  %v114 = vsel %vm106, %v57, 0
  %v117 = vsel %vm106, %v58, 0
  %119 = vmatprep.subr.mxu0 %v52
  %120 = vmatpush1.msra.mxu0 %v51
  %121 = vmatprep.subr.mxu0 %v111
  %122 = vmatpush1.msra.mxu0 %v108
  %123 = vmatprep.subr.mxu0 0.0
  %124 = vmatpush1.msra.mxu0 0.0
  %125 = vmatprep.subr.mxu0 0.0
  %126 = vmatpush1.msra.mxu0 0.0
  %127 = vmatprep.subr.mxu0 0.0
  %128 = vmatpush1.msra.mxu0 0.0
  %129 = vmatprep.subr.mxu0 0.0
  %130 = vmatpush1.msra.mxu0 0.0
  %131 = vmatprep.subr.mxu0 0.0
  %132 = vmatpush1.msra.mxu0 0.0
  %133 = vmatprep.subr.mxu0 0.0
  %134 = vmatpush1.msra.mxu0 0.0
  %135 = vmatprep.subr.mxu0 0.0
  %136 = vmatpush1.msra.mxu0 0.0
  %137 = vmatprep.subr.mxu0 0.0
  %138 = vmatpush1.msra.mxu0 0.0
  %139 = vmatprep.subr.mxu0 0.0
  %140 = vmatpush1.msra.mxu0 0.0
  %141 = vmatprep.subr.mxu0 0.0
  %142 = vmatpush1.msra.mxu0 0.0
  %143 = vmatprep.subr.mxu0 0.0
  %144 = vmatpush1.msra.mxu0 0.0
  %145 = vmatprep.subr.mxu0 0.0
  %146 = vmatpush1.msra.mxu0 0.0
  %147 = vmatprep.subr.mxu0 0.0
  %148 = vmatpush1.msra.mxu0 0.0
  %149 = vmatprep.subr.mxu0 0.0
  %150 = vmatpush1.msra.mxu0 0.0
  %151 = vmatprep.subr.mxu0 0.0
  %152 = vmatpush1.msra.mxu0 0.0
  %153 = vmatprep.subr.mxu0 0.0
  %154 = vmatpush1.msra.mxu0 0.0
  %155 = vmatprep.subr.mxu0 0.0
  %156 = vmatpush1.msra.mxu0 0.0
  %157 = vmatprep.subr.mxu0 0.0
  %158 = vmatpush1.msra.mxu0 0.0
  %159 = vmatprep.subr.mxu0 0.0
  %160 = vmatpush1.msra.mxu0 0.0
  %161 = vmatprep.subr.mxu0 0.0
  %162 = vmatpush1.msra.mxu0 0.0
  %163 = vmatprep.subr.mxu0 0.0
  %164 = vmatpush1.msra.mxu0 0.0
  %165 = vmatprep.subr.mxu0 0.0
  %166 = vmatpush1.msra.mxu0 0.0
  %167 = vmatprep.subr.mxu0 0.0
  %168 = vmatpush1.msra.mxu0 0.0
  %169 = vmatprep.subr.mxu0 0.0
  %170 = vmatpush1.msra.mxu0 0.0
  %171 = vmatprep.subr.mxu0 0.0
  %172 = vmatpush1.msra.mxu0 0.0
  %173 = vmatprep.subr.mxu0 0.0
  %174 = vmatpush1.msra.mxu0 0.0
  %175 = vmatprep.subr.mxu0 0.0
  %176 = vmatpush1.msra.mxu0 0.0
  %177 = vmatprep.subr.mxu0 0.0
  %178 = vmatpush1.msra.mxu0 0.0
  %179 = vmatprep.subr.mxu0 0.0
  %180 = vmatpush1.msra.mxu0 0.0
  %181 = vmatprep.subr.mxu0 0.0
  %182 = vmatpush1.msra.mxu0 0.0
  %183 = vmatprep.mubr.f32.mxu0 0.0
  %184 = vmatmul.mubr.f32.gmra.mrb[0].mxu0 %v83
  %v185 = vpop.f32.mrb[0].mxu0
  %v186 = vadd.f32 %v64, %v185
  %v187 = vpop.f32.mrb[0].mxu0
  %v188 = vadd.f32 %v68, %v187
  %189 = vmatprep.mubr.f32.mxu0 0.0
  %190 = vmatmul.mubr.f32.gmra.mrb[0].mxu0 %v86
  %v191 = vpop.f32.mrb[0].mxu0
  %v192 = vadd.f32 %v64, %v191
  %v193 = vpop.f32.mrb[0].mxu0
  %v194 = vadd.f32 %v68, %v193
  %195 = vmatprep.mubr.f32.mxu0 0.0
  %196 = vmatmul.mubr.f32.gmra.mrb[0].mxu0 %v89
  %v197 = vpop.f32.mrb[0].mxu0
  %v198 = vadd.f32 %v64, %v197
  %v199 = vpop.f32.mrb[0].mxu0
  %v200 = vadd.f32 %v68, %v199
  %201 = vmatprep.mubr.f32.mxu0 0.0
  %202 = vmatmul.mubr.f32.gmra.mrb[0].mxu0 %v92
  %v203 = vpop.f32.mrb[0].mxu0
  %v204 = vadd.f32 %v64, %v203
  %v205 = vpop.f32.mrb[0].mxu0
  %v206 = vadd.f32 %v68, %v205
  %207 = vmatprep.mubr.f32.mxu0 0.0
  %208 = vmatmul.mubr.f32.gmra.mrb[0].mxu0 %v95
  %v209 = vpop.f32.mrb[0].mxu0
  %v210 = vadd.f32 %v64, %v209
  %v211 = vpop.f32.mrb[0].mxu0
  %v212 = vadd.f32 %v68, %v211
  %213 = vmatprep.mubr.f32.mxu0 0.0
  %214 = vmatmul.mubr.f32.gmra.mrb[0].mxu0 %v98
  %v215 = vpop.f32.mrb[0].mxu0
  %v216 = vadd.f32 %v64, %v215
  %v217 = vpop.f32.mrb[0].mxu0
  %v218 = vadd.f32 %v68, %v217
  %219 = vmatprep.mubr.f32.mxu0 0.0
  %220 = vmatmul.mubr.f32.gmra.mrb[0].mxu0 %v101
  %v221 = vpop.f32.mrb[0].mxu0
  %v222 = vadd.f32 %v64, %v221
  %v223 = vpop.f32.mrb[0].mxu0
  %v224 = vadd.f32 %v68, %v223
  %225 = vmatprep.mubr.f32.mxu0 0.0
  %226 = vmatmul.mubr.f32.gmra.mrb[0].mxu0 %v104
  %v227 = vpop.f32.mrb[0].mxu0
  %v228 = vadd.f32 %v64, %v227
  %v229 = vpop.f32.mrb[0].mxu0
  %v230 = vadd.f32 %v68, %v229
  %231 = vdwg.mxu0
  %232 = vmatprep.subr.mxu0 %v54
  %233 = vmatpush1.msra.mxu0 %v53
  %234 = vmatprep.subr.mxu0 %v117
  %235 = vmatpush1.msra.mxu0 %v114
  %236 = vmatprep.subr.mxu0 0.0
  %237 = vmatpush1.msra.mxu0 0.0
  %238 = vmatprep.subr.mxu0 0.0
  %239 = vmatpush1.msra.mxu0 0.0
  %240 = vmatprep.subr.mxu0 0.0
  %241 = vmatpush1.msra.mxu0 0.0
  %242 = vmatprep.subr.mxu0 0.0
  %243 = vmatpush1.msra.mxu0 0.0
  %244 = vmatprep.subr.mxu0 0.0
  %245 = vmatpush1.msra.mxu0 0.0
  %246 = vmatprep.subr.mxu0 0.0
  %247 = vmatpush1.msra.mxu0 0.0
  %248 = vmatprep.subr.mxu0 0.0
  %249 = vmatpush1.msra.mxu0 0.0
  %250 = vmatprep.subr.mxu0 0.0
  %251 = vmatpush1.msra.mxu0 0.0
  %252 = vmatprep.subr.mxu0 0.0
  %253 = vmatpush1.msra.mxu0 0.0
  %254 = vmatprep.subr.mxu0 0.0
  %255 = vmatpush1.msra.mxu0 0.0
  %256 = vmatprep.subr.mxu0 0.0
  %257 = vmatpush1.msra.mxu0 0.0
  %258 = vmatprep.subr.mxu0 0.0
  %259 = vmatpush1.msra.mxu0 0.0
  %260 = vmatprep.subr.mxu0 0.0
  %261 = vmatpush1.msra.mxu0 0.0
  %262 = vmatprep.subr.mxu0 0.0
  %263 = vmatpush1.msra.mxu0 0.0
  %264 = vmatprep.subr.mxu0 0.0
  %265 = vmatpush1.msra.mxu0 0.0
  %266 = vmatprep.subr.mxu0 0.0
  %267 = vmatpush1.msra.mxu0 0.0
  %268 = vmatprep.subr.mxu0 0.0
  %269 = vmatpush1.msra.mxu0 0.0
  %270 = vmatprep.subr.mxu0 0.0
  %271 = vmatpush1.msra.mxu0 0.0
  %272 = vmatprep.subr.mxu0 0.0
  %273 = vmatpush1.msra.mxu0 0.0
  %274 = vmatprep.subr.mxu0 0.0
  %275 = vmatpush1.msra.mxu0 0.0
  %276 = vmatprep.subr.mxu0 0.0
  %277 = vmatpush1.msra.mxu0 0.0
  %278 = vmatprep.subr.mxu0 0.0
  %279 = vmatpush1.msra.mxu0 0.0
  %280 = vmatprep.subr.mxu0 0.0
  %281 = vmatpush1.msra.mxu0 0.0
  %282 = vmatprep.subr.mxu0 0.0
  %283 = vmatpush1.msra.mxu0 0.0
  %284 = vmatprep.subr.mxu0 0.0
  %285 = vmatpush1.msra.mxu0 0.0
  %286 = vmatprep.subr.mxu0 0.0
  %287 = vmatpush1.msra.mxu0 0.0
  %288 = vmatprep.subr.mxu0 0.0
  %289 = vmatpush1.msra.mxu0 0.0
  %290 = vmatprep.subr.mxu0 0.0
  %291 = vmatpush1.msra.mxu0 0.0
  %292 = vmatprep.subr.mxu0 0.0
  %293 = vmatpush1.msra.mxu0 0.0
  %294 = vmatprep.subr.mxu0 0.0
  %295 = vmatpush1.msra.mxu0 0.0
  %296 = vmatprep.mubr.f32.mxu0 0.0
  %297 = vmatmul.mubr.f32.gmra.mrb[0].mxu0 %v83
  %v298 = vpop.f32.mrb[0].mxu0
  %v299 = vadd.f32 %v72, %v298
  %v300 = vpop.f32.mrb[0].mxu0
  %v301 = vadd.f32 %v76, %v300
  %302 = vmatprep.mubr.f32.mxu0 0.0
  %303 = vmatmul.mubr.f32.gmra.mrb[0].mxu0 %v86
  %v304 = vpop.f32.mrb[0].mxu0
  %v305 = vadd.f32 %v72, %v304
  %v306 = vpop.f32.mrb[0].mxu0
  %v307 = vadd.f32 %v76, %v306
  %308 = vmatprep.mubr.f32.mxu0 0.0
  %309 = vmatmul.mubr.f32.gmra.mrb[0].mxu0 %v89
  %v310 = vpop.f32.mrb[0].mxu0
  %v311 = vadd.f32 %v72, %v310
  %v312 = vpop.f32.mrb[0].mxu0
  %v313 = vadd.f32 %v76, %v312
  %314 = vmatprep.mubr.f32.mxu0 0.0
  %315 = vmatmul.mubr.f32.gmra.mrb[0].mxu0 %v92
  %v316 = vpop.f32.mrb[0].mxu0
  %v317 = vadd.f32 %v72, %v316
  %v318 = vpop.f32.mrb[0].mxu0
  %v319 = vadd.f32 %v76, %v318
  %320 = vmatprep.mubr.f32.mxu0 0.0
  %321 = vmatmul.mubr.f32.gmra.mrb[0].mxu0 %v95
  %v322 = vpop.f32.mrb[0].mxu0
  %v323 = vadd.f32 %v72, %v322
  %v324 = vpop.f32.mrb[0].mxu0
  %v325 = vadd.f32 %v76, %v324
  %326 = vmatprep.mubr.f32.mxu0 0.0
  %327 = vmatmul.mubr.f32.gmra.mrb[0].mxu0 %v98
  %v328 = vpop.f32.mrb[0].mxu0
  %v329 = vadd.f32 %v72, %v328
  %v330 = vpop.f32.mrb[0].mxu0
  %v331 = vadd.f32 %v76, %v330
  %332 = vmatprep.mubr.f32.mxu0 0.0
  %333 = vmatmul.mubr.f32.gmra.mrb[0].mxu0 %v101
  %v334 = vpop.f32.mrb[0].mxu0
  %v335 = vadd.f32 %v72, %v334
  %v336 = vpop.f32.mrb[0].mxu0
  %v337 = vadd.f32 %v76, %v336
  %338 = vmatprep.mubr.f32.mxu0 0.0
  %339 = vmatmul.mubr.f32.gmra.mrb[0].mxu0 %v104
  %v340 = vpop.f32.mrb[0].mxu0
  %v341 = vadd.f32 %v72, %v340
  %v342 = vpop.f32.mrb[0].mxu0
  %v343 = vadd.f32 %v76, %v342
  %344 = vdwg.mxu0
  %345 = vst [vmem:[#allocation2] sm:$0xff] %v186
  %346 = vst [vmem:[#allocation2 + $0x8] sm:$0xff] %v188
  %347 = vst [vmem:[#allocation2 + $0x10] sm:$0xff] %v299
  %348 = vst [vmem:[#allocation2 + $0x18] sm:$0xff] %v301
  %349 = vst [vmem:[#allocation2 + $0x20] sm:$0xff] %v192
  %350 = vst [vmem:[#allocation2 + $0x28] sm:$0xff] %v194
  %351 = vst [vmem:[#allocation2 + $0x30] sm:$0xff] %v305
  %352 = vst [vmem:[#allocation2 + $0x38] sm:$0xff] %v307
  %353 = vst [vmem:[#allocation2 + $0x40] sm:$0xff] %v198
  %354 = vst [vmem:[#allocation2 + $0x48] sm:$0xff] %v200
  %355 = vst [vmem:[#allocation2 + $0x50] sm:$0xff] %v311
  %356 = vst [vmem:[#allocation2 + $0x58] sm:$0xff] %v313
  %357 = vst [vmem:[#allocation2 + $0x60] sm:$0xff] %v204
  %358 = vst [vmem:[#allocation2 + $0x68] sm:$0xff] %v206
  %359 = vst [vmem:[#allocation2 + $0x70] sm:$0xff] %v317
  %360 = vst [vmem:[#allocation2 + $0x78] sm:$0xff] %v319
  %361 = vst [vmem:[#allocation2 + $0x80] sm:$0xff] %v210
  %362 = vst [vmem:[#allocation2 + $0x88] sm:$0xff] %v212
  %363 = vst [vmem:[#allocation2 + $0x90] sm:$0xff] %v323
  %364 = vst [vmem:[#allocation2 + $0x98] sm:$0xff] %v325
  %365 = vst [vmem:[#allocation2 + $0xa0] sm:$0xff] %v216
  %366 = vst [vmem:[#allocation2 + $0xa8] sm:$0xff] %v218
  %367 = vst [vmem:[#allocation2 + $0xb0] sm:$0xff] %v329
  %368 = vst [vmem:[#allocation2 + $0xb8] sm:$0xff] %v331
  %369 = vst [vmem:[#allocation2 + $0xc0] sm:$0xff] %v222
  %370 = vst [vmem:[#allocation2 + $0xc8] sm:$0xff] %v224
  %371 = vst [vmem:[#allocation2 + $0xd0] sm:$0xff] %v335
  %372 = vst [vmem:[#allocation2 + $0xd8] sm:$0xff] %v337
  %373 = vst [vmem:[#allocation2 + $0xe0] sm:$0xff] %v228
  %374 = vst [vmem:[#allocation2 + $0xe8] sm:$0xff] %v230
  %375 = vst [vmem:[#allocation2 + $0xf0] sm:$0xff] %v341
  %376 = vst [vmem:[#allocation2 + $0xf8] sm:$0xff] %v343
  %v377 = vld [vmem:[%s5] sm:$0xf]
  %v379 = vlaneseq
  %v380 = vshrl.u32 %v379, 7
  %v381 = vsub.s32 0, %v380
  %v382 = vrot.slane %v377, %v381
  %v383 = vlaneseq
  %v384 = vshrl.u32 %v383, 7
  %v385 = vsub.s32 1, %v384
  %v386 = vrot.slane %v377, %v385
  %v387 = vlaneseq
  %v388 = vshrl.u32 %v387, 7
  %v389 = vsub.s32 2, %v388
  %v390 = vrot.slane %v377, %v389
  %v391 = vlaneseq
  %v392 = vshrl.u32 %v391, 7
  %v393 = vsub.s32 3, %v392
  %v394 = vrot.slane %v377, %v393
  %v399 = vld [vmem:[#allocation3] sm:$0xff]
  %s400 = scalar_lea.vmem [#allocation3], 8
  %v401 = vld [vmem:[%s400] sm:$0xff]
  %s402 = scalar_lea.vmem [#allocation3], 16
  %v403 = vld [vmem:[%s402] sm:$0xff]
  %s404 = scalar_lea.vmem [#allocation3], 24
  %v405 = vld [vmem:[%s404] sm:$0xff]
  %s406 = smul.u32 0, 4
  %s407 = smul.addr %s406, 8
  %s408 = scalar_lea.vmem [#allocation2], %s407
  %v409 = vld [vmem:[%s408] sm:$0xff]
  %v410 = vld [vmem:[%s408 + $0x8] sm:$0xff]
  %v411 = vld [vmem:[%s408 + $0x10] sm:$0xff]
  %v412 = vld [vmem:[%s408 + $0x18] sm:$0xff]
  %v413 = vld [vmem:[%s2] sm:$0xff]
  %v414 = vld [vmem:[%s2 + $0x8] sm:$0xff]
  %v415 = vld [vmem:[%s2 + $0x10] sm:$0xff]
  %v416 = vld [vmem:[%s2 + $0x18] sm:$0xff]
  %v417 = vld [vmem:[%s2 + $0x20] sm:$0xff]
  %v418 = vld [vmem:[%s2 + $0x28] sm:$0xff]
  %v419 = vld [vmem:[%s2 + $0x30] sm:$0xff]
  %v420 = vld [vmem:[%s2 + $0x38] sm:$0xff]
  %v421 = vld [vmem:[%s2 + $0x40] sm:$0xff]
  %v422 = vld [vmem:[%s2 + $0x48] sm:$0xff]
  %v423 = vld [vmem:[%s2 + $0x50] sm:$0xff]
  %v424 = vld [vmem:[%s2 + $0x58] sm:$0xff]
  %v425 = vld [vmem:[%s2 + $0x60] sm:$0xff]
  %v426 = vld [vmem:[%s2 + $0x68] sm:$0xff]
  %v427 = vld [vmem:[%s2 + $0x70] sm:$0xff]
  %v428 = vld [vmem:[%s2 + $0x78] sm:$0xff]
  %v429 = vld [vmem:[%s2 + $0x80] sm:$0xff]
  %v430 = vld [vmem:[%s2 + $0x88] sm:$0xff]
  %v431 = vld [vmem:[%s2 + $0x90] sm:$0xff]
  %v432 = vld [vmem:[%s2 + $0x98] sm:$0xff]
  %v433 = vld [vmem:[%s2 + $0xa0] sm:$0xff]
  %v434 = vld [vmem:[%s2 + $0xa8] sm:$0xff]
  %v435 = vld [vmem:[%s2 + $0xb0] sm:$0xff]
  %v436 = vld [vmem:[%s2 + $0xb8] sm:$0xff]
  %v437 = vld [vmem:[%s2 + $0xc0] sm:$0xff]
  %v438 = vld [vmem:[%s2 + $0xc8] sm:$0xff]
  %v439 = vld [vmem:[%s2 + $0xd0] sm:$0xff]
  %v440 = vld [vmem:[%s2 + $0xd8] sm:$0xff]
  %v441 = vld [vmem:[%s2 + $0xe0] sm:$0xff]
  %v442 = vld [vmem:[%s2 + $0xe8] sm:$0xff]
  %v443 = vld [vmem:[%s2 + $0xf0] sm:$0xff]
  %v444 = vld [vmem:[%s2 + $0xf8] sm:$0xff]
  %v445 = vld [vmem:[%s2 + $0x100] sm:$0xff]
  %v446 = vld [vmem:[%s2 + $0x108] sm:$0xff]
  %v447 = vld [vmem:[%s2 + $0x110] sm:$0xff]
  %v448 = vld [vmem:[%s2 + $0x118] sm:$0xff]
  %v449 = vld [vmem:[%s2 + $0x120] sm:$0xff]
  %v450 = vld [vmem:[%s2 + $0x128] sm:$0xff]
  %v451 = vld [vmem:[%s2 + $0x130] sm:$0xff]
  %v452 = vld [vmem:[%s2 + $0x138] sm:$0xff]
  %v453 = vld [vmem:[%s2 + $0x140] sm:$0xff]
  %v454 = vld [vmem:[%s2 + $0x148] sm:$0xff]
  %v455 = vld [vmem:[%s2 + $0x150] sm:$0xff]
  %v456 = vld [vmem:[%s2 + $0x158] sm:$0xff]
  %v457 = vld [vmem:[%s2 + $0x160] sm:$0xff]
  %v458 = vld [vmem:[%s2 + $0x168] sm:$0xff]
  %v459 = vld [vmem:[%s2 + $0x170] sm:$0xff]
  %v460 = vld [vmem:[%s2 + $0x178] sm:$0xff]
  %v461 = vld [vmem:[%s2 + $0x180] sm:$0xff]
  %v462 = vld [vmem:[%s2 + $0x188] sm:$0xff]
  %v463 = vld [vmem:[%s2 + $0x190] sm:$0xff]
  %v464 = vld [vmem:[%s2 + $0x198] sm:$0xff]
  %v465 = vld [vmem:[%s2 + $0x1a0] sm:$0xff]
  %v466 = vld [vmem:[%s2 + $0x1a8] sm:$0xff]
  %v467 = vld [vmem:[%s2 + $0x1b0] sm:$0xff]
  %v468 = vld [vmem:[%s2 + $0x1b8] sm:$0xff]
  %v469 = vld [vmem:[%s2 + $0x1c0] sm:$0xff]
  %v470 = vld [vmem:[%s2 + $0x1c8] sm:$0xff]
  %v471 = vld [vmem:[%s2 + $0x1d0] sm:$0xff]
  %v472 = vld [vmem:[%s2 + $0x1d8] sm:$0xff]
  %v473 = vld [vmem:[%s2 + $0x1e0] sm:$0xff]
  %v474 = vld [vmem:[%s2 + $0x1e8] sm:$0xff]
  %v475 = vld [vmem:[%s2 + $0x1f0] sm:$0xff]
  %v476 = vld [vmem:[%s2 + $0x1f8] sm:$0xff]
  %477 = vmatprep.subr.mxu0 %v414
  %478 = vmatpush1.msra.mxu0 %v413
  %479 = vmatprep.subr.mxu0 %v418
  %480 = vmatpush1.msra.mxu0 %v417
  %481 = vmatprep.subr.mxu0 %v422
  %482 = vmatpush1.msra.mxu0 %v421
  %483 = vmatprep.subr.mxu0 %v426
  %484 = vmatpush1.msra.mxu0 %v425
  %485 = vmatprep.subr.mxu0 %v430
  %486 = vmatpush1.msra.mxu0 %v429
  %487 = vmatprep.subr.mxu0 %v434
  %488 = vmatpush1.msra.mxu0 %v433
  %489 = vmatprep.subr.mxu0 %v438
  %490 = vmatpush1.msra.mxu0 %v437
  %491 = vmatprep.subr.mxu0 %v442
  %492 = vmatpush1.msra.mxu0 %v441
  %493 = vmatprep.subr.mxu0 %v446
  %494 = vmatpush1.msra.mxu0 %v445
  %495 = vmatprep.subr.mxu0 %v450
  %496 = vmatpush1.msra.mxu0 %v449
  %497 = vmatprep.subr.mxu0 %v454
  %498 = vmatpush1.msra.mxu0 %v453
  %499 = vmatprep.subr.mxu0 %v458
  %500 = vmatpush1.msra.mxu0 %v457
  %501 = vmatprep.subr.mxu0 %v462
  %502 = vmatpush1.msra.mxu0 %v461
  %503 = vmatprep.subr.mxu0 %v466
  %504 = vmatpush1.msra.mxu0 %v465
  %505 = vmatprep.subr.mxu0 %v470
  %506 = vmatpush1.msra.mxu0 %v469
  %507 = vmatprep.subr.mxu0 %v474
  %508 = vmatpush1.msra.mxu0 %v473
  %509 = vmatprep.subr.mxu0 0.0
  %510 = vmatpush1.msra.mxu0 0.0
  %511 = vmatprep.subr.mxu0 0.0
  %512 = vmatpush1.msra.mxu0 0.0
  %513 = vmatprep.subr.mxu0 0.0
  %514 = vmatpush1.msra.mxu0 0.0
  %515 = vmatprep.subr.mxu0 0.0
  %516 = vmatpush1.msra.mxu0 0.0
  %517 = vmatprep.subr.mxu0 0.0
  %518 = vmatpush1.msra.mxu0 0.0
  %519 = vmatprep.subr.mxu0 0.0
  %520 = vmatpush1.msra.mxu0 0.0
  %521 = vmatprep.subr.mxu0 0.0
  %522 = vmatpush1.msra.mxu0 0.0
  %523 = vmatprep.subr.mxu0 0.0
  %524 = vmatpush1.msra.mxu0 0.0
  %525 = vmatprep.subr.mxu0 0.0
  %526 = vmatpush1.msra.mxu0 0.0
  %527 = vmatprep.subr.mxu0 0.0
  %528 = vmatpush1.msra.mxu0 0.0
  %529 = vmatprep.subr.mxu0 0.0
  %530 = vmatpush1.msra.mxu0 0.0
  %531 = vmatprep.subr.mxu0 0.0
  %532 = vmatpush1.msra.mxu0 0.0
  %533 = vmatprep.subr.mxu0 0.0
  %534 = vmatpush1.msra.mxu0 0.0
  %535 = vmatprep.subr.mxu0 0.0
  %536 = vmatpush1.msra.mxu0 0.0
  %537 = vmatprep.subr.mxu0 0.0
  %538 = vmatpush1.msra.mxu0 0.0
  %539 = vmatprep.subr.mxu0 0.0
  %540 = vmatpush1.msra.mxu0 0.0
  %541 = vmatprep.mubr.f32.mxu0 0.0
  %542 = vmatmul.mubr.f32.gmra.mrb[0].mxu0 %v399
  %v543 = vpop.f32.mrb[0].mxu0
  %v544 = vadd.f32 0.0, %v543
  %v545 = vpop.f32.mrb[0].mxu0
  %v546 = vadd.f32 0.0, %v545
  %547 = vdwg.mxu0
  %548 = vmatprep.subr.mxu0 %v416
  %549 = vmatpush1.msra.mxu0 %v415
  %550 = vmatprep.subr.mxu0 %v420
  %551 = vmatpush1.msra.mxu0 %v419
  %552 = vmatprep.subr.mxu0 %v424
  %553 = vmatpush1.msra.mxu0 %v423
  %554 = vmatprep.subr.mxu0 %v428
  %555 = vmatpush1.msra.mxu0 %v427
  %556 = vmatprep.subr.mxu0 %v432
  %557 = vmatpush1.msra.mxu0 %v431
  %558 = vmatprep.subr.mxu0 %v436
  %559 = vmatpush1.msra.mxu0 %v435
  %560 = vmatprep.subr.mxu0 %v440
  %561 = vmatpush1.msra.mxu0 %v439
  %562 = vmatprep.subr.mxu0 %v444
  %563 = vmatpush1.msra.mxu0 %v443
  %564 = vmatprep.subr.mxu0 %v448
  %565 = vmatpush1.msra.mxu0 %v447
  %566 = vmatprep.subr.mxu0 %v452
  %567 = vmatpush1.msra.mxu0 %v451
  %568 = vmatprep.subr.mxu0 %v456
  %569 = vmatpush1.msra.mxu0 %v455
  %570 = vmatprep.subr.mxu0 %v460
  %571 = vmatpush1.msra.mxu0 %v459
  %572 = vmatprep.subr.mxu0 %v464
  %573 = vmatpush1.msra.mxu0 %v463
  %574 = vmatprep.subr.mxu0 %v468
  %575 = vmatpush1.msra.mxu0 %v467
  %576 = vmatprep.subr.mxu0 %v472
  %577 = vmatpush1.msra.mxu0 %v471
  %578 = vmatprep.subr.mxu0 %v476
  %579 = vmatpush1.msra.mxu0 %v475
  %580 = vmatprep.subr.mxu0 0.0
  %581 = vmatpush1.msra.mxu0 0.0
  %582 = vmatprep.subr.mxu0 0.0
  %583 = vmatpush1.msra.mxu0 0.0
  %584 = vmatprep.subr.mxu0 0.0
  %585 = vmatpush1.msra.mxu0 0.0
  %586 = vmatprep.subr.mxu0 0.0
  %587 = vmatpush1.msra.mxu0 0.0
  %588 = vmatprep.subr.mxu0 0.0
  %589 = vmatpush1.msra.mxu0 0.0
  %590 = vmatprep.subr.mxu0 0.0
  %591 = vmatpush1.msra.mxu0 0.0
  %592 = vmatprep.subr.mxu0 0.0
  %593 = vmatpush1.msra.mxu0 0.0
  %594 = vmatprep.subr.mxu0 0.0
  %595 = vmatpush1.msra.mxu0 0.0
  %596 = vmatprep.subr.mxu0 0.0
  %597 = vmatpush1.msra.mxu0 0.0
  %598 = vmatprep.subr.mxu0 0.0
  %599 = vmatpush1.msra.mxu0 0.0
  %600 = vmatprep.subr.mxu0 0.0
  %601 = vmatpush1.msra.mxu0 0.0
  %602 = vmatprep.subr.mxu0 0.0
  %603 = vmatpush1.msra.mxu0 0.0
  %604 = vmatprep.subr.mxu0 0.0
  %605 = vmatpush1.msra.mxu0 0.0
  %606 = vmatprep.subr.mxu0 0.0
  %607 = vmatpush1.msra.mxu0 0.0
  %608 = vmatprep.subr.mxu0 0.0
  %609 = vmatpush1.msra.mxu0 0.0
  %610 = vmatprep.subr.mxu0 0.0
  %611 = vmatpush1.msra.mxu0 0.0
  %612 = vmatprep.mubr.f32.mxu0 0.0
  %613 = vmatmul.mubr.f32.gmra.mrb[0].mxu0 %v399
  %v614 = vpop.f32.mrb[0].mxu0
  %v615 = vadd.f32 0.0, %v614
  %v616 = vpop.f32.mrb[0].mxu0
  %v617 = vadd.f32 0.0, %v616
  %618 = vdwg.mxu0
  %v619 = vadd.f32 %v409, %v544
  %v620 = vadd.f32 %v410, %v546
  %v621 = vadd.f32 %v411, %v615
  %v622 = vadd.f32 %v412, %v617
  %v623 = vmul.f32 %v619, 0.5
  %v624 = vtanh.pop %v623
  %v625 = vmul.f32 %v624, 0.5
  %v626 = vadd.f32 %v625, 0.5
  %v627 = vmul.f32 %v620, 0.5
  %v628 = vtanh.pop %v627
  %v629 = vmul.f32 %v628, 0.5
  %v630 = vadd.f32 %v629, 0.5
  %v631 = vtanh.pop %v621
  %v632 = vmul.f32 %v622, 0.5
  %v633 = vtanh.pop %v632
  %v634 = vmul.f32 %v633, 0.5
  %v635 = vadd.f32 %v634, 0.5
  %v636 = vmul.f32 %v630, %v401
  %v637 = vmul.f32 %v626, %v631
  %v638 = vadd.f32 %v636, %v637
  %v639 = vtanh.pop %v638
  %v640 = vmul.f32 %v635, %v639
  %v641 = vld [vmem:[%s4] sm:$0xff]
  %v642 = vld [vmem:[%s4 + $0x8] sm:$0xff]
  %v643 = vld [vmem:[%s4 + $0x10] sm:$0xff]
  %v644 = vld [vmem:[%s4 + $0x18] sm:$0xff]
  %v645 = vld [vmem:[%s4 + $0x20] sm:$0xff]
  %v646 = vld [vmem:[%s4 + $0x28] sm:$0xff]
  %v647 = vld [vmem:[%s4 + $0x30] sm:$0xff]
  %v648 = vld [vmem:[%s4 + $0x38] sm:$0xff]
  %v649 = vld [vmem:[%s4 + $0x40] sm:$0xff]
  %v650 = vld [vmem:[%s4 + $0x48] sm:$0xff]
  %v651 = vld [vmem:[%s4 + $0x50] sm:$0xff]
  %v652 = vld [vmem:[%s4 + $0x58] sm:$0xff]
  %v653 = vld [vmem:[%s4 + $0x60] sm:$0xff]
  %v654 = vld [vmem:[%s4 + $0x68] sm:$0xff]
  %v655 = vld [vmem:[%s4 + $0x70] sm:$0xff]
  %v656 = vld [vmem:[%s4 + $0x78] sm:$0xff]
  %v657 = vld [vmem:[%s4 + $0x80] sm:$0xff]
  %v658 = vld [vmem:[%s4 + $0x88] sm:$0xff]
  %v659 = vld [vmem:[%s4 + $0x90] sm:$0xff]
  %v660 = vld [vmem:[%s4 + $0x98] sm:$0xff]
  %v661 = vld [vmem:[%s4 + $0xa0] sm:$0xff]
  %v662 = vld [vmem:[%s4 + $0xa8] sm:$0xff]
  %v663 = vld [vmem:[%s4 + $0xb0] sm:$0xff]
  %v664 = vld [vmem:[%s4 + $0xb8] sm:$0xff]
  %v665 = vld [vmem:[%s4 + $0xc0] sm:$0xff]
  %v666 = vld [vmem:[%s4 + $0xc8] sm:$0xff]
  %v667 = vld [vmem:[%s4 + $0xd0] sm:$0xff]
  %v668 = vld [vmem:[%s4 + $0xd8] sm:$0xff]
  %v669 = vld [vmem:[%s4 + $0xe0] sm:$0xff]
  %v670 = vld [vmem:[%s4 + $0xe8] sm:$0xff]
  %v671 = vld [vmem:[%s4 + $0xf0] sm:$0xff]
  %v672 = vld [vmem:[%s4 + $0xf8] sm:$0xff]
  %v673 = vld [vmem:[%s4 + $0x100] sm:$0xff]
  %v674 = vld [vmem:[%s4 + $0x108] sm:$0xff]
  %v675 = vld [vmem:[%s4 + $0x110] sm:$0xff]
  %v676 = vld [vmem:[%s4 + $0x118] sm:$0xff]
  %v677 = vld [vmem:[%s4 + $0x120] sm:$0xff]
  %v678 = vld [vmem:[%s4 + $0x128] sm:$0xff]
  %v679 = vld [vmem:[%s4 + $0x130] sm:$0xff]
  %v680 = vld [vmem:[%s4 + $0x138] sm:$0xff]
  %v681 = vld [vmem:[%s4 + $0x140] sm:$0xff]
  %v682 = vld [vmem:[%s4 + $0x148] sm:$0xff]
  %v683 = vld [vmem:[%s4 + $0x150] sm:$0xff]
  %v684 = vld [vmem:[%s4 + $0x158] sm:$0xff]
  %v685 = vld [vmem:[%s4 + $0x160] sm:$0xff]
  %v686 = vld [vmem:[%s4 + $0x168] sm:$0xff]
  %v687 = vld [vmem:[%s4 + $0x170] sm:$0xff]
  %v688 = vld [vmem:[%s4 + $0x178] sm:$0xff]
  %v689 = vld [vmem:[%s4 + $0x180] sm:$0xff]
  %v690 = vld [vmem:[%s4 + $0x188] sm:$0xff]
  %v691 = vld [vmem:[%s4 + $0x190] sm:$0xff]
  %v692 = vld [vmem:[%s4 + $0x198] sm:$0xff]
  %v693 = vld [vmem:[%s4 + $0x1a0] sm:$0xff]
  %v694 = vld [vmem:[%s4 + $0x1a8] sm:$0xff]
  %v695 = vld [vmem:[%s4 + $0x1b0] sm:$0xff]
  %v696 = vld [vmem:[%s4 + $0x1b8] sm:$0xff]
  %v697 = vld [vmem:[%s4 + $0x1c0] sm:$0xff]
  %v698 = vld [vmem:[%s4 + $0x1c8] sm:$0xff]
  %v699 = vld [vmem:[%s4 + $0x1d0] sm:$0xff]
  %v700 = vld [vmem:[%s4 + $0x1d8] sm:$0xff]
  %v701 = vld [vmem:[%s4 + $0x1e0] sm:$0xff]
  %v702 = vld [vmem:[%s4 + $0x1e8] sm:$0xff]
  %v703 = vld [vmem:[%s4 + $0x1f0] sm:$0xff]
  %v704 = vld [vmem:[%s4 + $0x1f8] sm:$0xff]
  %v705 = vld [vmem:[%s4 + $0x200] sm:$0xff]
  %v706 = vld [vmem:[%s4 + $0x208] sm:$0xff]
  %v707 = vld [vmem:[%s4 + $0x210] sm:$0xff]
  %v708 = vld [vmem:[%s4 + $0x218] sm:$0xff]
  %v709 = vld [vmem:[%s4 + $0x220] sm:$0xff]
  %v710 = vld [vmem:[%s4 + $0x228] sm:$0xff]
  %v711 = vld [vmem:[%s4 + $0x230] sm:$0xff]
  %v712 = vld [vmem:[%s4 + $0x238] sm:$0xff]
  %v713 = vld [vmem:[%s4 + $0x240] sm:$0xff]
  %v714 = vld [vmem:[%s4 + $0x248] sm:$0xff]
  %v715 = vld [vmem:[%s4 + $0x250] sm:$0xff]
  %v716 = vld [vmem:[%s4 + $0x258] sm:$0xff]
  %v717 = vld [vmem:[%s4 + $0x260] sm:$0xff]
  %v718 = vld [vmem:[%s4 + $0x268] sm:$0xff]
  %v719 = vld [vmem:[%s4 + $0x270] sm:$0xff]
  %v720 = vld [vmem:[%s4 + $0x278] sm:$0xff]
  %v721 = vld [vmem:[%s4 + $0x280] sm:$0xff]
  %v722 = vld [vmem:[%s4 + $0x288] sm:$0xff]
  %v723 = vld [vmem:[%s4 + $0x290] sm:$0xff]
  %v724 = vld [vmem:[%s4 + $0x298] sm:$0xff]
  %v725 = vld [vmem:[%s4 + $0x2a0] sm:$0xff]
  %v726 = vld [vmem:[%s4 + $0x2a8] sm:$0xff]
  %v727 = vld [vmem:[%s4 + $0x2b0] sm:$0xff]
  %v728 = vld [vmem:[%s4 + $0x2b8] sm:$0xff]
  %v729 = vld [vmem:[%s4 + $0x2c0] sm:$0xff]
  %v730 = vld [vmem:[%s4 + $0x2c8] sm:$0xff]
  %v731 = vld [vmem:[%s4 + $0x2d0] sm:$0xff]
  %v732 = vld [vmem:[%s4 + $0x2d8] sm:$0xff]
  %v733 = vld [vmem:[%s4 + $0x2e0] sm:$0xff]
  %v734 = vld [vmem:[%s4 + $0x2e8] sm:$0xff]
  %v735 = vld [vmem:[%s4 + $0x2f0] sm:$0xff]
  %v736 = vld [vmem:[%s4 + $0x2f8] sm:$0xff]
  %v737 = vld [vmem:[%s4 + $0x300] sm:$0xff]
  %v738 = vld [vmem:[%s4 + $0x308] sm:$0xff]
  %v739 = vld [vmem:[%s4 + $0x310] sm:$0xff]
  %v740 = vld [vmem:[%s4 + $0x318] sm:$0xff]
  %v741 = vld [vmem:[%s4 + $0x320] sm:$0xff]
  %v742 = vld [vmem:[%s4 + $0x328] sm:$0xff]
  %v743 = vld [vmem:[%s4 + $0x330] sm:$0xff]
  %v744 = vld [vmem:[%s4 + $0x338] sm:$0xff]
  %v745 = vld [vmem:[%s4 + $0x340] sm:$0xff]
  %v746 = vld [vmem:[%s4 + $0x348] sm:$0xff]
  %v747 = vld [vmem:[%s4 + $0x350] sm:$0xff]
  %v748 = vld [vmem:[%s4 + $0x358] sm:$0xff]
  %v749 = vld [vmem:[%s4 + $0x360] sm:$0xff]
  %v750 = vld [vmem:[%s4 + $0x368] sm:$0xff]
  %v751 = vld [vmem:[%s4 + $0x370] sm:$0xff]
  %v752 = vld [vmem:[%s4 + $0x378] sm:$0xff]
  %v753 = vld [vmem:[%s4 + $0x380] sm:$0xff]
  %v754 = vld [vmem:[%s4 + $0x388] sm:$0xff]
  %v755 = vld [vmem:[%s4 + $0x390] sm:$0xff]
  %v756 = vld [vmem:[%s4 + $0x398] sm:$0xff]
  %v757 = vld [vmem:[%s4 + $0x3a0] sm:$0xff]
  %v758 = vld [vmem:[%s4 + $0x3a8] sm:$0xff]
  %v759 = vld [vmem:[%s4 + $0x3b0] sm:$0xff]
  %v760 = vld [vmem:[%s4 + $0x3b8] sm:$0xff]
  %v761 = vld [vmem:[%s4 + $0x3c0] sm:$0xff]
  %v762 = vld [vmem:[%s4 + $0x3c8] sm:$0xff]
  %v763 = vld [vmem:[%s4 + $0x3d0] sm:$0xff]
  %v764 = vld [vmem:[%s4 + $0x3d8] sm:$0xff]
  %v765 = vld [vmem:[%s4 + $0x3e0] sm:$0xff]
  %v766 = vld [vmem:[%s4 + $0x3e8] sm:$0xff]
  %v767 = vld [vmem:[%s4 + $0x3f0] sm:$0xff]
  %v768 = vld [vmem:[%s4 + $0x3f8] sm:$0xff]
  %769 = vmatprep.subr.mxu0 %v642
  %770 = vmatpush1.msra.mxu0 %v641
  %771 = vmatprep.subr.mxu0 %v646
  %772 = vmatpush1.msra.mxu0 %v645
  %773 = vmatprep.subr.mxu0 %v650
  %774 = vmatpush1.msra.mxu0 %v649
  %775 = vmatprep.subr.mxu0 %v654
  %776 = vmatpush1.msra.mxu0 %v653
  %777 = vmatprep.subr.mxu0 %v658
  %778 = vmatpush1.msra.mxu0 %v657
  %779 = vmatprep.subr.mxu0 %v662
  %780 = vmatpush1.msra.mxu0 %v661
  %781 = vmatprep.subr.mxu0 %v666
  %782 = vmatpush1.msra.mxu0 %v665
  %783 = vmatprep.subr.mxu0 %v670
  %784 = vmatpush1.msra.mxu0 %v669
  %785 = vmatprep.subr.mxu0 %v674
  %786 = vmatpush1.msra.mxu0 %v673
  %787 = vmatprep.subr.mxu0 %v678
  %788 = vmatpush1.msra.mxu0 %v677
  %789 = vmatprep.subr.mxu0 %v682
  %790 = vmatpush1.msra.mxu0 %v681
  %791 = vmatprep.subr.mxu0 %v686
  %792 = vmatpush1.msra.mxu0 %v685
  %793 = vmatprep.subr.mxu0 %v690
  %794 = vmatpush1.msra.mxu0 %v689
  %795 = vmatprep.subr.mxu0 %v694
  %796 = vmatpush1.msra.mxu0 %v693
  %797 = vmatprep.subr.mxu0 %v698
  %798 = vmatpush1.msra.mxu0 %v697
  %799 = vmatprep.subr.mxu0 %v702
  %800 = vmatpush1.msra.mxu0 %v701
  %801 = vmatprep.subr.mxu0 %v706
  %802 = vmatpush1.msra.mxu0 %v705
  %803 = vmatprep.subr.mxu0 %v710
  %804 = vmatpush1.msra.mxu0 %v709
  %805 = vmatprep.subr.mxu0 %v714
  %806 = vmatpush1.msra.mxu0 %v713
  %807 = vmatprep.subr.mxu0 %v718
  %808 = vmatpush1.msra.mxu0 %v717
  %809 = vmatprep.subr.mxu0 %v722
  %810 = vmatpush1.msra.mxu0 %v721
  %811 = vmatprep.subr.mxu0 %v726
  %812 = vmatpush1.msra.mxu0 %v725
  %813 = vmatprep.subr.mxu0 %v730
  %814 = vmatpush1.msra.mxu0 %v729
  %815 = vmatprep.subr.mxu0 %v734
  %816 = vmatpush1.msra.mxu0 %v733
  %817 = vmatprep.subr.mxu0 %v738
  %818 = vmatpush1.msra.mxu0 %v737
  %819 = vmatprep.subr.mxu0 %v742
  %820 = vmatpush1.msra.mxu0 %v741
  %821 = vmatprep.subr.mxu0 %v746
  %822 = vmatpush1.msra.mxu0 %v745
  %823 = vmatprep.subr.mxu0 %v750
  %824 = vmatpush1.msra.mxu0 %v749
  %825 = vmatprep.subr.mxu0 %v754
  %826 = vmatpush1.msra.mxu0 %v753
  %827 = vmatprep.subr.mxu0 %v758
  %828 = vmatpush1.msra.mxu0 %v757
  %829 = vmatprep.subr.mxu0 %v762
  %830 = vmatpush1.msra.mxu0 %v761
  %831 = vmatprep.subr.mxu0 %v766
  %832 = vmatpush1.msra.mxu0 %v765
  %833 = vmatprep.mubr.f32.mxu0 %v403
  %834 = vmatmul.mubr.f32.gmra.mrb[0].mxu0 %v640
  %v835 = vpop.f32.mrb[0].mxu0
  %v836 = vadd.f32 %v382, %v835
  %v837 = vpop.f32.mrb[0].mxu0
  %v838 = vadd.f32 %v386, %v837
  %839 = vdwg.mxu0
  %840 = vmatprep.subr.mxu0 %v644
  %841 = vmatpush1.msra.mxu0 %v643
  %842 = vmatprep.subr.mxu0 %v648
  %843 = vmatpush1.msra.mxu0 %v647
  %844 = vmatprep.subr.mxu0 %v652
  %845 = vmatpush1.msra.mxu0 %v651
  %846 = vmatprep.subr.mxu0 %v656
  %847 = vmatpush1.msra.mxu0 %v655
  %848 = vmatprep.subr.mxu0 %v660
  %849 = vmatpush1.msra.mxu0 %v659
  %850 = vmatprep.subr.mxu0 %v664
  %851 = vmatpush1.msra.mxu0 %v663
  %852 = vmatprep.subr.mxu0 %v668
  %853 = vmatpush1.msra.mxu0 %v667
  %854 = vmatprep.subr.mxu0 %v672
  %855 = vmatpush1.msra.mxu0 %v671
  %856 = vmatprep.subr.mxu0 %v676
  %857 = vmatpush1.msra.mxu0 %v675
  %858 = vmatprep.subr.mxu0 %v680
  %859 = vmatpush1.msra.mxu0 %v679
  %860 = vmatprep.subr.mxu0 %v684
  %861 = vmatpush1.msra.mxu0 %v683
  %862 = vmatprep.subr.mxu0 %v688
  %863 = vmatpush1.msra.mxu0 %v687
  %864 = vmatprep.subr.mxu0 %v692
  %865 = vmatpush1.msra.mxu0 %v691
  %866 = vmatprep.subr.mxu0 %v696
  %867 = vmatpush1.msra.mxu0 %v695
  %868 = vmatprep.subr.mxu0 %v700
  %869 = vmatpush1.msra.mxu0 %v699
  %870 = vmatprep.subr.mxu0 %v704
  %871 = vmatpush1.msra.mxu0 %v703
  %872 = vmatprep.subr.mxu0 %v708
  %873 = vmatpush1.msra.mxu0 %v707
  %874 = vmatprep.subr.mxu0 %v712
  %875 = vmatpush1.msra.mxu0 %v711
  %876 = vmatprep.subr.mxu0 %v716
  %877 = vmatpush1.msra.mxu0 %v715
  %878 = vmatprep.subr.mxu0 %v720
  %879 = vmatpush1.msra.mxu0 %v719
  %880 = vmatprep.subr.mxu0 %v724
  %881 = vmatpush1.msra.mxu0 %v723
  %882 = vmatprep.subr.mxu0 %v728
  %883 = vmatpush1.msra.mxu0 %v727
  %884 = vmatprep.subr.mxu0 %v732
  %885 = vmatpush1.msra.mxu0 %v731
  %886 = vmatprep.subr.mxu0 %v736
  %887 = vmatpush1.msra.mxu0 %v735
  %888 = vmatprep.subr.mxu0 %v740
  %889 = vmatpush1.msra.mxu0 %v739
  %890 = vmatprep.subr.mxu0 %v744
  %891 = vmatpush1.msra.mxu0 %v743
  %892 = vmatprep.subr.mxu0 %v748
  %893 = vmatpush1.msra.mxu0 %v747
  %894 = vmatprep.subr.mxu0 %v752
  %895 = vmatpush1.msra.mxu0 %v751
  %896 = vmatprep.subr.mxu0 %v756
  %897 = vmatpush1.msra.mxu0 %v755
  %898 = vmatprep.subr.mxu0 %v760
  %899 = vmatpush1.msra.mxu0 %v759
  %900 = vmatprep.subr.mxu0 %v764
  %901 = vmatpush1.msra.mxu0 %v763
  %902 = vmatprep.subr.mxu0 %v768
  %903 = vmatpush1.msra.mxu0 %v767
  %904 = vmatprep.mubr.f32.mxu0 %v403
  %905 = vmatmul.mubr.f32.gmra.mrb[0].mxu0 %v640
  %v906 = vpop.f32.mrb[0].mxu0
  %v907 = vadd.f32 %v390, %v906
  %v908 = vpop.f32.mrb[0].mxu0
  %v909 = vadd.f32 %v394, %v908
  %910 = vdwg.mxu0
  %v911 = vmul.f32 %v836, 0.5
  %v912 = vtanh.pop %v911
  %v913 = vmul.f32 %v912, 0.5
  %v914 = vadd.f32 %v913, 0.5
  %v915 = vmul.f32 %v838, 0.5
  %v916 = vtanh.pop %v915
  %v917 = vmul.f32 %v916, 0.5
  %v918 = vadd.f32 %v917, 0.5
  %v919 = vtanh.pop %v907
  %v920 = vmul.f32 %v909, 0.5
  %v921 = vtanh.pop %v920
  %v922 = vmul.f32 %v921, 0.5
  %v923 = vadd.f32 %v922, 0.5
  %v924 = vmul.f32 %v918, %v405
  %v925 = vmul.f32 %v914, %v919
  %v926 = vadd.f32 %v924, %v925
  %v927 = vtanh.pop %v926
  %v928 = vmul.f32 %v923, %v927
  %s929 = smul.u32 1, 4
  %s930 = smul.addr %s929, 8
  %s931 = scalar_lea.vmem [#allocation2], %s930
  %v932 = vld [vmem:[%s931] sm:$0xff]
  %v933 = vld [vmem:[%s931 + $0x8] sm:$0xff]
  %v934 = vld [vmem:[%s931 + $0x10] sm:$0xff]
  %v935 = vld [vmem:[%s931 + $0x18] sm:$0xff]
  %936 = vmatprep.subr.mxu0 %v414
  %937 = vmatpush1.msra.mxu0 %v413
  %938 = vmatprep.subr.mxu0 %v418
  %939 = vmatpush1.msra.mxu0 %v417
  %940 = vmatprep.subr.mxu0 %v422
  %941 = vmatpush1.msra.mxu0 %v421
  %942 = vmatprep.subr.mxu0 %v426
  %943 = vmatpush1.msra.mxu0 %v425
  %944 = vmatprep.subr.mxu0 %v430
  %945 = vmatpush1.msra.mxu0 %v429
  %946 = vmatprep.subr.mxu0 %v434
  %947 = vmatpush1.msra.mxu0 %v433
  %948 = vmatprep.subr.mxu0 %v438
  %949 = vmatpush1.msra.mxu0 %v437
  %950 = vmatprep.subr.mxu0 %v442
  %951 = vmatpush1.msra.mxu0 %v441
  %952 = vmatprep.subr.mxu0 %v446
  %953 = vmatpush1.msra.mxu0 %v445
  %954 = vmatprep.subr.mxu0 %v450
  %955 = vmatpush1.msra.mxu0 %v449
  %956 = vmatprep.subr.mxu0 %v454
  %957 = vmatpush1.msra.mxu0 %v453
  %958 = vmatprep.subr.mxu0 %v458
  %959 = vmatpush1.msra.mxu0 %v457
  %960 = vmatprep.subr.mxu0 %v462
  %961 = vmatpush1.msra.mxu0 %v461
  %962 = vmatprep.subr.mxu0 %v466
  %963 = vmatpush1.msra.mxu0 %v465
  %964 = vmatprep.subr.mxu0 %v470
  %965 = vmatpush1.msra.mxu0 %v469
  %966 = vmatprep.subr.mxu0 %v474
  %967 = vmatpush1.msra.mxu0 %v473
  %968 = vmatprep.subr.mxu0 0.0
  %969 = vmatpush1.msra.mxu0 0.0
  %970 = vmatprep.subr.mxu0 0.0
  %971 = vmatpush1.msra.mxu0 0.0
  %972 = vmatprep.subr.mxu0 0.0
  %973 = vmatpush1.msra.mxu0 0.0
  %974 = vmatprep.subr.mxu0 0.0
  %975 = vmatpush1.msra.mxu0 0.0
  %976 = vmatprep.subr.mxu0 0.0
  %977 = vmatpush1.msra.mxu0 0.0
  %978 = vmatprep.subr.mxu0 0.0
  %979 = vmatpush1.msra.mxu0 0.0
  %980 = vmatprep.subr.mxu0 0.0
  %981 = vmatpush1.msra.mxu0 0.0
  %982 = vmatprep.subr.mxu0 0.0
  %983 = vmatpush1.msra.mxu0 0.0
  %984 = vmatprep.subr.mxu0 0.0
  %985 = vmatpush1.msra.mxu0 0.0
  %986 = vmatprep.subr.mxu0 0.0
  %987 = vmatpush1.msra.mxu0 0.0
  %988 = vmatprep.subr.mxu0 0.0
  %989 = vmatpush1.msra.mxu0 0.0
  %990 = vmatprep.subr.mxu0 0.0
  %991 = vmatpush1.msra.mxu0 0.0
  %992 = vmatprep.subr.mxu0 0.0
  %993 = vmatpush1.msra.mxu0 0.0
  %994 = vmatprep.subr.mxu0 0.0
  %995 = vmatpush1.msra.mxu0 0.0
  %996 = vmatprep.subr.mxu0 0.0
  %997 = vmatpush1.msra.mxu0 0.0
  %998 = vmatprep.subr.mxu0 0.0
  %999 = vmatpush1.msra.mxu0 0.0
  %1000 = vmatprep.mubr.f32.mxu0 0.0
  %1001 = vmatmul.mubr.f32.gmra.mrb[0].mxu0 %v640
  %v1002 = vpop.f32.mrb[0].mxu0
  %v1003 = vadd.f32 0.0, %v1002
  %v1004 = vpop.f32.mrb[0].mxu0
  %v1005 = vadd.f32 0.0, %v1004
  %1006 = vdwg.mxu0
  %1007 = vmatprep.subr.mxu0 %v416
  %1008 = vmatpush1.msra.mxu0 %v415
  %1009 = vmatprep.subr.mxu0 %v420
  %1010 = vmatpush1.msra.mxu0 %v419
  %1011 = vmatprep.subr.mxu0 %v424
  %1012 = vmatpush1.msra.mxu0 %v423
  %1013 = vmatprep.subr.mxu0 %v428
  %1014 = vmatpush1.msra.mxu0 %v427
  %1015 = vmatprep.subr.mxu0 %v432
  %1016 = vmatpush1.msra.mxu0 %v431
  %1017 = vmatprep.subr.mxu0 %v436
  %1018 = vmatpush1.msra.mxu0 %v435
  %1019 = vmatprep.subr.mxu0 %v440
  %1020 = vmatpush1.msra.mxu0 %v439
  %1021 = vmatprep.subr.mxu0 %v444
  %1022 = vmatpush1.msra.mxu0 %v443
  %1023 = vmatprep.subr.mxu0 %v448
  %1024 = vmatpush1.msra.mxu0 %v447
  %1025 = vmatprep.subr.mxu0 %v452
  %1026 = vmatpush1.msra.mxu0 %v451
  %1027 = vmatprep.subr.mxu0 %v456
  %1028 = vmatpush1.msra.mxu0 %v455
  %1029 = vmatprep.subr.mxu0 %v460
  %1030 = vmatpush1.msra.mxu0 %v459
  %1031 = vmatprep.subr.mxu0 %v464
  %1032 = vmatpush1.msra.mxu0 %v463
  %1033 = vmatprep.subr.mxu0 %v468
  %1034 = vmatpush1.msra.mxu0 %v467
  %1035 = vmatprep.subr.mxu0 %v472
  %1036 = vmatpush1.msra.mxu0 %v471
  %1037 = vmatprep.subr.mxu0 %v476
  %1038 = vmatpush1.msra.mxu0 %v475
  %1039 = vmatprep.subr.mxu0 0.0
  %1040 = vmatpush1.msra.mxu0 0.0
  %1041 = vmatprep.subr.mxu0 0.0
  %1042 = vmatpush1.msra.mxu0 0.0
  %1043 = vmatprep.subr.mxu0 0.0
  %1044 = vmatpush1.msra.mxu0 0.0
  %1045 = vmatprep.subr.mxu0 0.0
  %1046 = vmatpush1.msra.mxu0 0.0
  %1047 = vmatprep.subr.mxu0 0.0
  %1048 = vmatpush1.msra.mxu0 0.0
  %1049 = vmatprep.subr.mxu0 0.0
  %1050 = vmatpush1.msra.mxu0 0.0
  %1051 = vmatprep.subr.mxu0 0.0
  %1052 = vmatpush1.msra.mxu0 0.0
  %1053 = vmatprep.subr.mxu0 0.0
  %1054 = vmatpush1.msra.mxu0 0.0
  %1055 = vmatprep.subr.mxu0 0.0
  %1056 = vmatpush1.msra.mxu0 0.0
  %1057 = vmatprep.subr.mxu0 0.0
  %1058 = vmatpush1.msra.mxu0 0.0
  %1059 = vmatprep.subr.mxu0 0.0
  %1060 = vmatpush1.msra.mxu0 0.0
  %1061 = vmatprep.subr.mxu0 0.0
  %1062 = vmatpush1.msra.mxu0 0.0
  %1063 = vmatprep.subr.mxu0 0.0
  %1064 = vmatpush1.msra.mxu0 0.0
  %1065 = vmatprep.subr.mxu0 0.0
  %1066 = vmatpush1.msra.mxu0 0.0
  %1067 = vmatprep.subr.mxu0 0.0
  %1068 = vmatpush1.msra.mxu0 0.0
  %1069 = vmatprep.subr.mxu0 0.0
  %1070 = vmatpush1.msra.mxu0 0.0
  %1071 = vmatprep.mubr.f32.mxu0 0.0
  %1072 = vmatmul.mubr.f32.gmra.mrb[0].mxu0 %v640
  %v1073 = vpop.f32.mrb[0].mxu0
  %v1074 = vadd.f32 0.0, %v1073
  %v1075 = vpop.f32.mrb[0].mxu0
  %v1076 = vadd.f32 0.0, %v1075
  %1077 = vdwg.mxu0
  %v1078 = vadd.f32 %v932, %v1003
  %v1079 = vadd.f32 %v933, %v1005
  %v1080 = vadd.f32 %v934, %v1074
  %v1081 = vadd.f32 %v935, %v1076
  %v1082 = vmul.f32 %v1078, 0.5
  %v1083 = vtanh.pop %v1082
  %v1084 = vmul.f32 %v1083, 0.5
  %v1085 = vadd.f32 %v1084, 0.5
  %v1086 = vmul.f32 %v1079, 0.5
  %v1087 = vtanh.pop %v1086
  %v1088 = vmul.f32 %v1087, 0.5
  %v1089 = vadd.f32 %v1088, 0.5
  %v1090 = vtanh.pop %v1080
  %v1091 = vmul.f32 %v1081, 0.5
  %v1092 = vtanh.pop %v1091
  %v1093 = vmul.f32 %v1092, 0.5
  %v1094 = vadd.f32 %v1093, 0.5
  %v1095 = vmul.f32 %v1089, %v638
  %v1096 = vmul.f32 %v1085, %v1090
  %v1097 = vadd.f32 %v1095, %v1096
  %v1098 = vtanh.pop %v1097
  %v1099 = vmul.f32 %v1094, %v1098
  %1100 = vmatprep.subr.mxu0 %v642
  %1101 = vmatpush1.msra.mxu0 %v641
  %1102 = vmatprep.subr.mxu0 %v646
  %1103 = vmatpush1.msra.mxu0 %v645
  %1104 = vmatprep.subr.mxu0 %v650
  %1105 = vmatpush1.msra.mxu0 %v649
  %1106 = vmatprep.subr.mxu0 %v654
  %1107 = vmatpush1.msra.mxu0 %v653
  %1108 = vmatprep.subr.mxu0 %v658
  %1109 = vmatpush1.msra.mxu0 %v657
  %1110 = vmatprep.subr.mxu0 %v662
  %1111 = vmatpush1.msra.mxu0 %v661
  %1112 = vmatprep.subr.mxu0 %v666
  %1113 = vmatpush1.msra.mxu0 %v665
  %1114 = vmatprep.subr.mxu0 %v670
  %1115 = vmatpush1.msra.mxu0 %v669
  %1116 = vmatprep.subr.mxu0 %v674
  %1117 = vmatpush1.msra.mxu0 %v673
  %1118 = vmatprep.subr.mxu0 %v678
  %1119 = vmatpush1.msra.mxu0 %v677
  %1120 = vmatprep.subr.mxu0 %v682
  %1121 = vmatpush1.msra.mxu0 %v681
  %1122 = vmatprep.subr.mxu0 %v686
  %1123 = vmatpush1.msra.mxu0 %v685
  %1124 = vmatprep.subr.mxu0 %v690
  %1125 = vmatpush1.msra.mxu0 %v689
  %1126 = vmatprep.subr.mxu0 %v694
  %1127 = vmatpush1.msra.mxu0 %v693
  %1128 = vmatprep.subr.mxu0 %v698
  %1129 = vmatpush1.msra.mxu0 %v697
  %1130 = vmatprep.subr.mxu0 %v702
  %1131 = vmatpush1.msra.mxu0 %v701
  %1132 = vmatprep.subr.mxu0 %v706
  %1133 = vmatpush1.msra.mxu0 %v705
  %1134 = vmatprep.subr.mxu0 %v710
  %1135 = vmatpush1.msra.mxu0 %v709
  %1136 = vmatprep.subr.mxu0 %v714
  %1137 = vmatpush1.msra.mxu0 %v713
  %1138 = vmatprep.subr.mxu0 %v718
  %1139 = vmatpush1.msra.mxu0 %v717
  %1140 = vmatprep.subr.mxu0 %v722
  %1141 = vmatpush1.msra.mxu0 %v721
  %1142 = vmatprep.subr.mxu0 %v726
  %1143 = vmatpush1.msra.mxu0 %v725
  %1144 = vmatprep.subr.mxu0 %v730
  %1145 = vmatpush1.msra.mxu0 %v729
  %1146 = vmatprep.subr.mxu0 %v734
  %1147 = vmatpush1.msra.mxu0 %v733
  %1148 = vmatprep.subr.mxu0 %v738
  %1149 = vmatpush1.msra.mxu0 %v737
  %1150 = vmatprep.subr.mxu0 %v742
  %1151 = vmatpush1.msra.mxu0 %v741
  %1152 = vmatprep.subr.mxu0 %v746
  %1153 = vmatpush1.msra.mxu0 %v745
  %1154 = vmatprep.subr.mxu0 %v750
  %1155 = vmatpush1.msra.mxu0 %v749
  %1156 = vmatprep.subr.mxu0 %v754
  %1157 = vmatpush1.msra.mxu0 %v753
  %1158 = vmatprep.subr.mxu0 %v758
  %1159 = vmatpush1.msra.mxu0 %v757
  %1160 = vmatprep.subr.mxu0 %v762
  %1161 = vmatpush1.msra.mxu0 %v761
  %1162 = vmatprep.subr.mxu0 %v766
  %1163 = vmatpush1.msra.mxu0 %v765
  %1164 = vmatprep.mubr.f32.mxu0 %v928
  %1165 = vmatmul.mubr.f32.gmra.mrb[0].mxu0 %v1099
  %v1166 = vpop.f32.mrb[0].mxu0
  %v1167 = vadd.f32 %v382, %v1166
  %v1168 = vpop.f32.mrb[0].mxu0
  %v1169 = vadd.f32 %v386, %v1168
  %1170 = vdwg.mxu0
  %1171 = vmatprep.subr.mxu0 %v644
  %1172 = vmatpush1.msra.mxu0 %v643
  %1173 = vmatprep.subr.mxu0 %v648
  %1174 = vmatpush1.msra.mxu0 %v647
  %1175 = vmatprep.subr.mxu0 %v652
  %1176 = vmatpush1.msra.mxu0 %v651
  %1177 = vmatprep.subr.mxu0 %v656
  %1178 = vmatpush1.msra.mxu0 %v655
  %1179 = vmatprep.subr.mxu0 %v660
  %1180 = vmatpush1.msra.mxu0 %v659
  %1181 = vmatprep.subr.mxu0 %v664
  %1182 = vmatpush1.msra.mxu0 %v663
  %1183 = vmatprep.subr.mxu0 %v668
  %1184 = vmatpush1.msra.mxu0 %v667
  %1185 = vmatprep.subr.mxu0 %v672
  %1186 = vmatpush1.msra.mxu0 %v671
  %1187 = vmatprep.subr.mxu0 %v676
  %1188 = vmatpush1.msra.mxu0 %v675
  %1189 = vmatprep.subr.mxu0 %v680
  %1190 = vmatpush1.msra.mxu0 %v679
  %1191 = vmatprep.subr.mxu0 %v684
  %1192 = vmatpush1.msra.mxu0 %v683
  %1193 = vmatprep.subr.mxu0 %v688
  %1194 = vmatpush1.msra.mxu0 %v687
  %1195 = vmatprep.subr.mxu0 %v692
  %1196 = vmatpush1.msra.mxu0 %v691
  %1197 = vmatprep.subr.mxu0 %v696
  %1198 = vmatpush1.msra.mxu0 %v695
  %1199 = vmatprep.subr.mxu0 %v700
  %1200 = vmatpush1.msra.mxu0 %v699
  %1201 = vmatprep.subr.mxu0 %v704
  %1202 = vmatpush1.msra.mxu0 %v703
  %1203 = vmatprep.subr.mxu0 %v708
  %1204 = vmatpush1.msra.mxu0 %v707
  %1205 = vmatprep.subr.mxu0 %v712
  %1206 = vmatpush1.msra.mxu0 %v711
  %1207 = vmatprep.subr.mxu0 %v716
  %1208 = vmatpush1.msra.mxu0 %v715
  %1209 = vmatprep.subr.mxu0 %v720
  %1210 = vmatpush1.msra.mxu0 %v719
  %1211 = vmatprep.subr.mxu0 %v724
  %1212 = vmatpush1.msra.mxu0 %v723
  %1213 = vmatprep.subr.mxu0 %v728
  %1214 = vmatpush1.msra.mxu0 %v727
  %1215 = vmatprep.subr.mxu0 %v732
  %1216 = vmatpush1.msra.mxu0 %v731
  %1217 = vmatprep.subr.mxu0 %v736
  %1218 = vmatpush1.msra.mxu0 %v735
  %1219 = vmatprep.subr.mxu0 %v740
  %1220 = vmatpush1.msra.mxu0 %v739
  %1221 = vmatprep.subr.mxu0 %v744
  %1222 = vmatpush1.msra.mxu0 %v743
  %1223 = vmatprep.subr.mxu0 %v748
  %1224 = vmatpush1.msra.mxu0 %v747
  %1225 = vmatprep.subr.mxu0 %v752
  %1226 = vmatpush1.msra.mxu0 %v751
  %1227 = vmatprep.subr.mxu0 %v756
  %1228 = vmatpush1.msra.mxu0 %v755
  %1229 = vmatprep.subr.mxu0 %v760
  %1230 = vmatpush1.msra.mxu0 %v759
  %1231 = vmatprep.subr.mxu0 %v764
  %1232 = vmatpush1.msra.mxu0 %v763
  %1233 = vmatprep.subr.mxu0 %v768
  %1234 = vmatpush1.msra.mxu0 %v767
  %1235 = vmatprep.mubr.f32.mxu0 %v928
  %1236 = vmatmul.mubr.f32.gmra.mrb[0].mxu0 %v1099
  %v1237 = vpop.f32.mrb[0].mxu0
  %v1238 = vadd.f32 %v390, %v1237
  %v1239 = vpop.f32.mrb[0].mxu0
  %v1240 = vadd.f32 %v394, %v1239
  %1241 = vdwg.mxu0
  %v1242 = vmul.f32 %v1167, 0.5
  %v1243 = vtanh.pop %v1242
  %v1244 = vmul.f32 %v1243, 0.5
  %v1245 = vadd.f32 %v1244, 0.5
  %v1246 = vmul.f32 %v1169, 0.5
  %v1247 = vtanh.pop %v1246
  %v1248 = vmul.f32 %v1247, 0.5
  %v1249 = vadd.f32 %v1248, 0.5
  %v1250 = vtanh.pop %v1238
  %v1251 = vmul.f32 %v1240, 0.5
  %v1252 = vtanh.pop %v1251
  %v1253 = vmul.f32 %v1252, 0.5
  %v1254 = vadd.f32 %v1253, 0.5
  %v1255 = vmul.f32 %v1249, %v926
  %v1256 = vmul.f32 %v1245, %v1250
  %v1257 = vadd.f32 %v1255, %v1256
  %v1258 = vtanh.pop %v1257
  %v1259 = vmul.f32 %v1254, %v1258
  %s1260 = smul.u32 2, 4
  %s1261 = smul.addr %s1260, 8
  %s1262 = scalar_lea.vmem [#allocation2], %s1261
  %v1263 = vld [vmem:[%s1262] sm:$0xff]
  %v1264 = vld [vmem:[%s1262 + $0x8] sm:$0xff]
  %v1265 = vld [vmem:[%s1262 + $0x10] sm:$0xff]
  %v1266 = vld [vmem:[%s1262 + $0x18] sm:$0xff]
  %1267 = vmatprep.subr.mxu0 %v414
  %1268 = vmatpush1.msra.mxu0 %v413
  %1269 = vmatprep.subr.mxu0 %v418
  %1270 = vmatpush1.msra.mxu0 %v417
  %1271 = vmatprep.subr.mxu0 %v422
  %1272 = vmatpush1.msra.mxu0 %v421
  %1273 = vmatprep.subr.mxu0 %v426
  %1274 = vmatpush1.msra.mxu0 %v425
  %1275 = vmatprep.subr.mxu0 %v430
  %1276 = vmatpush1.msra.mxu0 %v429
  %1277 = vmatprep.subr.mxu0 %v434
  %1278 = vmatpush1.msra.mxu0 %v433
  %1279 = vmatprep.subr.mxu0 %v438
  %1280 = vmatpush1.msra.mxu0 %v437
  %1281 = vmatprep.subr.mxu0 %v442
  %1282 = vmatpush1.msra.mxu0 %v441
  %1283 = vmatprep.subr.mxu0 %v446
  %1284 = vmatpush1.msra.mxu0 %v445
  %1285 = vmatprep.subr.mxu0 %v450
  %1286 = vmatpush1.msra.mxu0 %v449
  %1287 = vmatprep.subr.mxu0 %v454
  %1288 = vmatpush1.msra.mxu0 %v453
  %1289 = vmatprep.subr.mxu0 %v458
  %1290 = vmatpush1.msra.mxu0 %v457
  %1291 = vmatprep.subr.mxu0 %v462
  %1292 = vmatpush1.msra.mxu0 %v461
  %1293 = vmatprep.subr.mxu0 %v466
  %1294 = vmatpush1.msra.mxu0 %v465
  %1295 = vmatprep.subr.mxu0 %v470
  %1296 = vmatpush1.msra.mxu0 %v469
  %1297 = vmatprep.subr.mxu0 %v474
  %1298 = vmatpush1.msra.mxu0 %v473
  %1299 = vmatprep.subr.mxu0 0.0
  %1300 = vmatpush1.msra.mxu0 0.0
  %1301 = vmatprep.subr.mxu0 0.0
  %1302 = vmatpush1.msra.mxu0 0.0
  %1303 = vmatprep.subr.mxu0 0.0
  %1304 = vmatpush1.msra.mxu0 0.0
  %1305 = vmatprep.subr.mxu0 0.0
  %1306 = vmatpush1.msra.mxu0 0.0
  %1307 = vmatprep.subr.mxu0 0.0
  %1308 = vmatpush1.msra.mxu0 0.0
  %1309 = vmatprep.subr.mxu0 0.0
  %1310 = vmatpush1.msra.mxu0 0.0
  %1311 = vmatprep.subr.mxu0 0.0
  %1312 = vmatpush1.msra.mxu0 0.0
  %1313 = vmatprep.subr.mxu0 0.0
  %1314 = vmatpush1.msra.mxu0 0.0
  %1315 = vmatprep.subr.mxu0 0.0
  %1316 = vmatpush1.msra.mxu0 0.0
  %1317 = vmatprep.subr.mxu0 0.0
  %1318 = vmatpush1.msra.mxu0 0.0
  %1319 = vmatprep.subr.mxu0 0.0
  %1320 = vmatpush1.msra.mxu0 0.0
  %1321 = vmatprep.subr.mxu0 0.0
  %1322 = vmatpush1.msra.mxu0 0.0
  %1323 = vmatprep.subr.mxu0 0.0
  %1324 = vmatpush1.msra.mxu0 0.0
  %1325 = vmatprep.subr.mxu0 0.0
  %1326 = vmatpush1.msra.mxu0 0.0
  %1327 = vmatprep.subr.mxu0 0.0
  %1328 = vmatpush1.msra.mxu0 0.0
  %1329 = vmatprep.subr.mxu0 0.0
  %1330 = vmatpush1.msra.mxu0 0.0
  %1331 = vmatprep.mubr.f32.mxu0 0.0
  %1332 = vmatmul.mubr.f32.gmra.mrb[0].mxu0 %v1099
  %v1333 = vpop.f32.mrb[0].mxu0
  %v1334 = vadd.f32 0.0, %v1333
  %v1335 = vpop.f32.mrb[0].mxu0
  %v1336 = vadd.f32 0.0, %v1335
  %1337 = vdwg.mxu0
  %1338 = vmatprep.subr.mxu0 %v416
  %1339 = vmatpush1.msra.mxu0 %v415
  %1340 = vmatprep.subr.mxu0 %v420
  %1341 = vmatpush1.msra.mxu0 %v419
  %1342 = vmatprep.subr.mxu0 %v424
  %1343 = vmatpush1.msra.mxu0 %v423
  %1344 = vmatprep.subr.mxu0 %v428
  %1345 = vmatpush1.msra.mxu0 %v427
  %1346 = vmatprep.subr.mxu0 %v432
  %1347 = vmatpush1.msra.mxu0 %v431
  %1348 = vmatprep.subr.mxu0 %v436
  %1349 = vmatpush1.msra.mxu0 %v435
  %1350 = vmatprep.subr.mxu0 %v440
  %1351 = vmatpush1.msra.mxu0 %v439
  %1352 = vmatprep.subr.mxu0 %v444
  %1353 = vmatpush1.msra.mxu0 %v443
  %1354 = vmatprep.subr.mxu0 %v448
  %1355 = vmatpush1.msra.mxu0 %v447
  %1356 = vmatprep.subr.mxu0 %v452
  %1357 = vmatpush1.msra.mxu0 %v451
  %1358 = vmatprep.subr.mxu0 %v456
  %1359 = vmatpush1.msra.mxu0 %v455
  %1360 = vmatprep.subr.mxu0 %v460
  %1361 = vmatpush1.msra.mxu0 %v459
  %1362 = vmatprep.subr.mxu0 %v464
  %1363 = vmatpush1.msra.mxu0 %v463
  %1364 = vmatprep.subr.mxu0 %v468
  %1365 = vmatpush1.msra.mxu0 %v467
  %1366 = vmatprep.subr.mxu0 %v472
  %1367 = vmatpush1.msra.mxu0 %v471
  %1368 = vmatprep.subr.mxu0 %v476
  %1369 = vmatpush1.msra.mxu0 %v475
  %1370 = vmatprep.subr.mxu0 0.0
  %1371 = vmatpush1.msra.mxu0 0.0
  %1372 = vmatprep.subr.mxu0 0.0
  %1373 = vmatpush1.msra.mxu0 0.0
  %1374 = vmatprep.subr.mxu0 0.0
  %1375 = vmatpush1.msra.mxu0 0.0
  %1376 = vmatprep.subr.mxu0 0.0
  %1377 = vmatpush1.msra.mxu0 0.0
  %1378 = vmatprep.subr.mxu0 0.0
  %1379 = vmatpush1.msra.mxu0 0.0
  %1380 = vmatprep.subr.mxu0 0.0
  %1381 = vmatpush1.msra.mxu0 0.0
  %1382 = vmatprep.subr.mxu0 0.0
  %1383 = vmatpush1.msra.mxu0 0.0
  %1384 = vmatprep.subr.mxu0 0.0
  %1385 = vmatpush1.msra.mxu0 0.0
  %1386 = vmatprep.subr.mxu0 0.0
  %1387 = vmatpush1.msra.mxu0 0.0
  %1388 = vmatprep.subr.mxu0 0.0
  %1389 = vmatpush1.msra.mxu0 0.0
  %1390 = vmatprep.subr.mxu0 0.0
  %1391 = vmatpush1.msra.mxu0 0.0
  %1392 = vmatprep.subr.mxu0 0.0
  %1393 = vmatpush1.msra.mxu0 0.0
  %1394 = vmatprep.subr.mxu0 0.0
  %1395 = vmatpush1.msra.mxu0 0.0
  %1396 = vmatprep.subr.mxu0 0.0
  %1397 = vmatpush1.msra.mxu0 0.0
  %1398 = vmatprep.subr.mxu0 0.0
  %1399 = vmatpush1.msra.mxu0 0.0
  %1400 = vmatprep.subr.mxu0 0.0
  %1401 = vmatpush1.msra.mxu0 0.0
  %1402 = vmatprep.mubr.f32.mxu0 0.0
  %1403 = vmatmul.mubr.f32.gmra.mrb[0].mxu0 %v1099
  %v1404 = vpop.f32.mrb[0].mxu0
  %v1405 = vadd.f32 0.0, %v1404
  %v1406 = vpop.f32.mrb[0].mxu0
  %v1407 = vadd.f32 0.0, %v1406
  %1408 = vdwg.mxu0
  %v1409 = vadd.f32 %v1263, %v1334
  %v1410 = vadd.f32 %v1264, %v1336
  %v1411 = vadd.f32 %v1265, %v1405
  %v1412 = vadd.f32 %v1266, %v1407
  %v1413 = vmul.f32 %v1409, 0.5
  %v1414 = vtanh.pop %v1413
  %v1415 = vmul.f32 %v1414, 0.5
  %v1416 = vadd.f32 %v1415, 0.5
  %v1417 = vmul.f32 %v1410, 0.5
  %v1418 = vtanh.pop %v1417
  %v1419 = vmul.f32 %v1418, 0.5
  %v1420 = vadd.f32 %v1419, 0.5
  %v1421 = vtanh.pop %v1411
  %v1422 = vmul.f32 %v1412, 0.5
  %v1423 = vtanh.pop %v1422
  %v1424 = vmul.f32 %v1423, 0.5
  %v1425 = vadd.f32 %v1424, 0.5
  %v1426 = vmul.f32 %v1420, %v1097
  %v1427 = vmul.f32 %v1416, %v1421
  %v1428 = vadd.f32 %v1426, %v1427
  %v1429 = vtanh.pop %v1428
  %v1430 = vmul.f32 %v1425, %v1429
  %1431 = vmatprep.subr.mxu0 %v642
  %1432 = vmatpush1.msra.mxu0 %v641
  %1433 = vmatprep.subr.mxu0 %v646
  %1434 = vmatpush1.msra.mxu0 %v645
  %1435 = vmatprep.subr.mxu0 %v650
  %1436 = vmatpush1.msra.mxu0 %v649
  %1437 = vmatprep.subr.mxu0 %v654
  %1438 = vmatpush1.msra.mxu0 %v653
  %1439 = vmatprep.subr.mxu0 %v658
  %1440 = vmatpush1.msra.mxu0 %v657
  %1441 = vmatprep.subr.mxu0 %v662
  %1442 = vmatpush1.msra.mxu0 %v661
  %1443 = vmatprep.subr.mxu0 %v666
  %1444 = vmatpush1.msra.mxu0 %v665
  %1445 = vmatprep.subr.mxu0 %v670
  %1446 = vmatpush1.msra.mxu0 %v669
  %1447 = vmatprep.subr.mxu0 %v674
  %1448 = vmatpush1.msra.mxu0 %v673
  %1449 = vmatprep.subr.mxu0 %v678
  %1450 = vmatpush1.msra.mxu0 %v677
  %1451 = vmatprep.subr.mxu0 %v682
  %1452 = vmatpush1.msra.mxu0 %v681
  %1453 = vmatprep.subr.mxu0 %v686
  %1454 = vmatpush1.msra.mxu0 %v685
  %1455 = vmatprep.subr.mxu0 %v690
  %1456 = vmatpush1.msra.mxu0 %v689
  %1457 = vmatprep.subr.mxu0 %v694
  %1458 = vmatpush1.msra.mxu0 %v693
  %1459 = vmatprep.subr.mxu0 %v698
  %1460 = vmatpush1.msra.mxu0 %v697
  %1461 = vmatprep.subr.mxu0 %v702
  %1462 = vmatpush1.msra.mxu0 %v701
  %1463 = vmatprep.subr.mxu0 %v706
  %1464 = vmatpush1.msra.mxu0 %v705
  %1465 = vmatprep.subr.mxu0 %v710
  %1466 = vmatpush1.msra.mxu0 %v709
  %1467 = vmatprep.subr.mxu0 %v714
  %1468 = vmatpush1.msra.mxu0 %v713
  %1469 = vmatprep.subr.mxu0 %v718
  %1470 = vmatpush1.msra.mxu0 %v717
  %1471 = vmatprep.subr.mxu0 %v722
  %1472 = vmatpush1.msra.mxu0 %v721
  %1473 = vmatprep.subr.mxu0 %v726
  %1474 = vmatpush1.msra.mxu0 %v725
  %1475 = vmatprep.subr.mxu0 %v730
  %1476 = vmatpush1.msra.mxu0 %v729
  %1477 = vmatprep.subr.mxu0 %v734
  %1478 = vmatpush1.msra.mxu0 %v733
  %1479 = vmatprep.subr.mxu0 %v738
  %1480 = vmatpush1.msra.mxu0 %v737
  %1481 = vmatprep.subr.mxu0 %v742
  %1482 = vmatpush1.msra.mxu0 %v741
  %1483 = vmatprep.subr.mxu0 %v746
  %1484 = vmatpush1.msra.mxu0 %v745
  %1485 = vmatprep.subr.mxu0 %v750
  %1486 = vmatpush1.msra.mxu0 %v749
  %1487 = vmatprep.subr.mxu0 %v754
  %1488 = vmatpush1.msra.mxu0 %v753
  %1489 = vmatprep.subr.mxu0 %v758
  %1490 = vmatpush1.msra.mxu0 %v757
  %1491 = vmatprep.subr.mxu0 %v762
  %1492 = vmatpush1.msra.mxu0 %v761
  %1493 = vmatprep.subr.mxu0 %v766
  %1494 = vmatpush1.msra.mxu0 %v765
  %1495 = vmatprep.mubr.f32.mxu0 %v1259
  %1496 = vmatmul.mubr.f32.gmra.mrb[0].mxu0 %v1430
  %v1497 = vpop.f32.mrb[0].mxu0
  %v1498 = vadd.f32 %v382, %v1497
  %v1499 = vpop.f32.mrb[0].mxu0
  %v1500 = vadd.f32 %v386, %v1499
  %1501 = vdwg.mxu0
  %1502 = vmatprep.subr.mxu0 %v644
  %1503 = vmatpush1.msra.mxu0 %v643
  %1504 = vmatprep.subr.mxu0 %v648
  %1505 = vmatpush1.msra.mxu0 %v647
  %1506 = vmatprep.subr.mxu0 %v652
  %1507 = vmatpush1.msra.mxu0 %v651
  %1508 = vmatprep.subr.mxu0 %v656
  %1509 = vmatpush1.msra.mxu0 %v655
  %1510 = vmatprep.subr.mxu0 %v660
  %1511 = vmatpush1.msra.mxu0 %v659
  %1512 = vmatprep.subr.mxu0 %v664
  %1513 = vmatpush1.msra.mxu0 %v663
  %1514 = vmatprep.subr.mxu0 %v668
  %1515 = vmatpush1.msra.mxu0 %v667
  %1516 = vmatprep.subr.mxu0 %v672
  %1517 = vmatpush1.msra.mxu0 %v671
  %1518 = vmatprep.subr.mxu0 %v676
  %1519 = vmatpush1.msra.mxu0 %v675
  %1520 = vmatprep.subr.mxu0 %v680
  %1521 = vmatpush1.msra.mxu0 %v679
  %1522 = vmatprep.subr.mxu0 %v684
  %1523 = vmatpush1.msra.mxu0 %v683
  %1524 = vmatprep.subr.mxu0 %v688
  %1525 = vmatpush1.msra.mxu0 %v687
  %1526 = vmatprep.subr.mxu0 %v692
  %1527 = vmatpush1.msra.mxu0 %v691
  %1528 = vmatprep.subr.mxu0 %v696
  %1529 = vmatpush1.msra.mxu0 %v695
  %1530 = vmatprep.subr.mxu0 %v700
  %1531 = vmatpush1.msra.mxu0 %v699
  %1532 = vmatprep.subr.mxu0 %v704
  %1533 = vmatpush1.msra.mxu0 %v703
  %1534 = vmatprep.subr.mxu0 %v708
  %1535 = vmatpush1.msra.mxu0 %v707
  %1536 = vmatprep.subr.mxu0 %v712
  %1537 = vmatpush1.msra.mxu0 %v711
  %1538 = vmatprep.subr.mxu0 %v716
  %1539 = vmatpush1.msra.mxu0 %v715
  %1540 = vmatprep.subr.mxu0 %v720
  %1541 = vmatpush1.msra.mxu0 %v719
  %1542 = vmatprep.subr.mxu0 %v724
  %1543 = vmatpush1.msra.mxu0 %v723
  %1544 = vmatprep.subr.mxu0 %v728
  %1545 = vmatpush1.msra.mxu0 %v727
  %1546 = vmatprep.subr.mxu0 %v732
  %1547 = vmatpush1.msra.mxu0 %v731
  %1548 = vmatprep.subr.mxu0 %v736
  %1549 = vmatpush1.msra.mxu0 %v735
  %1550 = vmatprep.subr.mxu0 %v740
  %1551 = vmatpush1.msra.mxu0 %v739
  %1552 = vmatprep.subr.mxu0 %v744
  %1553 = vmatpush1.msra.mxu0 %v743
  %1554 = vmatprep.subr.mxu0 %v748
  %1555 = vmatpush1.msra.mxu0 %v747
  %1556 = vmatprep.subr.mxu0 %v752
  %1557 = vmatpush1.msra.mxu0 %v751
  %1558 = vmatprep.subr.mxu0 %v756
  %1559 = vmatpush1.msra.mxu0 %v755
  %1560 = vmatprep.subr.mxu0 %v760
  %1561 = vmatpush1.msra.mxu0 %v759
  %1562 = vmatprep.subr.mxu0 %v764
  %1563 = vmatpush1.msra.mxu0 %v763
  %1564 = vmatprep.subr.mxu0 %v768
  %1565 = vmatpush1.msra.mxu0 %v767
  %1566 = vmatprep.mubr.f32.mxu0 %v1259
  %1567 = vmatmul.mubr.f32.gmra.mrb[0].mxu0 %v1430
  %v1568 = vpop.f32.mrb[0].mxu0
  %v1569 = vadd.f32 %v390, %v1568
  %v1570 = vpop.f32.mrb[0].mxu0
  %v1571 = vadd.f32 %v394, %v1570
  %1572 = vdwg.mxu0
  %v1573 = vmul.f32 %v1498, 0.5
  %v1574 = vtanh.pop %v1573
  %v1575 = vmul.f32 %v1574, 0.5
  %v1576 = vadd.f32 %v1575, 0.5
  %v1577 = vmul.f32 %v1500, 0.5
  %v1578 = vtanh.pop %v1577
  %v1579 = vmul.f32 %v1578, 0.5
  %v1580 = vadd.f32 %v1579, 0.5
  %v1581 = vtanh.pop %v1569
  %v1582 = vmul.f32 %v1571, 0.5
  %v1583 = vtanh.pop %v1582
  %v1584 = vmul.f32 %v1583, 0.5
  %v1585 = vadd.f32 %v1584, 0.5
  %v1586 = vmul.f32 %v1580, %v1257
  %v1587 = vmul.f32 %v1576, %v1581
  %v1588 = vadd.f32 %v1586, %v1587
  %v1589 = vtanh.pop %v1588
  %v1590 = vmul.f32 %v1585, %v1589
  %s1591 = smul.u32 3, 4
  %s1592 = smul.addr %s1591, 8
  %s1593 = scalar_lea.vmem [#allocation2], %s1592
  %v1594 = vld [vmem:[%s1593] sm:$0xff]
  %v1595 = vld [vmem:[%s1593 + $0x8] sm:$0xff]
  %v1596 = vld [vmem:[%s1593 + $0x10] sm:$0xff]
  %v1597 = vld [vmem:[%s1593 + $0x18] sm:$0xff]
  %1598 = vmatprep.subr.mxu0 %v414
  %1599 = vmatpush1.msra.mxu0 %v413
  %1600 = vmatprep.subr.mxu0 %v418
  %1601 = vmatpush1.msra.mxu0 %v417
  %1602 = vmatprep.subr.mxu0 %v422
  %1603 = vmatpush1.msra.mxu0 %v421
  %1604 = vmatprep.subr.mxu0 %v426
  %1605 = vmatpush1.msra.mxu0 %v425
  %1606 = vmatprep.subr.mxu0 %v430
  %1607 = vmatpush1.msra.mxu0 %v429
  %1608 = vmatprep.subr.mxu0 %v434
  %1609 = vmatpush1.msra.mxu0 %v433
  %1610 = vmatprep.subr.mxu0 %v438
  %1611 = vmatpush1.msra.mxu0 %v437
  %1612 = vmatprep.subr.mxu0 %v442
  %1613 = vmatpush1.msra.mxu0 %v441
  %1614 = vmatprep.subr.mxu0 %v446
  %1615 = vmatpush1.msra.mxu0 %v445
  %1616 = vmatprep.subr.mxu0 %v450
  %1617 = vmatpush1.msra.mxu0 %v449
  %1618 = vmatprep.subr.mxu0 %v454
  %1619 = vmatpush1.msra.mxu0 %v453
  %1620 = vmatprep.subr.mxu0 %v458
  %1621 = vmatpush1.msra.mxu0 %v457
  %1622 = vmatprep.subr.mxu0 %v462
  %1623 = vmatpush1.msra.mxu0 %v461
  %1624 = vmatprep.subr.mxu0 %v466
  %1625 = vmatpush1.msra.mxu0 %v465
  %1626 = vmatprep.subr.mxu0 %v470
  %1627 = vmatpush1.msra.mxu0 %v469
  %1628 = vmatprep.subr.mxu0 %v474
  %1629 = vmatpush1.msra.mxu0 %v473
  %1630 = vmatprep.subr.mxu0 0.0
  %1631 = vmatpush1.msra.mxu0 0.0
  %1632 = vmatprep.subr.mxu0 0.0
  %1633 = vmatpush1.msra.mxu0 0.0
  %1634 = vmatprep.subr.mxu0 0.0
  %1635 = vmatpush1.msra.mxu0 0.0
  %1636 = vmatprep.subr.mxu0 0.0
  %1637 = vmatpush1.msra.mxu0 0.0
  %1638 = vmatprep.subr.mxu0 0.0
  %1639 = vmatpush1.msra.mxu0 0.0
  %1640 = vmatprep.subr.mxu0 0.0
  %1641 = vmatpush1.msra.mxu0 0.0
  %1642 = vmatprep.subr.mxu0 0.0
  %1643 = vmatpush1.msra.mxu0 0.0
  %1644 = vmatprep.subr.mxu0 0.0
  %1645 = vmatpush1.msra.mxu0 0.0
  %1646 = vmatprep.subr.mxu0 0.0
  %1647 = vmatpush1.msra.mxu0 0.0
  %1648 = vmatprep.subr.mxu0 0.0
  %1649 = vmatpush1.msra.mxu0 0.0
  %1650 = vmatprep.subr.mxu0 0.0
  %1651 = vmatpush1.msra.mxu0 0.0
  %1652 = vmatprep.subr.mxu0 0.0
  %1653 = vmatpush1.msra.mxu0 0.0
  %1654 = vmatprep.subr.mxu0 0.0
  %1655 = vmatpush1.msra.mxu0 0.0
  %1656 = vmatprep.subr.mxu0 0.0
  %1657 = vmatpush1.msra.mxu0 0.0
  %1658 = vmatprep.subr.mxu0 0.0
  %1659 = vmatpush1.msra.mxu0 0.0
  %1660 = vmatprep.subr.mxu0 0.0
  %1661 = vmatpush1.msra.mxu0 0.0
  %1662 = vmatprep.mubr.f32.mxu0 0.0
  %1663 = vmatmul.mubr.f32.gmra.mrb[0].mxu0 %v1430
  %v1664 = vpop.f32.mrb[0].mxu0
  %v1665 = vadd.f32 0.0, %v1664
  %v1666 = vpop.f32.mrb[0].mxu0
  %v1667 = vadd.f32 0.0, %v1666
  %1668 = vdwg.mxu0
  %1669 = vmatprep.subr.mxu0 %v416
  %1670 = vmatpush1.msra.mxu0 %v415
  %1671 = vmatprep.subr.mxu0 %v420
  %1672 = vmatpush1.msra.mxu0 %v419
  %1673 = vmatprep.subr.mxu0 %v424
  %1674 = vmatpush1.msra.mxu0 %v423
  %1675 = vmatprep.subr.mxu0 %v428
  %1676 = vmatpush1.msra.mxu0 %v427
  %1677 = vmatprep.subr.mxu0 %v432
  %1678 = vmatpush1.msra.mxu0 %v431
  %1679 = vmatprep.subr.mxu0 %v436
  %1680 = vmatpush1.msra.mxu0 %v435
  %1681 = vmatprep.subr.mxu0 %v440
  %1682 = vmatpush1.msra.mxu0 %v439
  %1683 = vmatprep.subr.mxu0 %v444
  %1684 = vmatpush1.msra.mxu0 %v443
  %1685 = vmatprep.subr.mxu0 %v448
  %1686 = vmatpush1.msra.mxu0 %v447
  %1687 = vmatprep.subr.mxu0 %v452
  %1688 = vmatpush1.msra.mxu0 %v451
  %1689 = vmatprep.subr.mxu0 %v456
  %1690 = vmatpush1.msra.mxu0 %v455
  %1691 = vmatprep.subr.mxu0 %v460
  %1692 = vmatpush1.msra.mxu0 %v459
  %1693 = vmatprep.subr.mxu0 %v464
  %1694 = vmatpush1.msra.mxu0 %v463
  %1695 = vmatprep.subr.mxu0 %v468
  %1696 = vmatpush1.msra.mxu0 %v467
  %1697 = vmatprep.subr.mxu0 %v472
  %1698 = vmatpush1.msra.mxu0 %v471
  %1699 = vmatprep.subr.mxu0 %v476
  %1700 = vmatpush1.msra.mxu0 %v475
  %1701 = vmatprep.subr.mxu0 0.0
  %1702 = vmatpush1.msra.mxu0 0.0
  %1703 = vmatprep.subr.mxu0 0.0
  %1704 = vmatpush1.msra.mxu0 0.0
  %1705 = vmatprep.subr.mxu0 0.0
  %1706 = vmatpush1.msra.mxu0 0.0
  %1707 = vmatprep.subr.mxu0 0.0
  %1708 = vmatpush1.msra.mxu0 0.0
  %1709 = vmatprep.subr.mxu0 0.0
  %1710 = vmatpush1.msra.mxu0 0.0
  %1711 = vmatprep.subr.mxu0 0.0
  %1712 = vmatpush1.msra.mxu0 0.0
  %1713 = vmatprep.subr.mxu0 0.0
  %1714 = vmatpush1.msra.mxu0 0.0
  %1715 = vmatprep.subr.mxu0 0.0
  %1716 = vmatpush1.msra.mxu0 0.0
  %1717 = vmatprep.subr.mxu0 0.0
  %1718 = vmatpush1.msra.mxu0 0.0
  %1719 = vmatprep.subr.mxu0 0.0
  %1720 = vmatpush1.msra.mxu0 0.0
  %1721 = vmatprep.subr.mxu0 0.0
  %1722 = vmatpush1.msra.mxu0 0.0
  %1723 = vmatprep.subr.mxu0 0.0
  %1724 = vmatpush1.msra.mxu0 0.0
  %1725 = vmatprep.subr.mxu0 0.0
  %1726 = vmatpush1.msra.mxu0 0.0
  %1727 = vmatprep.subr.mxu0 0.0
  %1728 = vmatpush1.msra.mxu0 0.0
  %1729 = vmatprep.subr.mxu0 0.0
  %1730 = vmatpush1.msra.mxu0 0.0
  %1731 = vmatprep.subr.mxu0 0.0
  %1732 = vmatpush1.msra.mxu0 0.0
  %1733 = vmatprep.mubr.f32.mxu0 0.0
  %1734 = vmatmul.mubr.f32.gmra.mrb[0].mxu0 %v1430
  %v1735 = vpop.f32.mrb[0].mxu0
  %v1736 = vadd.f32 0.0, %v1735
  %v1737 = vpop.f32.mrb[0].mxu0
  %v1738 = vadd.f32 0.0, %v1737
  %1739 = vdwg.mxu0
  %v1740 = vadd.f32 %v1594, %v1665
  %v1741 = vadd.f32 %v1595, %v1667
  %v1742 = vadd.f32 %v1596, %v1736
  %v1743 = vadd.f32 %v1597, %v1738
  %v1744 = vmul.f32 %v1740, 0.5
  %v1745 = vtanh.pop %v1744
  %v1746 = vmul.f32 %v1745, 0.5
  %v1747 = vadd.f32 %v1746, 0.5
  %v1748 = vmul.f32 %v1741, 0.5
  %v1749 = vtanh.pop %v1748
  %v1750 = vmul.f32 %v1749, 0.5
  %v1751 = vadd.f32 %v1750, 0.5
  %v1752 = vtanh.pop %v1742
  %v1753 = vmul.f32 %v1743, 0.5
  %v1754 = vtanh.pop %v1753
  %v1755 = vmul.f32 %v1754, 0.5
  %v1756 = vadd.f32 %v1755, 0.5
  %v1757 = vmul.f32 %v1751, %v1428
  %v1758 = vmul.f32 %v1747, %v1752
  %v1759 = vadd.f32 %v1757, %v1758
  %v1760 = vtanh.pop %v1759
  %v1761 = vmul.f32 %v1756, %v1760
  %1762 = vmatprep.subr.mxu0 %v642
  %1763 = vmatpush1.msra.mxu0 %v641
  %1764 = vmatprep.subr.mxu0 %v646
  %1765 = vmatpush1.msra.mxu0 %v645
  %1766 = vmatprep.subr.mxu0 %v650
  %1767 = vmatpush1.msra.mxu0 %v649
  %1768 = vmatprep.subr.mxu0 %v654
  %1769 = vmatpush1.msra.mxu0 %v653
  %1770 = vmatprep.subr.mxu0 %v658
  %1771 = vmatpush1.msra.mxu0 %v657
  %1772 = vmatprep.subr.mxu0 %v662
  %1773 = vmatpush1.msra.mxu0 %v661
  %1774 = vmatprep.subr.mxu0 %v666
  %1775 = vmatpush1.msra.mxu0 %v665
  %1776 = vmatprep.subr.mxu0 %v670
  %1777 = vmatpush1.msra.mxu0 %v669
  %1778 = vmatprep.subr.mxu0 %v674
  %1779 = vmatpush1.msra.mxu0 %v673
  %1780 = vmatprep.subr.mxu0 %v678
  %1781 = vmatpush1.msra.mxu0 %v677
  %1782 = vmatprep.subr.mxu0 %v682
  %1783 = vmatpush1.msra.mxu0 %v681
  %1784 = vmatprep.subr.mxu0 %v686
  %1785 = vmatpush1.msra.mxu0 %v685
  %1786 = vmatprep.subr.mxu0 %v690
  %1787 = vmatpush1.msra.mxu0 %v689
  %1788 = vmatprep.subr.mxu0 %v694
  %1789 = vmatpush1.msra.mxu0 %v693
  %1790 = vmatprep.subr.mxu0 %v698
  %1791 = vmatpush1.msra.mxu0 %v697
  %1792 = vmatprep.subr.mxu0 %v702
  %1793 = vmatpush1.msra.mxu0 %v701
  %1794 = vmatprep.subr.mxu0 %v706
  %1795 = vmatpush1.msra.mxu0 %v705
  %1796 = vmatprep.subr.mxu0 %v710
  %1797 = vmatpush1.msra.mxu0 %v709
  %1798 = vmatprep.subr.mxu0 %v714
  %1799 = vmatpush1.msra.mxu0 %v713
  %1800 = vmatprep.subr.mxu0 %v718
  %1801 = vmatpush1.msra.mxu0 %v717
  %1802 = vmatprep.subr.mxu0 %v722
  %1803 = vmatpush1.msra.mxu0 %v721
  %1804 = vmatprep.subr.mxu0 %v726
  %1805 = vmatpush1.msra.mxu0 %v725
  %1806 = vmatprep.subr.mxu0 %v730
  %1807 = vmatpush1.msra.mxu0 %v729
  %1808 = vmatprep.subr.mxu0 %v734
  %1809 = vmatpush1.msra.mxu0 %v733
  %1810 = vmatprep.subr.mxu0 %v738
  %1811 = vmatpush1.msra.mxu0 %v737
  %1812 = vmatprep.subr.mxu0 %v742
  %1813 = vmatpush1.msra.mxu0 %v741
  %1814 = vmatprep.subr.mxu0 %v746
  %1815 = vmatpush1.msra.mxu0 %v745
  %1816 = vmatprep.subr.mxu0 %v750
  %1817 = vmatpush1.msra.mxu0 %v749
  %1818 = vmatprep.subr.mxu0 %v754
  %1819 = vmatpush1.msra.mxu0 %v753
  %1820 = vmatprep.subr.mxu0 %v758
  %1821 = vmatpush1.msra.mxu0 %v757
  %1822 = vmatprep.subr.mxu0 %v762
  %1823 = vmatpush1.msra.mxu0 %v761
  %1824 = vmatprep.subr.mxu0 %v766
  %1825 = vmatpush1.msra.mxu0 %v765
  %1826 = vmatprep.mubr.f32.mxu0 %v1590
  %1827 = vmatmul.mubr.f32.gmra.mrb[0].mxu0 %v1761
  %v1828 = vpop.f32.mrb[0].mxu0
  %v1829 = vadd.f32 %v382, %v1828
  %v1830 = vpop.f32.mrb[0].mxu0
  %v1831 = vadd.f32 %v386, %v1830
  %1832 = vdwg.mxu0
  %1833 = vmatprep.subr.mxu0 %v644
  %1834 = vmatpush1.msra.mxu0 %v643
  %1835 = vmatprep.subr.mxu0 %v648
  %1836 = vmatpush1.msra.mxu0 %v647
  %1837 = vmatprep.subr.mxu0 %v652
  %1838 = vmatpush1.msra.mxu0 %v651
  %1839 = vmatprep.subr.mxu0 %v656
  %1840 = vmatpush1.msra.mxu0 %v655
  %1841 = vmatprep.subr.mxu0 %v660
  %1842 = vmatpush1.msra.mxu0 %v659
  %1843 = vmatprep.subr.mxu0 %v664
  %1844 = vmatpush1.msra.mxu0 %v663
  %1845 = vmatprep.subr.mxu0 %v668
  %1846 = vmatpush1.msra.mxu0 %v667
  %1847 = vmatprep.subr.mxu0 %v672
  %1848 = vmatpush1.msra.mxu0 %v671
  %1849 = vmatprep.subr.mxu0 %v676
  %1850 = vmatpush1.msra.mxu0 %v675
  %1851 = vmatprep.subr.mxu0 %v680
  %1852 = vmatpush1.msra.mxu0 %v679
  %1853 = vmatprep.subr.mxu0 %v684
  %1854 = vmatpush1.msra.mxu0 %v683
  %1855 = vmatprep.subr.mxu0 %v688
  %1856 = vmatpush1.msra.mxu0 %v687
  %1857 = vmatprep.subr.mxu0 %v692
  %1858 = vmatpush1.msra.mxu0 %v691
  %1859 = vmatprep.subr.mxu0 %v696
  %1860 = vmatpush1.msra.mxu0 %v695
  %1861 = vmatprep.subr.mxu0 %v700
  %1862 = vmatpush1.msra.mxu0 %v699
  %1863 = vmatprep.subr.mxu0 %v704
  %1864 = vmatpush1.msra.mxu0 %v703
  %1865 = vmatprep.subr.mxu0 %v708
  %1866 = vmatpush1.msra.mxu0 %v707
  %1867 = vmatprep.subr.mxu0 %v712
  %1868 = vmatpush1.msra.mxu0 %v711
  %1869 = vmatprep.subr.mxu0 %v716
  %1870 = vmatpush1.msra.mxu0 %v715
  %1871 = vmatprep.subr.mxu0 %v720
  %1872 = vmatpush1.msra.mxu0 %v719
  %1873 = vmatprep.subr.mxu0 %v724
  %1874 = vmatpush1.msra.mxu0 %v723
  %1875 = vmatprep.subr.mxu0 %v728
  %1876 = vmatpush1.msra.mxu0 %v727
  %1877 = vmatprep.subr.mxu0 %v732
  %1878 = vmatpush1.msra.mxu0 %v731
  %1879 = vmatprep.subr.mxu0 %v736
  %1880 = vmatpush1.msra.mxu0 %v735
  %1881 = vmatprep.subr.mxu0 %v740
  %1882 = vmatpush1.msra.mxu0 %v739
  %1883 = vmatprep.subr.mxu0 %v744
  %1884 = vmatpush1.msra.mxu0 %v743
  %1885 = vmatprep.subr.mxu0 %v748
  %1886 = vmatpush1.msra.mxu0 %v747
  %1887 = vmatprep.subr.mxu0 %v752
  %1888 = vmatpush1.msra.mxu0 %v751
  %1889 = vmatprep.subr.mxu0 %v756
  %1890 = vmatpush1.msra.mxu0 %v755
  %1891 = vmatprep.subr.mxu0 %v760
  %1892 = vmatpush1.msra.mxu0 %v759
  %1893 = vmatprep.subr.mxu0 %v764
  %1894 = vmatpush1.msra.mxu0 %v763
  %1895 = vmatprep.subr.mxu0 %v768
  %1896 = vmatpush1.msra.mxu0 %v767
  %1897 = vmatprep.mubr.f32.mxu0 %v1590
  %1898 = vmatmul.mubr.f32.gmra.mrb[0].mxu0 %v1761
  %v1899 = vpop.f32.mrb[0].mxu0
  %v1900 = vadd.f32 %v390, %v1899
  %v1901 = vpop.f32.mrb[0].mxu0
  %v1902 = vadd.f32 %v394, %v1901
  %1903 = vdwg.mxu0
  %v1904 = vmul.f32 %v1829, 0.5
  %v1905 = vtanh.pop %v1904
  %v1906 = vmul.f32 %v1905, 0.5
  %v1907 = vadd.f32 %v1906, 0.5
  %v1908 = vmul.f32 %v1831, 0.5
  %v1909 = vtanh.pop %v1908
  %v1910 = vmul.f32 %v1909, 0.5
  %v1911 = vadd.f32 %v1910, 0.5
  %v1912 = vtanh.pop %v1900
  %v1913 = vmul.f32 %v1902, 0.5
  %v1914 = vtanh.pop %v1913
  %v1915 = vmul.f32 %v1914, 0.5
  %v1916 = vadd.f32 %v1915, 0.5
  %v1917 = vmul.f32 %v1911, %v1588
  %v1918 = vmul.f32 %v1907, %v1912
  %v1919 = vadd.f32 %v1917, %v1918
  %v1920 = vtanh.pop %v1919
  %v1921 = vmul.f32 %v1916, %v1920
  %s1922 = smul.u32 4, 4
  %s1923 = smul.addr %s1922, 8
  %s1924 = scalar_lea.vmem [#allocation2], %s1923
  %v1925 = vld [vmem:[%s1924] sm:$0xff]
  %v1926 = vld [vmem:[%s1924 + $0x8] sm:$0xff]
  %v1927 = vld [vmem:[%s1924 + $0x10] sm:$0xff]
  %v1928 = vld [vmem:[%s1924 + $0x18] sm:$0xff]
  %1929 = vmatprep.subr.mxu0 %v414
  %1930 = vmatpush1.msra.mxu0 %v413
  %1931 = vmatprep.subr.mxu0 %v418
  %1932 = vmatpush1.msra.mxu0 %v417
  %1933 = vmatprep.subr.mxu0 %v422
  %1934 = vmatpush1.msra.mxu0 %v421
  %1935 = vmatprep.subr.mxu0 %v426
  %1936 = vmatpush1.msra.mxu0 %v425
  %1937 = vmatprep.subr.mxu0 %v430
  %1938 = vmatpush1.msra.mxu0 %v429
  %1939 = vmatprep.subr.mxu0 %v434
  %1940 = vmatpush1.msra.mxu0 %v433
  %1941 = vmatprep.subr.mxu0 %v438
  %1942 = vmatpush1.msra.mxu0 %v437
  %1943 = vmatprep.subr.mxu0 %v442
  %1944 = vmatpush1.msra.mxu0 %v441
  %1945 = vmatprep.subr.mxu0 %v446
  %1946 = vmatpush1.msra.mxu0 %v445
  %1947 = vmatprep.subr.mxu0 %v450
  %1948 = vmatpush1.msra.mxu0 %v449
  %1949 = vmatprep.subr.mxu0 %v454
  %1950 = vmatpush1.msra.mxu0 %v453
  %1951 = vmatprep.subr.mxu0 %v458
  %1952 = vmatpush1.msra.mxu0 %v457
  %1953 = vmatprep.subr.mxu0 %v462
  %1954 = vmatpush1.msra.mxu0 %v461
  %1955 = vmatprep.subr.mxu0 %v466
  %1956 = vmatpush1.msra.mxu0 %v465
  %1957 = vmatprep.subr.mxu0 %v470
  %1958 = vmatpush1.msra.mxu0 %v469
  %1959 = vmatprep.subr.mxu0 %v474
  %1960 = vmatpush1.msra.mxu0 %v473
  %1961 = vmatprep.subr.mxu0 0.0
  %1962 = vmatpush1.msra.mxu0 0.0
  %1963 = vmatprep.subr.mxu0 0.0
  %1964 = vmatpush1.msra.mxu0 0.0
  %1965 = vmatprep.subr.mxu0 0.0
  %1966 = vmatpush1.msra.mxu0 0.0
  %1967 = vmatprep.subr.mxu0 0.0
  %1968 = vmatpush1.msra.mxu0 0.0
  %1969 = vmatprep.subr.mxu0 0.0
  %1970 = vmatpush1.msra.mxu0 0.0
  %1971 = vmatprep.subr.mxu0 0.0
  %1972 = vmatpush1.msra.mxu0 0.0
  %1973 = vmatprep.subr.mxu0 0.0
  %1974 = vmatpush1.msra.mxu0 0.0
  %1975 = vmatprep.subr.mxu0 0.0
  %1976 = vmatpush1.msra.mxu0 0.0
  %1977 = vmatprep.subr.mxu0 0.0
  %1978 = vmatpush1.msra.mxu0 0.0
  %1979 = vmatprep.subr.mxu0 0.0
  %1980 = vmatpush1.msra.mxu0 0.0
  %1981 = vmatprep.subr.mxu0 0.0
  %1982 = vmatpush1.msra.mxu0 0.0
  %1983 = vmatprep.subr.mxu0 0.0
  %1984 = vmatpush1.msra.mxu0 0.0
  %1985 = vmatprep.subr.mxu0 0.0
  %1986 = vmatpush1.msra.mxu0 0.0
  %1987 = vmatprep.subr.mxu0 0.0
  %1988 = vmatpush1.msra.mxu0 0.0
  %1989 = vmatprep.subr.mxu0 0.0
  %1990 = vmatpush1.msra.mxu0 0.0
  %1991 = vmatprep.subr.mxu0 0.0
  %1992 = vmatpush1.msra.mxu0 0.0
  %1993 = vmatprep.mubr.f32.mxu0 0.0
  %1994 = vmatmul.mubr.f32.gmra.mrb[0].mxu0 %v1761
  %v1995 = vpop.f32.mrb[0].mxu0
  %v1996 = vadd.f32 0.0, %v1995
  %v1997 = vpop.f32.mrb[0].mxu0
  %v1998 = vadd.f32 0.0, %v1997
  %1999 = vdwg.mxu0
  %2000 = vmatprep.subr.mxu0 %v416
  %2001 = vmatpush1.msra.mxu0 %v415
  %2002 = vmatprep.subr.mxu0 %v420
  %2003 = vmatpush1.msra.mxu0 %v419
  %2004 = vmatprep.subr.mxu0 %v424
  %2005 = vmatpush1.msra.mxu0 %v423
  %2006 = vmatprep.subr.mxu0 %v428
  %2007 = vmatpush1.msra.mxu0 %v427
  %2008 = vmatprep.subr.mxu0 %v432
  %2009 = vmatpush1.msra.mxu0 %v431
  %2010 = vmatprep.subr.mxu0 %v436
  %2011 = vmatpush1.msra.mxu0 %v435
  %2012 = vmatprep.subr.mxu0 %v440
  %2013 = vmatpush1.msra.mxu0 %v439
  %2014 = vmatprep.subr.mxu0 %v444
  %2015 = vmatpush1.msra.mxu0 %v443
  %2016 = vmatprep.subr.mxu0 %v448
  %2017 = vmatpush1.msra.mxu0 %v447
  %2018 = vmatprep.subr.mxu0 %v452
  %2019 = vmatpush1.msra.mxu0 %v451
  %2020 = vmatprep.subr.mxu0 %v456
  %2021 = vmatpush1.msra.mxu0 %v455
  %2022 = vmatprep.subr.mxu0 %v460
  %2023 = vmatpush1.msra.mxu0 %v459
  %2024 = vmatprep.subr.mxu0 %v464
  %2025 = vmatpush1.msra.mxu0 %v463
  %2026 = vmatprep.subr.mxu0 %v468
  %2027 = vmatpush1.msra.mxu0 %v467
  %2028 = vmatprep.subr.mxu0 %v472
  %2029 = vmatpush1.msra.mxu0 %v471
  %2030 = vmatprep.subr.mxu0 %v476
  %2031 = vmatpush1.msra.mxu0 %v475
  %2032 = vmatprep.subr.mxu0 0.0
  %2033 = vmatpush1.msra.mxu0 0.0
  %2034 = vmatprep.subr.mxu0 0.0
  %2035 = vmatpush1.msra.mxu0 0.0
  %2036 = vmatprep.subr.mxu0 0.0
  %2037 = vmatpush1.msra.mxu0 0.0
  %2038 = vmatprep.subr.mxu0 0.0
  %2039 = vmatpush1.msra.mxu0 0.0
  %2040 = vmatprep.subr.mxu0 0.0
  %2041 = vmatpush1.msra.mxu0 0.0
  %2042 = vmatprep.subr.mxu0 0.0
  %2043 = vmatpush1.msra.mxu0 0.0
  %2044 = vmatprep.subr.mxu0 0.0
  %2045 = vmatpush1.msra.mxu0 0.0
  %2046 = vmatprep.subr.mxu0 0.0
  %2047 = vmatpush1.msra.mxu0 0.0
  %2048 = vmatprep.subr.mxu0 0.0
  %2049 = vmatpush1.msra.mxu0 0.0
  %2050 = vmatprep.subr.mxu0 0.0
  %2051 = vmatpush1.msra.mxu0 0.0
  %2052 = vmatprep.subr.mxu0 0.0
  %2053 = vmatpush1.msra.mxu0 0.0
  %2054 = vmatprep.subr.mxu0 0.0
  %2055 = vmatpush1.msra.mxu0 0.0
  %2056 = vmatprep.subr.mxu0 0.0
  %2057 = vmatpush1.msra.mxu0 0.0
  %2058 = vmatprep.subr.mxu0 0.0
  %2059 = vmatpush1.msra.mxu0 0.0
  %2060 = vmatprep.subr.mxu0 0.0
  %2061 = vmatpush1.msra.mxu0 0.0
  %2062 = vmatprep.subr.mxu0 0.0
  %2063 = vmatpush1.msra.mxu0 0.0
  %2064 = vmatprep.mubr.f32.mxu0 0.0
  %2065 = vmatmul.mubr.f32.gmra.mrb[0].mxu0 %v1761
  %v2066 = vpop.f32.mrb[0].mxu0
  %v2067 = vadd.f32 0.0, %v2066
  %v2068 = vpop.f32.mrb[0].mxu0
  %v2069 = vadd.f32 0.0, %v2068
  %2070 = vdwg.mxu0
  %v2071 = vadd.f32 %v1925, %v1996
  %v2072 = vadd.f32 %v1926, %v1998
  %v2073 = vadd.f32 %v1927, %v2067
  %v2074 = vadd.f32 %v1928, %v2069
  %v2075 = vmul.f32 %v2071, 0.5
  %v2076 = vtanh.pop %v2075
  %v2077 = vmul.f32 %v2076, 0.5
  %v2078 = vadd.f32 %v2077, 0.5
  %v2079 = vmul.f32 %v2072, 0.5
  %v2080 = vtanh.pop %v2079
  %v2081 = vmul.f32 %v2080, 0.5
  %v2082 = vadd.f32 %v2081, 0.5
  %v2083 = vtanh.pop %v2073
  %v2084 = vmul.f32 %v2074, 0.5
  %v2085 = vtanh.pop %v2084
  %v2086 = vmul.f32 %v2085, 0.5
  %v2087 = vadd.f32 %v2086, 0.5
  %v2088 = vmul.f32 %v2082, %v1759
  %v2089 = vmul.f32 %v2078, %v2083
  %v2090 = vadd.f32 %v2088, %v2089
  %v2091 = vtanh.pop %v2090
  %v2092 = vmul.f32 %v2087, %v2091
  %2093 = vmatprep.subr.mxu0 %v642
  %2094 = vmatpush1.msra.mxu0 %v641
  %2095 = vmatprep.subr.mxu0 %v646
  %2096 = vmatpush1.msra.mxu0 %v645
  %2097 = vmatprep.subr.mxu0 %v650
  %2098 = vmatpush1.msra.mxu0 %v649
  %2099 = vmatprep.subr.mxu0 %v654
  %2100 = vmatpush1.msra.mxu0 %v653
  %2101 = vmatprep.subr.mxu0 %v658
  %2102 = vmatpush1.msra.mxu0 %v657
  %2103 = vmatprep.subr.mxu0 %v662
  %2104 = vmatpush1.msra.mxu0 %v661
  %2105 = vmatprep.subr.mxu0 %v666
  %2106 = vmatpush1.msra.mxu0 %v665
  %2107 = vmatprep.subr.mxu0 %v670
  %2108 = vmatpush1.msra.mxu0 %v669
  %2109 = vmatprep.subr.mxu0 %v674
  %2110 = vmatpush1.msra.mxu0 %v673
  %2111 = vmatprep.subr.mxu0 %v678
  %2112 = vmatpush1.msra.mxu0 %v677
  %2113 = vmatprep.subr.mxu0 %v682
  %2114 = vmatpush1.msra.mxu0 %v681
  %2115 = vmatprep.subr.mxu0 %v686
  %2116 = vmatpush1.msra.mxu0 %v685
  %2117 = vmatprep.subr.mxu0 %v690
  %2118 = vmatpush1.msra.mxu0 %v689
  %2119 = vmatprep.subr.mxu0 %v694
  %2120 = vmatpush1.msra.mxu0 %v693
  %2121 = vmatprep.subr.mxu0 %v698
  %2122 = vmatpush1.msra.mxu0 %v697
  %2123 = vmatprep.subr.mxu0 %v702
  %2124 = vmatpush1.msra.mxu0 %v701
  %2125 = vmatprep.subr.mxu0 %v706
  %2126 = vmatpush1.msra.mxu0 %v705
  %2127 = vmatprep.subr.mxu0 %v710
  %2128 = vmatpush1.msra.mxu0 %v709
  %2129 = vmatprep.subr.mxu0 %v714
  %2130 = vmatpush1.msra.mxu0 %v713
  %2131 = vmatprep.subr.mxu0 %v718
  %2132 = vmatpush1.msra.mxu0 %v717
  %2133 = vmatprep.subr.mxu0 %v722
  %2134 = vmatpush1.msra.mxu0 %v721
  %2135 = vmatprep.subr.mxu0 %v726
  %2136 = vmatpush1.msra.mxu0 %v725
  %2137 = vmatprep.subr.mxu0 %v730
  %2138 = vmatpush1.msra.mxu0 %v729
  %2139 = vmatprep.subr.mxu0 %v734
  %2140 = vmatpush1.msra.mxu0 %v733
  %2141 = vmatprep.subr.mxu0 %v738
  %2142 = vmatpush1.msra.mxu0 %v737
  %2143 = vmatprep.subr.mxu0 %v742
  %2144 = vmatpush1.msra.mxu0 %v741
  %2145 = vmatprep.subr.mxu0 %v746
  %2146 = vmatpush1.msra.mxu0 %v745
  %2147 = vmatprep.subr.mxu0 %v750
  %2148 = vmatpush1.msra.mxu0 %v749
  %2149 = vmatprep.subr.mxu0 %v754
  %2150 = vmatpush1.msra.mxu0 %v753
  %2151 = vmatprep.subr.mxu0 %v758
  %2152 = vmatpush1.msra.mxu0 %v757
  %2153 = vmatprep.subr.mxu0 %v762
  %2154 = vmatpush1.msra.mxu0 %v761
  %2155 = vmatprep.subr.mxu0 %v766
  %2156 = vmatpush1.msra.mxu0 %v765
  %2157 = vmatprep.mubr.f32.mxu0 %v1921
  %2158 = vmatmul.mubr.f32.gmra.mrb[0].mxu0 %v2092
  %v2159 = vpop.f32.mrb[0].mxu0
  %v2160 = vadd.f32 %v382, %v2159
  %v2161 = vpop.f32.mrb[0].mxu0
  %v2162 = vadd.f32 %v386, %v2161
  %2163 = vdwg.mxu0
  %2164 = vmatprep.subr.mxu0 %v644
  %2165 = vmatpush1.msra.mxu0 %v643
  %2166 = vmatprep.subr.mxu0 %v648
  %2167 = vmatpush1.msra.mxu0 %v647
  %2168 = vmatprep.subr.mxu0 %v652
  %2169 = vmatpush1.msra.mxu0 %v651
  %2170 = vmatprep.subr.mxu0 %v656
  %2171 = vmatpush1.msra.mxu0 %v655
  %2172 = vmatprep.subr.mxu0 %v660
  %2173 = vmatpush1.msra.mxu0 %v659
  %2174 = vmatprep.subr.mxu0 %v664
  %2175 = vmatpush1.msra.mxu0 %v663
  %2176 = vmatprep.subr.mxu0 %v668
  %2177 = vmatpush1.msra.mxu0 %v667
  %2178 = vmatprep.subr.mxu0 %v672
  %2179 = vmatpush1.msra.mxu0 %v671
  %2180 = vmatprep.subr.mxu0 %v676
  %2181 = vmatpush1.msra.mxu0 %v675
  %2182 = vmatprep.subr.mxu0 %v680
  %2183 = vmatpush1.msra.mxu0 %v679
  %2184 = vmatprep.subr.mxu0 %v684
  %2185 = vmatpush1.msra.mxu0 %v683
  %2186 = vmatprep.subr.mxu0 %v688
  %2187 = vmatpush1.msra.mxu0 %v687
  %2188 = vmatprep.subr.mxu0 %v692
  %2189 = vmatpush1.msra.mxu0 %v691
  %2190 = vmatprep.subr.mxu0 %v696
  %2191 = vmatpush1.msra.mxu0 %v695
  %2192 = vmatprep.subr.mxu0 %v700
  %2193 = vmatpush1.msra.mxu0 %v699
  %2194 = vmatprep.subr.mxu0 %v704
  %2195 = vmatpush1.msra.mxu0 %v703
  %2196 = vmatprep.subr.mxu0 %v708
  %2197 = vmatpush1.msra.mxu0 %v707
  %2198 = vmatprep.subr.mxu0 %v712
  %2199 = vmatpush1.msra.mxu0 %v711
  %2200 = vmatprep.subr.mxu0 %v716
  %2201 = vmatpush1.msra.mxu0 %v715
  %2202 = vmatprep.subr.mxu0 %v720
  %2203 = vmatpush1.msra.mxu0 %v719
  %2204 = vmatprep.subr.mxu0 %v724
  %2205 = vmatpush1.msra.mxu0 %v723
  %2206 = vmatprep.subr.mxu0 %v728
  %2207 = vmatpush1.msra.mxu0 %v727
  %2208 = vmatprep.subr.mxu0 %v732
  %2209 = vmatpush1.msra.mxu0 %v731
  %2210 = vmatprep.subr.mxu0 %v736
  %2211 = vmatpush1.msra.mxu0 %v735
  %2212 = vmatprep.subr.mxu0 %v740
  %2213 = vmatpush1.msra.mxu0 %v739
  %2214 = vmatprep.subr.mxu0 %v744
  %2215 = vmatpush1.msra.mxu0 %v743
  %2216 = vmatprep.subr.mxu0 %v748
  %2217 = vmatpush1.msra.mxu0 %v747
  %2218 = vmatprep.subr.mxu0 %v752
  %2219 = vmatpush1.msra.mxu0 %v751
  %2220 = vmatprep.subr.mxu0 %v756
  %2221 = vmatpush1.msra.mxu0 %v755
  %2222 = vmatprep.subr.mxu0 %v760
  %2223 = vmatpush1.msra.mxu0 %v759
  %2224 = vmatprep.subr.mxu0 %v764
  %2225 = vmatpush1.msra.mxu0 %v763
  %2226 = vmatprep.subr.mxu0 %v768
  %2227 = vmatpush1.msra.mxu0 %v767
  %2228 = vmatprep.mubr.f32.mxu0 %v1921
  %2229 = vmatmul.mubr.f32.gmra.mrb[0].mxu0 %v2092
  %v2230 = vpop.f32.mrb[0].mxu0
  %v2231 = vadd.f32 %v390, %v2230
  %v2232 = vpop.f32.mrb[0].mxu0
  %v2233 = vadd.f32 %v394, %v2232
  %2234 = vdwg.mxu0
  %v2235 = vmul.f32 %v2160, 0.5
  %v2236 = vtanh.pop %v2235
  %v2237 = vmul.f32 %v2236, 0.5
  %v2238 = vadd.f32 %v2237, 0.5
  %v2239 = vmul.f32 %v2162, 0.5
  %v2240 = vtanh.pop %v2239
  %v2241 = vmul.f32 %v2240, 0.5
  %v2242 = vadd.f32 %v2241, 0.5
  %v2243 = vtanh.pop %v2231
  %v2244 = vmul.f32 %v2233, 0.5
  %v2245 = vtanh.pop %v2244
  %v2246 = vmul.f32 %v2245, 0.5
  %v2247 = vadd.f32 %v2246, 0.5
  %v2248 = vmul.f32 %v2242, %v1919
  %v2249 = vmul.f32 %v2238, %v2243
  %v2250 = vadd.f32 %v2248, %v2249
  %v2251 = vtanh.pop %v2250
  %v2252 = vmul.f32 %v2247, %v2251
  %s2253 = smul.u32 5, 4
  %s2254 = smul.addr %s2253, 8
  %s2255 = scalar_lea.vmem [#allocation2], %s2254
  %v2256 = vld [vmem:[%s2255] sm:$0xff]
  %v2257 = vld [vmem:[%s2255 + $0x8] sm:$0xff]
  %v2258 = vld [vmem:[%s2255 + $0x10] sm:$0xff]
  %v2259 = vld [vmem:[%s2255 + $0x18] sm:$0xff]
  %2260 = vmatprep.subr.mxu0 %v414
  %2261 = vmatpush1.msra.mxu0 %v413
  %2262 = vmatprep.subr.mxu0 %v418
  %2263 = vmatpush1.msra.mxu0 %v417
  %2264 = vmatprep.subr.mxu0 %v422
  %2265 = vmatpush1.msra.mxu0 %v421
  %2266 = vmatprep.subr.mxu0 %v426
  %2267 = vmatpush1.msra.mxu0 %v425
  %2268 = vmatprep.subr.mxu0 %v430
  %2269 = vmatpush1.msra.mxu0 %v429
  %2270 = vmatprep.subr.mxu0 %v434
  %2271 = vmatpush1.msra.mxu0 %v433
  %2272 = vmatprep.subr.mxu0 %v438
  %2273 = vmatpush1.msra.mxu0 %v437
  %2274 = vmatprep.subr.mxu0 %v442
  %2275 = vmatpush1.msra.mxu0 %v441
  %2276 = vmatprep.subr.mxu0 %v446
  %2277 = vmatpush1.msra.mxu0 %v445
  %2278 = vmatprep.subr.mxu0 %v450
  %2279 = vmatpush1.msra.mxu0 %v449
  %2280 = vmatprep.subr.mxu0 %v454
  %2281 = vmatpush1.msra.mxu0 %v453
  %2282 = vmatprep.subr.mxu0 %v458
  %2283 = vmatpush1.msra.mxu0 %v457
  %2284 = vmatprep.subr.mxu0 %v462
  %2285 = vmatpush1.msra.mxu0 %v461
  %2286 = vmatprep.subr.mxu0 %v466
  %2287 = vmatpush1.msra.mxu0 %v465
  %2288 = vmatprep.subr.mxu0 %v470
  %2289 = vmatpush1.msra.mxu0 %v469
  %2290 = vmatprep.subr.mxu0 %v474
  %2291 = vmatpush1.msra.mxu0 %v473
  %2292 = vmatprep.subr.mxu0 0.0
  %2293 = vmatpush1.msra.mxu0 0.0
  %2294 = vmatprep.subr.mxu0 0.0
  %2295 = vmatpush1.msra.mxu0 0.0
  %2296 = vmatprep.subr.mxu0 0.0
  %2297 = vmatpush1.msra.mxu0 0.0
  %2298 = vmatprep.subr.mxu0 0.0
  %2299 = vmatpush1.msra.mxu0 0.0
  %2300 = vmatprep.subr.mxu0 0.0
  %2301 = vmatpush1.msra.mxu0 0.0
  %2302 = vmatprep.subr.mxu0 0.0
  %2303 = vmatpush1.msra.mxu0 0.0
  %2304 = vmatprep.subr.mxu0 0.0
  %2305 = vmatpush1.msra.mxu0 0.0
  %2306 = vmatprep.subr.mxu0 0.0
  %2307 = vmatpush1.msra.mxu0 0.0
  %2308 = vmatprep.subr.mxu0 0.0
  %2309 = vmatpush1.msra.mxu0 0.0
  %2310 = vmatprep.subr.mxu0 0.0
  %2311 = vmatpush1.msra.mxu0 0.0
  %2312 = vmatprep.subr.mxu0 0.0
  %2313 = vmatpush1.msra.mxu0 0.0
  %2314 = vmatprep.subr.mxu0 0.0
  %2315 = vmatpush1.msra.mxu0 0.0
  %2316 = vmatprep.subr.mxu0 0.0
  %2317 = vmatpush1.msra.mxu0 0.0
  %2318 = vmatprep.subr.mxu0 0.0
  %2319 = vmatpush1.msra.mxu0 0.0
  %2320 = vmatprep.subr.mxu0 0.0
  %2321 = vmatpush1.msra.mxu0 0.0
  %2322 = vmatprep.subr.mxu0 0.0
  %2323 = vmatpush1.msra.mxu0 0.0
  %2324 = vmatprep.mubr.f32.mxu0 0.0
  %2325 = vmatmul.mubr.f32.gmra.mrb[0].mxu0 %v2092
  %v2326 = vpop.f32.mrb[0].mxu0
  %v2327 = vadd.f32 0.0, %v2326
  %v2328 = vpop.f32.mrb[0].mxu0
  %v2329 = vadd.f32 0.0, %v2328
  %2330 = vdwg.mxu0
  %2331 = vmatprep.subr.mxu0 %v416
  %2332 = vmatpush1.msra.mxu0 %v415
  %2333 = vmatprep.subr.mxu0 %v420
  %2334 = vmatpush1.msra.mxu0 %v419
  %2335 = vmatprep.subr.mxu0 %v424
  %2336 = vmatpush1.msra.mxu0 %v423
  %2337 = vmatprep.subr.mxu0 %v428
  %2338 = vmatpush1.msra.mxu0 %v427
  %2339 = vmatprep.subr.mxu0 %v432
  %2340 = vmatpush1.msra.mxu0 %v431
  %2341 = vmatprep.subr.mxu0 %v436
  %2342 = vmatpush1.msra.mxu0 %v435
  %2343 = vmatprep.subr.mxu0 %v440
  %2344 = vmatpush1.msra.mxu0 %v439
  %2345 = vmatprep.subr.mxu0 %v444
  %2346 = vmatpush1.msra.mxu0 %v443
  %2347 = vmatprep.subr.mxu0 %v448
  %2348 = vmatpush1.msra.mxu0 %v447
  %2349 = vmatprep.subr.mxu0 %v452
  %2350 = vmatpush1.msra.mxu0 %v451
  %2351 = vmatprep.subr.mxu0 %v456
  %2352 = vmatpush1.msra.mxu0 %v455
  %2353 = vmatprep.subr.mxu0 %v460
  %2354 = vmatpush1.msra.mxu0 %v459
  %2355 = vmatprep.subr.mxu0 %v464
  %2356 = vmatpush1.msra.mxu0 %v463
  %2357 = vmatprep.subr.mxu0 %v468
  %2358 = vmatpush1.msra.mxu0 %v467
  %2359 = vmatprep.subr.mxu0 %v472
  %2360 = vmatpush1.msra.mxu0 %v471
  %2361 = vmatprep.subr.mxu0 %v476
  %2362 = vmatpush1.msra.mxu0 %v475
  %2363 = vmatprep.subr.mxu0 0.0
  %2364 = vmatpush1.msra.mxu0 0.0
  %2365 = vmatprep.subr.mxu0 0.0
  %2366 = vmatpush1.msra.mxu0 0.0
  %2367 = vmatprep.subr.mxu0 0.0
  %2368 = vmatpush1.msra.mxu0 0.0
  %2369 = vmatprep.subr.mxu0 0.0
  %2370 = vmatpush1.msra.mxu0 0.0
  %2371 = vmatprep.subr.mxu0 0.0
  %2372 = vmatpush1.msra.mxu0 0.0
  %2373 = vmatprep.subr.mxu0 0.0
  %2374 = vmatpush1.msra.mxu0 0.0
  %2375 = vmatprep.subr.mxu0 0.0
  %2376 = vmatpush1.msra.mxu0 0.0
  %2377 = vmatprep.subr.mxu0 0.0
  %2378 = vmatpush1.msra.mxu0 0.0
  %2379 = vmatprep.subr.mxu0 0.0
  %2380 = vmatpush1.msra.mxu0 0.0
  %2381 = vmatprep.subr.mxu0 0.0
  %2382 = vmatpush1.msra.mxu0 0.0
  %2383 = vmatprep.subr.mxu0 0.0
  %2384 = vmatpush1.msra.mxu0 0.0
  %2385 = vmatprep.subr.mxu0 0.0
  %2386 = vmatpush1.msra.mxu0 0.0
  %2387 = vmatprep.subr.mxu0 0.0
  %2388 = vmatpush1.msra.mxu0 0.0
  %2389 = vmatprep.subr.mxu0 0.0
  %2390 = vmatpush1.msra.mxu0 0.0
  %2391 = vmatprep.subr.mxu0 0.0
  %2392 = vmatpush1.msra.mxu0 0.0
  %2393 = vmatprep.subr.mxu0 0.0
  %2394 = vmatpush1.msra.mxu0 0.0
  %2395 = vmatprep.mubr.f32.mxu0 0.0
  %2396 = vmatmul.mubr.f32.gmra.mrb[0].mxu0 %v2092
  %v2397 = vpop.f32.mrb[0].mxu0
  %v2398 = vadd.f32 0.0, %v2397
  %v2399 = vpop.f32.mrb[0].mxu0
  %v2400 = vadd.f32 0.0, %v2399
  %2401 = vdwg.mxu0
  %v2402 = vadd.f32 %v2256, %v2327
  %v2403 = vadd.f32 %v2257, %v2329
  %v2404 = vadd.f32 %v2258, %v2398
  %v2405 = vadd.f32 %v2259, %v2400
  %v2406 = vmul.f32 %v2402, 0.5
  %v2407 = vtanh.pop %v2406
  %v2408 = vmul.f32 %v2407, 0.5
  %v2409 = vadd.f32 %v2408, 0.5
  %v2410 = vmul.f32 %v2403, 0.5
  %v2411 = vtanh.pop %v2410
  %v2412 = vmul.f32 %v2411, 0.5
  %v2413 = vadd.f32 %v2412, 0.5
  %v2414 = vtanh.pop %v2404
  %v2415 = vmul.f32 %v2405, 0.5
  %v2416 = vtanh.pop %v2415
  %v2417 = vmul.f32 %v2416, 0.5
  %v2418 = vadd.f32 %v2417, 0.5
  %v2419 = vmul.f32 %v2413, %v2090
  %v2420 = vmul.f32 %v2409, %v2414
  %v2421 = vadd.f32 %v2419, %v2420
  %v2422 = vtanh.pop %v2421
  %v2423 = vmul.f32 %v2418, %v2422
  %2424 = vmatprep.subr.mxu0 %v642
  %2425 = vmatpush1.msra.mxu0 %v641
  %2426 = vmatprep.subr.mxu0 %v646
  %2427 = vmatpush1.msra.mxu0 %v645
  %2428 = vmatprep.subr.mxu0 %v650
  %2429 = vmatpush1.msra.mxu0 %v649
  %2430 = vmatprep.subr.mxu0 %v654
  %2431 = vmatpush1.msra.mxu0 %v653
  %2432 = vmatprep.subr.mxu0 %v658
  %2433 = vmatpush1.msra.mxu0 %v657
  %2434 = vmatprep.subr.mxu0 %v662
  %2435 = vmatpush1.msra.mxu0 %v661
  %2436 = vmatprep.subr.mxu0 %v666
  %2437 = vmatpush1.msra.mxu0 %v665
  %2438 = vmatprep.subr.mxu0 %v670
  %2439 = vmatpush1.msra.mxu0 %v669
  %2440 = vmatprep.subr.mxu0 %v674
  %2441 = vmatpush1.msra.mxu0 %v673
  %2442 = vmatprep.subr.mxu0 %v678
  %2443 = vmatpush1.msra.mxu0 %v677
  %2444 = vmatprep.subr.mxu0 %v682
  %2445 = vmatpush1.msra.mxu0 %v681
  %2446 = vmatprep.subr.mxu0 %v686
  %2447 = vmatpush1.msra.mxu0 %v685
  %2448 = vmatprep.subr.mxu0 %v690
  %2449 = vmatpush1.msra.mxu0 %v689
  %2450 = vmatprep.subr.mxu0 %v694
  %2451 = vmatpush1.msra.mxu0 %v693
  %2452 = vmatprep.subr.mxu0 %v698
  %2453 = vmatpush1.msra.mxu0 %v697
  %2454 = vmatprep.subr.mxu0 %v702
  %2455 = vmatpush1.msra.mxu0 %v701
  %2456 = vmatprep.subr.mxu0 %v706
  %2457 = vmatpush1.msra.mxu0 %v705
  %2458 = vmatprep.subr.mxu0 %v710
  %2459 = vmatpush1.msra.mxu0 %v709
  %2460 = vmatprep.subr.mxu0 %v714
  %2461 = vmatpush1.msra.mxu0 %v713
  %2462 = vmatprep.subr.mxu0 %v718
  %2463 = vmatpush1.msra.mxu0 %v717
  %2464 = vmatprep.subr.mxu0 %v722
  %2465 = vmatpush1.msra.mxu0 %v721
  %2466 = vmatprep.subr.mxu0 %v726
  %2467 = vmatpush1.msra.mxu0 %v725
  %2468 = vmatprep.subr.mxu0 %v730
  %2469 = vmatpush1.msra.mxu0 %v729
  %2470 = vmatprep.subr.mxu0 %v734
  %2471 = vmatpush1.msra.mxu0 %v733
  %2472 = vmatprep.subr.mxu0 %v738
  %2473 = vmatpush1.msra.mxu0 %v737
  %2474 = vmatprep.subr.mxu0 %v742
  %2475 = vmatpush1.msra.mxu0 %v741
  %2476 = vmatprep.subr.mxu0 %v746
  %2477 = vmatpush1.msra.mxu0 %v745
  %2478 = vmatprep.subr.mxu0 %v750
  %2479 = vmatpush1.msra.mxu0 %v749
  %2480 = vmatprep.subr.mxu0 %v754
  %2481 = vmatpush1.msra.mxu0 %v753
  %2482 = vmatprep.subr.mxu0 %v758
  %2483 = vmatpush1.msra.mxu0 %v757
  %2484 = vmatprep.subr.mxu0 %v762
  %2485 = vmatpush1.msra.mxu0 %v761
  %2486 = vmatprep.subr.mxu0 %v766
  %2487 = vmatpush1.msra.mxu0 %v765
  %2488 = vmatprep.mubr.f32.mxu0 %v2252
  %2489 = vmatmul.mubr.f32.gmra.mrb[0].mxu0 %v2423
  %v2490 = vpop.f32.mrb[0].mxu0
  %v2491 = vadd.f32 %v382, %v2490
  %v2492 = vpop.f32.mrb[0].mxu0
  %v2493 = vadd.f32 %v386, %v2492
  %2494 = vdwg.mxu0
  %2495 = vmatprep.subr.mxu0 %v644
  %2496 = vmatpush1.msra.mxu0 %v643
  %2497 = vmatprep.subr.mxu0 %v648
  %2498 = vmatpush1.msra.mxu0 %v647
  %2499 = vmatprep.subr.mxu0 %v652
  %2500 = vmatpush1.msra.mxu0 %v651
  %2501 = vmatprep.subr.mxu0 %v656
  %2502 = vmatpush1.msra.mxu0 %v655
  %2503 = vmatprep.subr.mxu0 %v660
  %2504 = vmatpush1.msra.mxu0 %v659
  %2505 = vmatprep.subr.mxu0 %v664
  %2506 = vmatpush1.msra.mxu0 %v663
  %2507 = vmatprep.subr.mxu0 %v668
  %2508 = vmatpush1.msra.mxu0 %v667
  %2509 = vmatprep.subr.mxu0 %v672
  %2510 = vmatpush1.msra.mxu0 %v671
  %2511 = vmatprep.subr.mxu0 %v676
  %2512 = vmatpush1.msra.mxu0 %v675
  %2513 = vmatprep.subr.mxu0 %v680
  %2514 = vmatpush1.msra.mxu0 %v679
  %2515 = vmatprep.subr.mxu0 %v684
  %2516 = vmatpush1.msra.mxu0 %v683
  %2517 = vmatprep.subr.mxu0 %v688
  %2518 = vmatpush1.msra.mxu0 %v687
  %2519 = vmatprep.subr.mxu0 %v692
  %2520 = vmatpush1.msra.mxu0 %v691
  %2521 = vmatprep.subr.mxu0 %v696
  %2522 = vmatpush1.msra.mxu0 %v695
  %2523 = vmatprep.subr.mxu0 %v700
  %2524 = vmatpush1.msra.mxu0 %v699
  %2525 = vmatprep.subr.mxu0 %v704
  %2526 = vmatpush1.msra.mxu0 %v703
  %2527 = vmatprep.subr.mxu0 %v708
  %2528 = vmatpush1.msra.mxu0 %v707
  %2529 = vmatprep.subr.mxu0 %v712
  %2530 = vmatpush1.msra.mxu0 %v711
  %2531 = vmatprep.subr.mxu0 %v716
  %2532 = vmatpush1.msra.mxu0 %v715
  %2533 = vmatprep.subr.mxu0 %v720
  %2534 = vmatpush1.msra.mxu0 %v719
  %2535 = vmatprep.subr.mxu0 %v724
  %2536 = vmatpush1.msra.mxu0 %v723
  %2537 = vmatprep.subr.mxu0 %v728
  %2538 = vmatpush1.msra.mxu0 %v727
  %2539 = vmatprep.subr.mxu0 %v732
  %2540 = vmatpush1.msra.mxu0 %v731
  %2541 = vmatprep.subr.mxu0 %v736
  %2542 = vmatpush1.msra.mxu0 %v735
  %2543 = vmatprep.subr.mxu0 %v740
  %2544 = vmatpush1.msra.mxu0 %v739
  %2545 = vmatprep.subr.mxu0 %v744
  %2546 = vmatpush1.msra.mxu0 %v743
  %2547 = vmatprep.subr.mxu0 %v748
  %2548 = vmatpush1.msra.mxu0 %v747
  %2549 = vmatprep.subr.mxu0 %v752
  %2550 = vmatpush1.msra.mxu0 %v751
  %2551 = vmatprep.subr.mxu0 %v756
  %2552 = vmatpush1.msra.mxu0 %v755
  %2553 = vmatprep.subr.mxu0 %v760
  %2554 = vmatpush1.msra.mxu0 %v759
  %2555 = vmatprep.subr.mxu0 %v764
  %2556 = vmatpush1.msra.mxu0 %v763
  %2557 = vmatprep.subr.mxu0 %v768
  %2558 = vmatpush1.msra.mxu0 %v767
  %2559 = vmatprep.mubr.f32.mxu0 %v2252
  %2560 = vmatmul.mubr.f32.gmra.mrb[0].mxu0 %v2423
  %v2561 = vpop.f32.mrb[0].mxu0
  %v2562 = vadd.f32 %v390, %v2561
  %v2563 = vpop.f32.mrb[0].mxu0
  %v2564 = vadd.f32 %v394, %v2563
  %2565 = vdwg.mxu0
  %v2566 = vmul.f32 %v2491, 0.5
  %v2567 = vtanh.pop %v2566
  %v2568 = vmul.f32 %v2567, 0.5
  %v2569 = vadd.f32 %v2568, 0.5
  %v2570 = vmul.f32 %v2493, 0.5
  %v2571 = vtanh.pop %v2570
  %v2572 = vmul.f32 %v2571, 0.5
  %v2573 = vadd.f32 %v2572, 0.5
  %v2574 = vtanh.pop %v2562
  %v2575 = vmul.f32 %v2564, 0.5
  %v2576 = vtanh.pop %v2575
  %v2577 = vmul.f32 %v2576, 0.5
  %v2578 = vadd.f32 %v2577, 0.5
  %v2579 = vmul.f32 %v2573, %v2250
  %v2580 = vmul.f32 %v2569, %v2574
  %v2581 = vadd.f32 %v2579, %v2580
  %v2582 = vtanh.pop %v2581
  %v2583 = vmul.f32 %v2578, %v2582
  %s2584 = smul.u32 6, 4
  %s2585 = smul.addr %s2584, 8
  %s2586 = scalar_lea.vmem [#allocation2], %s2585
  %v2587 = vld [vmem:[%s2586] sm:$0xff]
  %v2588 = vld [vmem:[%s2586 + $0x8] sm:$0xff]
  %v2589 = vld [vmem:[%s2586 + $0x10] sm:$0xff]
  %v2590 = vld [vmem:[%s2586 + $0x18] sm:$0xff]
  %2591 = vmatprep.subr.mxu0 %v414
  %2592 = vmatpush1.msra.mxu0 %v413
  %2593 = vmatprep.subr.mxu0 %v418
  %2594 = vmatpush1.msra.mxu0 %v417
  %2595 = vmatprep.subr.mxu0 %v422
  %2596 = vmatpush1.msra.mxu0 %v421
  %2597 = vmatprep.subr.mxu0 %v426
  %2598 = vmatpush1.msra.mxu0 %v425
  %2599 = vmatprep.subr.mxu0 %v430
  %2600 = vmatpush1.msra.mxu0 %v429
  %2601 = vmatprep.subr.mxu0 %v434
  %2602 = vmatpush1.msra.mxu0 %v433
  %2603 = vmatprep.subr.mxu0 %v438
  %2604 = vmatpush1.msra.mxu0 %v437
  %2605 = vmatprep.subr.mxu0 %v442
  %2606 = vmatpush1.msra.mxu0 %v441
  %2607 = vmatprep.subr.mxu0 %v446
  %2608 = vmatpush1.msra.mxu0 %v445
  %2609 = vmatprep.subr.mxu0 %v450
  %2610 = vmatpush1.msra.mxu0 %v449
  %2611 = vmatprep.subr.mxu0 %v454
  %2612 = vmatpush1.msra.mxu0 %v453
  %2613 = vmatprep.subr.mxu0 %v458
  %2614 = vmatpush1.msra.mxu0 %v457
  %2615 = vmatprep.subr.mxu0 %v462
  %2616 = vmatpush1.msra.mxu0 %v461
  %2617 = vmatprep.subr.mxu0 %v466
  %2618 = vmatpush1.msra.mxu0 %v465
  %2619 = vmatprep.subr.mxu0 %v470
  %2620 = vmatpush1.msra.mxu0 %v469
  %2621 = vmatprep.subr.mxu0 %v474
  %2622 = vmatpush1.msra.mxu0 %v473
  %2623 = vmatprep.subr.mxu0 0.0
  %2624 = vmatpush1.msra.mxu0 0.0
  %2625 = vmatprep.subr.mxu0 0.0
  %2626 = vmatpush1.msra.mxu0 0.0
  %2627 = vmatprep.subr.mxu0 0.0
  %2628 = vmatpush1.msra.mxu0 0.0
  %2629 = vmatprep.subr.mxu0 0.0
  %2630 = vmatpush1.msra.mxu0 0.0
  %2631 = vmatprep.subr.mxu0 0.0
  %2632 = vmatpush1.msra.mxu0 0.0
  %2633 = vmatprep.subr.mxu0 0.0
  %2634 = vmatpush1.msra.mxu0 0.0
  %2635 = vmatprep.subr.mxu0 0.0
  %2636 = vmatpush1.msra.mxu0 0.0
  %2637 = vmatprep.subr.mxu0 0.0
  %2638 = vmatpush1.msra.mxu0 0.0
  %2639 = vmatprep.subr.mxu0 0.0
  %2640 = vmatpush1.msra.mxu0 0.0
  %2641 = vmatprep.subr.mxu0 0.0
  %2642 = vmatpush1.msra.mxu0 0.0
  %2643 = vmatprep.subr.mxu0 0.0
  %2644 = vmatpush1.msra.mxu0 0.0
  %2645 = vmatprep.subr.mxu0 0.0
  %2646 = vmatpush1.msra.mxu0 0.0
  %2647 = vmatprep.subr.mxu0 0.0
  %2648 = vmatpush1.msra.mxu0 0.0
  %2649 = vmatprep.subr.mxu0 0.0
  %2650 = vmatpush1.msra.mxu0 0.0
  %2651 = vmatprep.subr.mxu0 0.0
  %2652 = vmatpush1.msra.mxu0 0.0
  %2653 = vmatprep.subr.mxu0 0.0
  %2654 = vmatpush1.msra.mxu0 0.0
  %2655 = vmatprep.mubr.f32.mxu0 0.0
  %2656 = vmatmul.mubr.f32.gmra.mrb[0].mxu0 %v2423
  %v2657 = vpop.f32.mrb[0].mxu0
  %v2658 = vadd.f32 0.0, %v2657
  %v2659 = vpop.f32.mrb[0].mxu0
  %v2660 = vadd.f32 0.0, %v2659
  %2661 = vdwg.mxu0
  %2662 = vmatprep.subr.mxu0 %v416
  %2663 = vmatpush1.msra.mxu0 %v415
  %2664 = vmatprep.subr.mxu0 %v420
  %2665 = vmatpush1.msra.mxu0 %v419
  %2666 = vmatprep.subr.mxu0 %v424
  %2667 = vmatpush1.msra.mxu0 %v423
  %2668 = vmatprep.subr.mxu0 %v428
  %2669 = vmatpush1.msra.mxu0 %v427
  %2670 = vmatprep.subr.mxu0 %v432
  %2671 = vmatpush1.msra.mxu0 %v431
  %2672 = vmatprep.subr.mxu0 %v436
  %2673 = vmatpush1.msra.mxu0 %v435
  %2674 = vmatprep.subr.mxu0 %v440
  %2675 = vmatpush1.msra.mxu0 %v439
  %2676 = vmatprep.subr.mxu0 %v444
  %2677 = vmatpush1.msra.mxu0 %v443
  %2678 = vmatprep.subr.mxu0 %v448
  %2679 = vmatpush1.msra.mxu0 %v447
  %2680 = vmatprep.subr.mxu0 %v452
  %2681 = vmatpush1.msra.mxu0 %v451
  %2682 = vmatprep.subr.mxu0 %v456
  %2683 = vmatpush1.msra.mxu0 %v455
  %2684 = vmatprep.subr.mxu0 %v460
  %2685 = vmatpush1.msra.mxu0 %v459
  %2686 = vmatprep.subr.mxu0 %v464
  %2687 = vmatpush1.msra.mxu0 %v463
  %2688 = vmatprep.subr.mxu0 %v468
  %2689 = vmatpush1.msra.mxu0 %v467
  %2690 = vmatprep.subr.mxu0 %v472
  %2691 = vmatpush1.msra.mxu0 %v471
  %2692 = vmatprep.subr.mxu0 %v476
  %2693 = vmatpush1.msra.mxu0 %v475
  %2694 = vmatprep.subr.mxu0 0.0
  %2695 = vmatpush1.msra.mxu0 0.0
  %2696 = vmatprep.subr.mxu0 0.0
  %2697 = vmatpush1.msra.mxu0 0.0
  %2698 = vmatprep.subr.mxu0 0.0
  %2699 = vmatpush1.msra.mxu0 0.0
  %2700 = vmatprep.subr.mxu0 0.0
  %2701 = vmatpush1.msra.mxu0 0.0
  %2702 = vmatprep.subr.mxu0 0.0
  %2703 = vmatpush1.msra.mxu0 0.0
  %2704 = vmatprep.subr.mxu0 0.0
  %2705 = vmatpush1.msra.mxu0 0.0
  %2706 = vmatprep.subr.mxu0 0.0
  %2707 = vmatpush1.msra.mxu0 0.0
  %2708 = vmatprep.subr.mxu0 0.0
  %2709 = vmatpush1.msra.mxu0 0.0
  %2710 = vmatprep.subr.mxu0 0.0
  %2711 = vmatpush1.msra.mxu0 0.0
  %2712 = vmatprep.subr.mxu0 0.0
  %2713 = vmatpush1.msra.mxu0 0.0
  %2714 = vmatprep.subr.mxu0 0.0
  %2715 = vmatpush1.msra.mxu0 0.0
  %2716 = vmatprep.subr.mxu0 0.0
  %2717 = vmatpush1.msra.mxu0 0.0
  %2718 = vmatprep.subr.mxu0 0.0
  %2719 = vmatpush1.msra.mxu0 0.0
  %2720 = vmatprep.subr.mxu0 0.0
  %2721 = vmatpush1.msra.mxu0 0.0
  %2722 = vmatprep.subr.mxu0 0.0
  %2723 = vmatpush1.msra.mxu0 0.0
  %2724 = vmatprep.subr.mxu0 0.0
  %2725 = vmatpush1.msra.mxu0 0.0
  %2726 = vmatprep.mubr.f32.mxu0 0.0
  %2727 = vmatmul.mubr.f32.gmra.mrb[0].mxu0 %v2423
  %v2728 = vpop.f32.mrb[0].mxu0
  %v2729 = vadd.f32 0.0, %v2728
  %v2730 = vpop.f32.mrb[0].mxu0
  %v2731 = vadd.f32 0.0, %v2730
  %2732 = vdwg.mxu0
  %v2733 = vadd.f32 %v2587, %v2658
  %v2734 = vadd.f32 %v2588, %v2660
  %v2735 = vadd.f32 %v2589, %v2729
  %v2736 = vadd.f32 %v2590, %v2731
  %v2737 = vmul.f32 %v2733, 0.5
  %v2738 = vtanh.pop %v2737
  %v2739 = vmul.f32 %v2738, 0.5
  %v2740 = vadd.f32 %v2739, 0.5
  %v2741 = vmul.f32 %v2734, 0.5
  %v2742 = vtanh.pop %v2741
  %v2743 = vmul.f32 %v2742, 0.5
  %v2744 = vadd.f32 %v2743, 0.5
  %v2745 = vtanh.pop %v2735
  %v2746 = vmul.f32 %v2736, 0.5
  %v2747 = vtanh.pop %v2746
  %v2748 = vmul.f32 %v2747, 0.5
  %v2749 = vadd.f32 %v2748, 0.5
  %v2750 = vmul.f32 %v2744, %v2421
  %v2751 = vmul.f32 %v2740, %v2745
  %v2752 = vadd.f32 %v2750, %v2751
  %v2753 = vtanh.pop %v2752
  %v2754 = vmul.f32 %v2749, %v2753
  %2755 = vmatprep.subr.mxu0 %v642
  %2756 = vmatpush1.msra.mxu0 %v641
  %2757 = vmatprep.subr.mxu0 %v646
  %2758 = vmatpush1.msra.mxu0 %v645
  %2759 = vmatprep.subr.mxu0 %v650
  %2760 = vmatpush1.msra.mxu0 %v649
  %2761 = vmatprep.subr.mxu0 %v654
  %2762 = vmatpush1.msra.mxu0 %v653
  %2763 = vmatprep.subr.mxu0 %v658
  %2764 = vmatpush1.msra.mxu0 %v657
  %2765 = vmatprep.subr.mxu0 %v662
  %2766 = vmatpush1.msra.mxu0 %v661
  %2767 = vmatprep.subr.mxu0 %v666
  %2768 = vmatpush1.msra.mxu0 %v665
  %2769 = vmatprep.subr.mxu0 %v670
  %2770 = vmatpush1.msra.mxu0 %v669
  %2771 = vmatprep.subr.mxu0 %v674
  %2772 = vmatpush1.msra.mxu0 %v673
  %2773 = vmatprep.subr.mxu0 %v678
  %2774 = vmatpush1.msra.mxu0 %v677
  %2775 = vmatprep.subr.mxu0 %v682
  %2776 = vmatpush1.msra.mxu0 %v681
  %2777 = vmatprep.subr.mxu0 %v686
  %2778 = vmatpush1.msra.mxu0 %v685
  %2779 = vmatprep.subr.mxu0 %v690
  %2780 = vmatpush1.msra.mxu0 %v689
  %2781 = vmatprep.subr.mxu0 %v694
  %2782 = vmatpush1.msra.mxu0 %v693
  %2783 = vmatprep.subr.mxu0 %v698
  %2784 = vmatpush1.msra.mxu0 %v697
  %2785 = vmatprep.subr.mxu0 %v702
  %2786 = vmatpush1.msra.mxu0 %v701
  %2787 = vmatprep.subr.mxu0 %v706
  %2788 = vmatpush1.msra.mxu0 %v705
  %2789 = vmatprep.subr.mxu0 %v710
  %2790 = vmatpush1.msra.mxu0 %v709
  %2791 = vmatprep.subr.mxu0 %v714
  %2792 = vmatpush1.msra.mxu0 %v713
  %2793 = vmatprep.subr.mxu0 %v718
  %2794 = vmatpush1.msra.mxu0 %v717
  %2795 = vmatprep.subr.mxu0 %v722
  %2796 = vmatpush1.msra.mxu0 %v721
  %2797 = vmatprep.subr.mxu0 %v726
  %2798 = vmatpush1.msra.mxu0 %v725
  %2799 = vmatprep.subr.mxu0 %v730
  %2800 = vmatpush1.msra.mxu0 %v729
  %2801 = vmatprep.subr.mxu0 %v734
  %2802 = vmatpush1.msra.mxu0 %v733
  %2803 = vmatprep.subr.mxu0 %v738
  %2804 = vmatpush1.msra.mxu0 %v737
  %2805 = vmatprep.subr.mxu0 %v742
  %2806 = vmatpush1.msra.mxu0 %v741
  %2807 = vmatprep.subr.mxu0 %v746
  %2808 = vmatpush1.msra.mxu0 %v745
  %2809 = vmatprep.subr.mxu0 %v750
  %2810 = vmatpush1.msra.mxu0 %v749
  %2811 = vmatprep.subr.mxu0 %v754
  %2812 = vmatpush1.msra.mxu0 %v753
  %2813 = vmatprep.subr.mxu0 %v758
  %2814 = vmatpush1.msra.mxu0 %v757
  %2815 = vmatprep.subr.mxu0 %v762
  %2816 = vmatpush1.msra.mxu0 %v761
  %2817 = vmatprep.subr.mxu0 %v766
  %2818 = vmatpush1.msra.mxu0 %v765
  %2819 = vmatprep.mubr.f32.mxu0 %v2583
  %2820 = vmatmul.mubr.f32.gmra.mrb[0].mxu0 %v2754
  %v2821 = vpop.f32.mrb[0].mxu0
  %v2822 = vadd.f32 %v382, %v2821
  %v2823 = vpop.f32.mrb[0].mxu0
  %v2824 = vadd.f32 %v386, %v2823
  %2825 = vdwg.mxu0
  %2826 = vmatprep.subr.mxu0 %v644
  %2827 = vmatpush1.msra.mxu0 %v643
  %2828 = vmatprep.subr.mxu0 %v648
  %2829 = vmatpush1.msra.mxu0 %v647
  %2830 = vmatprep.subr.mxu0 %v652
  %2831 = vmatpush1.msra.mxu0 %v651
  %2832 = vmatprep.subr.mxu0 %v656
  %2833 = vmatpush1.msra.mxu0 %v655
  %2834 = vmatprep.subr.mxu0 %v660
  %2835 = vmatpush1.msra.mxu0 %v659
  %2836 = vmatprep.subr.mxu0 %v664
  %2837 = vmatpush1.msra.mxu0 %v663
  %2838 = vmatprep.subr.mxu0 %v668
  %2839 = vmatpush1.msra.mxu0 %v667
  %2840 = vmatprep.subr.mxu0 %v672
  %2841 = vmatpush1.msra.mxu0 %v671
  %2842 = vmatprep.subr.mxu0 %v676
  %2843 = vmatpush1.msra.mxu0 %v675
  %2844 = vmatprep.subr.mxu0 %v680
  %2845 = vmatpush1.msra.mxu0 %v679
  %2846 = vmatprep.subr.mxu0 %v684
  %2847 = vmatpush1.msra.mxu0 %v683
  %2848 = vmatprep.subr.mxu0 %v688
  %2849 = vmatpush1.msra.mxu0 %v687
  %2850 = vmatprep.subr.mxu0 %v692
  %2851 = vmatpush1.msra.mxu0 %v691
  %2852 = vmatprep.subr.mxu0 %v696
  %2853 = vmatpush1.msra.mxu0 %v695
  %2854 = vmatprep.subr.mxu0 %v700
  %2855 = vmatpush1.msra.mxu0 %v699
  %2856 = vmatprep.subr.mxu0 %v704
  %2857 = vmatpush1.msra.mxu0 %v703
  %2858 = vmatprep.subr.mxu0 %v708
  %2859 = vmatpush1.msra.mxu0 %v707
  %2860 = vmatprep.subr.mxu0 %v712
  %2861 = vmatpush1.msra.mxu0 %v711
  %2862 = vmatprep.subr.mxu0 %v716
  %2863 = vmatpush1.msra.mxu0 %v715
  %2864 = vmatprep.subr.mxu0 %v720
  %2865 = vmatpush1.msra.mxu0 %v719
  %2866 = vmatprep.subr.mxu0 %v724
  %2867 = vmatpush1.msra.mxu0 %v723
  %2868 = vmatprep.subr.mxu0 %v728
  %2869 = vmatpush1.msra.mxu0 %v727
  %2870 = vmatprep.subr.mxu0 %v732
  %2871 = vmatpush1.msra.mxu0 %v731
  %2872 = vmatprep.subr.mxu0 %v736
  %2873 = vmatpush1.msra.mxu0 %v735
  %2874 = vmatprep.subr.mxu0 %v740
  %2875 = vmatpush1.msra.mxu0 %v739
  %2876 = vmatprep.subr.mxu0 %v744
  %2877 = vmatpush1.msra.mxu0 %v743
  %2878 = vmatprep.subr.mxu0 %v748
  %2879 = vmatpush1.msra.mxu0 %v747
  %2880 = vmatprep.subr.mxu0 %v752
  %2881 = vmatpush1.msra.mxu0 %v751
  %2882 = vmatprep.subr.mxu0 %v756
  %2883 = vmatpush1.msra.mxu0 %v755
  %2884 = vmatprep.subr.mxu0 %v760
  %2885 = vmatpush1.msra.mxu0 %v759
  %2886 = vmatprep.subr.mxu0 %v764
  %2887 = vmatpush1.msra.mxu0 %v763
  %2888 = vmatprep.subr.mxu0 %v768
  %2889 = vmatpush1.msra.mxu0 %v767
  %2890 = vmatprep.mubr.f32.mxu0 %v2583
  %2891 = vmatmul.mubr.f32.gmra.mrb[0].mxu0 %v2754
  %v2892 = vpop.f32.mrb[0].mxu0
  %v2893 = vadd.f32 %v390, %v2892
  %v2894 = vpop.f32.mrb[0].mxu0
  %v2895 = vadd.f32 %v394, %v2894
  %2896 = vdwg.mxu0
  %v2897 = vmul.f32 %v2822, 0.5
  %v2898 = vtanh.pop %v2897
  %v2899 = vmul.f32 %v2898, 0.5
  %v2900 = vadd.f32 %v2899, 0.5
  %v2901 = vmul.f32 %v2824, 0.5
  %v2902 = vtanh.pop %v2901
  %v2903 = vmul.f32 %v2902, 0.5
  %v2904 = vadd.f32 %v2903, 0.5
  %v2905 = vtanh.pop %v2893
  %v2906 = vmul.f32 %v2895, 0.5
  %v2907 = vtanh.pop %v2906
  %v2908 = vmul.f32 %v2907, 0.5
  %v2909 = vadd.f32 %v2908, 0.5
  %v2910 = vmul.f32 %v2904, %v2581
  %v2911 = vmul.f32 %v2900, %v2905
  %v2912 = vadd.f32 %v2910, %v2911
  %v2913 = vtanh.pop %v2912
  %v2914 = vmul.f32 %v2909, %v2913
  %s2915 = smul.u32 7, 4
  %s2916 = smul.addr %s2915, 8
  %s2917 = scalar_lea.vmem [#allocation2], %s2916
  %v2918 = vld [vmem:[%s2917] sm:$0xff]
  %v2919 = vld [vmem:[%s2917 + $0x8] sm:$0xff]
  %v2920 = vld [vmem:[%s2917 + $0x10] sm:$0xff]
  %v2921 = vld [vmem:[%s2917 + $0x18] sm:$0xff]
  %2922 = vmatprep.subr.mxu0 %v414
  %2923 = vmatpush1.msra.mxu0 %v413
  %2924 = vmatprep.subr.mxu0 %v418
  %2925 = vmatpush1.msra.mxu0 %v417
  %2926 = vmatprep.subr.mxu0 %v422
  %2927 = vmatpush1.msra.mxu0 %v421
  %2928 = vmatprep.subr.mxu0 %v426
  %2929 = vmatpush1.msra.mxu0 %v425
  %2930 = vmatprep.subr.mxu0 %v430
  %2931 = vmatpush1.msra.mxu0 %v429
  %2932 = vmatprep.subr.mxu0 %v434
  %2933 = vmatpush1.msra.mxu0 %v433
  %2934 = vmatprep.subr.mxu0 %v438
  %2935 = vmatpush1.msra.mxu0 %v437
  %2936 = vmatprep.subr.mxu0 %v442
  %2937 = vmatpush1.msra.mxu0 %v441
  %2938 = vmatprep.subr.mxu0 %v446
  %2939 = vmatpush1.msra.mxu0 %v445
  %2940 = vmatprep.subr.mxu0 %v450
  %2941 = vmatpush1.msra.mxu0 %v449
  %2942 = vmatprep.subr.mxu0 %v454
  %2943 = vmatpush1.msra.mxu0 %v453
  %2944 = vmatprep.subr.mxu0 %v458
  %2945 = vmatpush1.msra.mxu0 %v457
  %2946 = vmatprep.subr.mxu0 %v462
  %2947 = vmatpush1.msra.mxu0 %v461
  %2948 = vmatprep.subr.mxu0 %v466
  %2949 = vmatpush1.msra.mxu0 %v465
  %2950 = vmatprep.subr.mxu0 %v470
  %2951 = vmatpush1.msra.mxu0 %v469
  %2952 = vmatprep.subr.mxu0 %v474
  %2953 = vmatpush1.msra.mxu0 %v473
  %2954 = vmatprep.subr.mxu0 0.0
  %2955 = vmatpush1.msra.mxu0 0.0
  %2956 = vmatprep.subr.mxu0 0.0
  %2957 = vmatpush1.msra.mxu0 0.0
  %2958 = vmatprep.subr.mxu0 0.0
  %2959 = vmatpush1.msra.mxu0 0.0
  %2960 = vmatprep.subr.mxu0 0.0
  %2961 = vmatpush1.msra.mxu0 0.0
  %2962 = vmatprep.subr.mxu0 0.0
  %2963 = vmatpush1.msra.mxu0 0.0
  %2964 = vmatprep.subr.mxu0 0.0
  %2965 = vmatpush1.msra.mxu0 0.0
  %2966 = vmatprep.subr.mxu0 0.0
  %2967 = vmatpush1.msra.mxu0 0.0
  %2968 = vmatprep.subr.mxu0 0.0
  %2969 = vmatpush1.msra.mxu0 0.0
  %2970 = vmatprep.subr.mxu0 0.0
  %2971 = vmatpush1.msra.mxu0 0.0
  %2972 = vmatprep.subr.mxu0 0.0
  %2973 = vmatpush1.msra.mxu0 0.0
  %2974 = vmatprep.subr.mxu0 0.0
  %2975 = vmatpush1.msra.mxu0 0.0
  %2976 = vmatprep.subr.mxu0 0.0
  %2977 = vmatpush1.msra.mxu0 0.0
  %2978 = vmatprep.subr.mxu0 0.0
  %2979 = vmatpush1.msra.mxu0 0.0
  %2980 = vmatprep.subr.mxu0 0.0
  %2981 = vmatpush1.msra.mxu0 0.0
  %2982 = vmatprep.subr.mxu0 0.0
  %2983 = vmatpush1.msra.mxu0 0.0
  %2984 = vmatprep.subr.mxu0 0.0
  %2985 = vmatpush1.msra.mxu0 0.0
  %2986 = vmatprep.mubr.f32.mxu0 0.0
  %2987 = vmatmul.mubr.f32.gmra.mrb[0].mxu0 %v2754
  %v2988 = vpop.f32.mrb[0].mxu0
  %v2989 = vadd.f32 0.0, %v2988
  %v2990 = vpop.f32.mrb[0].mxu0
  %v2991 = vadd.f32 0.0, %v2990
  %2992 = vdwg.mxu0
  %2993 = vmatprep.subr.mxu0 %v416
  %2994 = vmatpush1.msra.mxu0 %v415
  %2995 = vmatprep.subr.mxu0 %v420
  %2996 = vmatpush1.msra.mxu0 %v419
  %2997 = vmatprep.subr.mxu0 %v424
  %2998 = vmatpush1.msra.mxu0 %v423
  %2999 = vmatprep.subr.mxu0 %v428
  %3000 = vmatpush1.msra.mxu0 %v427
  %3001 = vmatprep.subr.mxu0 %v432
  %3002 = vmatpush1.msra.mxu0 %v431
  %3003 = vmatprep.subr.mxu0 %v436
  %3004 = vmatpush1.msra.mxu0 %v435
  %3005 = vmatprep.subr.mxu0 %v440
  %3006 = vmatpush1.msra.mxu0 %v439
  %3007 = vmatprep.subr.mxu0 %v444
  %3008 = vmatpush1.msra.mxu0 %v443
  %3009 = vmatprep.subr.mxu0 %v448
  %3010 = vmatpush1.msra.mxu0 %v447
  %3011 = vmatprep.subr.mxu0 %v452
  %3012 = vmatpush1.msra.mxu0 %v451
  %3013 = vmatprep.subr.mxu0 %v456
  %3014 = vmatpush1.msra.mxu0 %v455
  %3015 = vmatprep.subr.mxu0 %v460
  %3016 = vmatpush1.msra.mxu0 %v459
  %3017 = vmatprep.subr.mxu0 %v464
  %3018 = vmatpush1.msra.mxu0 %v463
  %3019 = vmatprep.subr.mxu0 %v468
  %3020 = vmatpush1.msra.mxu0 %v467
  %3021 = vmatprep.subr.mxu0 %v472
  %3022 = vmatpush1.msra.mxu0 %v471
  %3023 = vmatprep.subr.mxu0 %v476
  %3024 = vmatpush1.msra.mxu0 %v475
  %3025 = vmatprep.subr.mxu0 0.0
  %3026 = vmatpush1.msra.mxu0 0.0
  %3027 = vmatprep.subr.mxu0 0.0
  %3028 = vmatpush1.msra.mxu0 0.0
  %3029 = vmatprep.subr.mxu0 0.0
  %3030 = vmatpush1.msra.mxu0 0.0
  %3031 = vmatprep.subr.mxu0 0.0
  %3032 = vmatpush1.msra.mxu0 0.0
  %3033 = vmatprep.subr.mxu0 0.0
  %3034 = vmatpush1.msra.mxu0 0.0
  %3035 = vmatprep.subr.mxu0 0.0
  %3036 = vmatpush1.msra.mxu0 0.0
  %3037 = vmatprep.subr.mxu0 0.0
  %3038 = vmatpush1.msra.mxu0 0.0
  %3039 = vmatprep.subr.mxu0 0.0
  %3040 = vmatpush1.msra.mxu0 0.0
  %3041 = vmatprep.subr.mxu0 0.0
  %3042 = vmatpush1.msra.mxu0 0.0
  %3043 = vmatprep.subr.mxu0 0.0
  %3044 = vmatpush1.msra.mxu0 0.0
  %3045 = vmatprep.subr.mxu0 0.0
  %3046 = vmatpush1.msra.mxu0 0.0
  %3047 = vmatprep.subr.mxu0 0.0
  %3048 = vmatpush1.msra.mxu0 0.0
  %3049 = vmatprep.subr.mxu0 0.0
  %3050 = vmatpush1.msra.mxu0 0.0
  %3051 = vmatprep.subr.mxu0 0.0
  %3052 = vmatpush1.msra.mxu0 0.0
  %3053 = vmatprep.subr.mxu0 0.0
  %3054 = vmatpush1.msra.mxu0 0.0
  %3055 = vmatprep.subr.mxu0 0.0
  %3056 = vmatpush1.msra.mxu0 0.0
  %3057 = vmatprep.mubr.f32.mxu0 0.0
  %3058 = vmatmul.mubr.f32.gmra.mrb[0].mxu0 %v2754
  %v3059 = vpop.f32.mrb[0].mxu0
  %v3060 = vadd.f32 0.0, %v3059
  %v3061 = vpop.f32.mrb[0].mxu0
  %v3062 = vadd.f32 0.0, %v3061
  %3063 = vdwg.mxu0
  %v3064 = vadd.f32 %v2918, %v2989
  %v3065 = vadd.f32 %v2919, %v2991
  %v3066 = vadd.f32 %v2920, %v3060
  %v3067 = vadd.f32 %v2921, %v3062
  %v3068 = vmul.f32 %v3064, 0.5
  %v3069 = vtanh.pop %v3068
  %v3070 = vmul.f32 %v3069, 0.5
  %v3071 = vadd.f32 %v3070, 0.5
  %v3072 = vmul.f32 %v3065, 0.5
  %v3073 = vtanh.pop %v3072
  %v3074 = vmul.f32 %v3073, 0.5
  %v3075 = vadd.f32 %v3074, 0.5
  %v3076 = vtanh.pop %v3066
  %v3077 = vmul.f32 %v3067, 0.5
  %v3078 = vtanh.pop %v3077
  %v3079 = vmul.f32 %v3078, 0.5
  %v3080 = vadd.f32 %v3079, 0.5
  %v3081 = vmul.f32 %v3075, %v2752
  %v3082 = vmul.f32 %v3071, %v3076
  %v3083 = vadd.f32 %v3081, %v3082
  %v3084 = vtanh.pop %v3083
  %v3085 = vmul.f32 %v3080, %v3084
  %3086 = vmatprep.subr.mxu0 %v642
  %3087 = vmatpush1.msra.mxu0 %v641
  %3088 = vmatprep.subr.mxu0 %v646
  %3089 = vmatpush1.msra.mxu0 %v645
  %3090 = vmatprep.subr.mxu0 %v650
  %3091 = vmatpush1.msra.mxu0 %v649
  %3092 = vmatprep.subr.mxu0 %v654
  %3093 = vmatpush1.msra.mxu0 %v653
  %3094 = vmatprep.subr.mxu0 %v658
  %3095 = vmatpush1.msra.mxu0 %v657
  %3096 = vmatprep.subr.mxu0 %v662
  %3097 = vmatpush1.msra.mxu0 %v661
  %3098 = vmatprep.subr.mxu0 %v666
  %3099 = vmatpush1.msra.mxu0 %v665
  %3100 = vmatprep.subr.mxu0 %v670
  %3101 = vmatpush1.msra.mxu0 %v669
  %3102 = vmatprep.subr.mxu0 %v674
  %3103 = vmatpush1.msra.mxu0 %v673
  %3104 = vmatprep.subr.mxu0 %v678
  %3105 = vmatpush1.msra.mxu0 %v677
  %3106 = vmatprep.subr.mxu0 %v682
  %3107 = vmatpush1.msra.mxu0 %v681
  %3108 = vmatprep.subr.mxu0 %v686
  %3109 = vmatpush1.msra.mxu0 %v685
  %3110 = vmatprep.subr.mxu0 %v690
  %3111 = vmatpush1.msra.mxu0 %v689
  %3112 = vmatprep.subr.mxu0 %v694
  %3113 = vmatpush1.msra.mxu0 %v693
  %3114 = vmatprep.subr.mxu0 %v698
  %3115 = vmatpush1.msra.mxu0 %v697
  %3116 = vmatprep.subr.mxu0 %v702
  %3117 = vmatpush1.msra.mxu0 %v701
  %3118 = vmatprep.subr.mxu0 %v706
  %3119 = vmatpush1.msra.mxu0 %v705
  %3120 = vmatprep.subr.mxu0 %v710
  %3121 = vmatpush1.msra.mxu0 %v709
  %3122 = vmatprep.subr.mxu0 %v714
  %3123 = vmatpush1.msra.mxu0 %v713
  %3124 = vmatprep.subr.mxu0 %v718
  %3125 = vmatpush1.msra.mxu0 %v717
  %3126 = vmatprep.subr.mxu0 %v722
  %3127 = vmatpush1.msra.mxu0 %v721
  %3128 = vmatprep.subr.mxu0 %v726
  %3129 = vmatpush1.msra.mxu0 %v725
  %3130 = vmatprep.subr.mxu0 %v730
  %3131 = vmatpush1.msra.mxu0 %v729
  %3132 = vmatprep.subr.mxu0 %v734
  %3133 = vmatpush1.msra.mxu0 %v733
  %3134 = vmatprep.subr.mxu0 %v738
  %3135 = vmatpush1.msra.mxu0 %v737
  %3136 = vmatprep.subr.mxu0 %v742
  %3137 = vmatpush1.msra.mxu0 %v741
  %3138 = vmatprep.subr.mxu0 %v746
  %3139 = vmatpush1.msra.mxu0 %v745
  %3140 = vmatprep.subr.mxu0 %v750
  %3141 = vmatpush1.msra.mxu0 %v749
  %3142 = vmatprep.subr.mxu0 %v754
  %3143 = vmatpush1.msra.mxu0 %v753
  %3144 = vmatprep.subr.mxu0 %v758
  %3145 = vmatpush1.msra.mxu0 %v757
  %3146 = vmatprep.subr.mxu0 %v762
  %3147 = vmatpush1.msra.mxu0 %v761
  %3148 = vmatprep.subr.mxu0 %v766
  %3149 = vmatpush1.msra.mxu0 %v765
  %3150 = vmatprep.mubr.f32.mxu0 %v2914
  %3151 = vmatmul.mubr.f32.gmra.mrb[0].mxu0 %v3085
  %v3152 = vpop.f32.mrb[0].mxu0
  %v3153 = vadd.f32 %v382, %v3152
  %v3154 = vpop.f32.mrb[0].mxu0
  %v3155 = vadd.f32 %v386, %v3154
  %3156 = vdwg.mxu0
  %3157 = vmatprep.subr.mxu0 %v644
  %3158 = vmatpush1.msra.mxu0 %v643
  %3159 = vmatprep.subr.mxu0 %v648
  %3160 = vmatpush1.msra.mxu0 %v647
  %3161 = vmatprep.subr.mxu0 %v652
  %3162 = vmatpush1.msra.mxu0 %v651
  %3163 = vmatprep.subr.mxu0 %v656
  %3164 = vmatpush1.msra.mxu0 %v655
  %3165 = vmatprep.subr.mxu0 %v660
  %3166 = vmatpush1.msra.mxu0 %v659
  %3167 = vmatprep.subr.mxu0 %v664
  %3168 = vmatpush1.msra.mxu0 %v663
  %3169 = vmatprep.subr.mxu0 %v668
  %3170 = vmatpush1.msra.mxu0 %v667
  %3171 = vmatprep.subr.mxu0 %v672
  %3172 = vmatpush1.msra.mxu0 %v671
  %3173 = vmatprep.subr.mxu0 %v676
  %3174 = vmatpush1.msra.mxu0 %v675
  %3175 = vmatprep.subr.mxu0 %v680
  %3176 = vmatpush1.msra.mxu0 %v679
  %3177 = vmatprep.subr.mxu0 %v684
  %3178 = vmatpush1.msra.mxu0 %v683
  %3179 = vmatprep.subr.mxu0 %v688
  %3180 = vmatpush1.msra.mxu0 %v687
  %3181 = vmatprep.subr.mxu0 %v692
  %3182 = vmatpush1.msra.mxu0 %v691
  %3183 = vmatprep.subr.mxu0 %v696
  %3184 = vmatpush1.msra.mxu0 %v695
  %3185 = vmatprep.subr.mxu0 %v700
  %3186 = vmatpush1.msra.mxu0 %v699
  %3187 = vmatprep.subr.mxu0 %v704
  %3188 = vmatpush1.msra.mxu0 %v703
  %3189 = vmatprep.subr.mxu0 %v708
  %3190 = vmatpush1.msra.mxu0 %v707
  %3191 = vmatprep.subr.mxu0 %v712
  %3192 = vmatpush1.msra.mxu0 %v711
  %3193 = vmatprep.subr.mxu0 %v716
  %3194 = vmatpush1.msra.mxu0 %v715
  %3195 = vmatprep.subr.mxu0 %v720
  %3196 = vmatpush1.msra.mxu0 %v719
  %3197 = vmatprep.subr.mxu0 %v724
  %3198 = vmatpush1.msra.mxu0 %v723
  %3199 = vmatprep.subr.mxu0 %v728
  %3200 = vmatpush1.msra.mxu0 %v727
  %3201 = vmatprep.subr.mxu0 %v732
  %3202 = vmatpush1.msra.mxu0 %v731
  %3203 = vmatprep.subr.mxu0 %v736
  %3204 = vmatpush1.msra.mxu0 %v735
  %3205 = vmatprep.subr.mxu0 %v740
  %3206 = vmatpush1.msra.mxu0 %v739
  %3207 = vmatprep.subr.mxu0 %v744
  %3208 = vmatpush1.msra.mxu0 %v743
  %3209 = vmatprep.subr.mxu0 %v748
  %3210 = vmatpush1.msra.mxu0 %v747
  %3211 = vmatprep.subr.mxu0 %v752
  %3212 = vmatpush1.msra.mxu0 %v751
  %3213 = vmatprep.subr.mxu0 %v756
  %3214 = vmatpush1.msra.mxu0 %v755
  %3215 = vmatprep.subr.mxu0 %v760
  %3216 = vmatpush1.msra.mxu0 %v759
  %3217 = vmatprep.subr.mxu0 %v764
  %3218 = vmatpush1.msra.mxu0 %v763
  %3219 = vmatprep.subr.mxu0 %v768
  %3220 = vmatpush1.msra.mxu0 %v767
  %3221 = vmatprep.mubr.f32.mxu0 %v2914
  %3222 = vmatmul.mubr.f32.gmra.mrb[0].mxu0 %v3085
  %v3223 = vpop.f32.mrb[0].mxu0
  %v3224 = vadd.f32 %v390, %v3223
  %v3225 = vpop.f32.mrb[0].mxu0
  %v3226 = vadd.f32 %v394, %v3225
  %3227 = vdwg.mxu0
  %v3228 = vmul.f32 %v3153, 0.5
  %v3229 = vtanh.pop %v3228
  %v3230 = vmul.f32 %v3229, 0.5
  %v3231 = vadd.f32 %v3230, 0.5
  %v3232 = vmul.f32 %v3155, 0.5
  %v3233 = vtanh.pop %v3232
  %v3234 = vmul.f32 %v3233, 0.5
  %v3235 = vadd.f32 %v3234, 0.5
  %v3236 = vtanh.pop %v3224
  %v3237 = vmul.f32 %v3226, 0.5
  %v3238 = vtanh.pop %v3237
  %v3239 = vmul.f32 %v3238, 0.5
  %v3240 = vadd.f32 %v3239, 0.5
  %v3241 = vmul.f32 %v3235, %v2912
  %v3242 = vmul.f32 %v3231, %v3236
  %v3243 = vadd.f32 %v3241, %v3242
  %v3244 = vtanh.pop %v3243
  %v3245 = vmul.f32 %v3240, %v3244
  %3246 = vst [vmem:[#allocation3] sm:$0xff] %v3085
  %3247 = vst [vmem:[%s400] sm:$0xff] %v3083
  %3248 = vst [vmem:[%s402] sm:$0xff] %v3245
  %3249 = vst [vmem:[%s404] sm:$0xff] %v3243
  // Predicated region
  $region46: #{lstm_model_forward.1} parent=0 // pred_check
    %p3250 = pneg %p35
  $region47: #{lstm_model_forward.1} parent=0 // pred_check_branch
    %3252 = sbr.rel (%p3250) target = $region49
  $region48: #{lstm_model_forward.1} parent=0 // pred_region
    %v3253 = vld [vmem:[%s6] sm:$0xff]
    %v3254 = vld [vmem:[%s6 + $0x8] sm:$0xff]
    %v3255 = vld [vmem:[%s6 + $0x10] sm:$0xff]
    %v3256 = vld [vmem:[%s6 + $0x18] sm:$0xff]
    %v3257 = vld [vmem:[%s6 + $0x20] sm:$0xff]
    %v3258 = vld [vmem:[%s6 + $0x28] sm:$0xff]
    %v3259 = vld [vmem:[%s6 + $0x30] sm:$0xff]
    %v3260 = vld [vmem:[%s6 + $0x38] sm:$0xff]
    %v3261 = vld [vmem:[%s6 + $0x40] sm:$0xff]
    %v3262 = vld [vmem:[%s6 + $0x48] sm:$0xff]
    %v3263 = vld [vmem:[%s6 + $0x50] sm:$0xff]
    %v3264 = vld [vmem:[%s6 + $0x58] sm:$0xff]
    %v3265 = vld [vmem:[%s6 + $0x60] sm:$0xff]
    %v3266 = vld [vmem:[%s6 + $0x68] sm:$0xff]
    %v3267 = vld [vmem:[%s6 + $0x70] sm:$0xff]
    %v3268 = vld [vmem:[%s6 + $0x78] sm:$0xff]
    %v3269 = vld [vmem:[%s7] sm:$0x1]
    %v3271 = vlaneseq
    %v3272 = vshrl.u32 %v3271, 7
    %v3273 = vsub.s32 0, %v3272
    %v3274 = vrot.slane %v3269, %v3273
    %3276 = vmatprep.subr.mxu0 0.0
    %3277 = vmatpush1.msra.mxu0 %v3253
    %3278 = vmatprep.subr.mxu0 0.0
    %3279 = vmatpush1.msra.mxu0 %v3254
    %3280 = vmatprep.subr.mxu0 0.0
    %3281 = vmatpush1.msra.mxu0 %v3255
    %3282 = vmatprep.subr.mxu0 0.0
    %3283 = vmatpush1.msra.mxu0 %v3256
    %3284 = vmatprep.subr.mxu0 0.0
    %3285 = vmatpush1.msra.mxu0 %v3257
    %3286 = vmatprep.subr.mxu0 0.0
    %3287 = vmatpush1.msra.mxu0 %v3258
    %3288 = vmatprep.subr.mxu0 0.0
    %3289 = vmatpush1.msra.mxu0 %v3259
    %3290 = vmatprep.subr.mxu0 0.0
    %3291 = vmatpush1.msra.mxu0 %v3260
    %3292 = vmatprep.subr.mxu0 0.0
    %3293 = vmatpush1.msra.mxu0 %v3261
    %3294 = vmatprep.subr.mxu0 0.0
    %3295 = vmatpush1.msra.mxu0 %v3262
    %3296 = vmatprep.subr.mxu0 0.0
    %3297 = vmatpush1.msra.mxu0 %v3263
    %3298 = vmatprep.subr.mxu0 0.0
    %3299 = vmatpush1.msra.mxu0 %v3264
    %3300 = vmatprep.subr.mxu0 0.0
    %3301 = vmatpush1.msra.mxu0 %v3265
    %3302 = vmatprep.subr.mxu0 0.0
    %3303 = vmatpush1.msra.mxu0 %v3266
    %3304 = vmatprep.subr.mxu0 0.0
    %3305 = vmatpush1.msra.mxu0 %v3267
    %3306 = vmatprep.subr.mxu0 0.0
    %3307 = vmatpush1.msra.mxu0 %v3268
    %3308 = vmatprep.subr.mxu0 0.0
    %3309 = vmatpush1.msra.mxu0 0.0
    %3310 = vmatprep.subr.mxu0 0.0
    %3311 = vmatpush1.msra.mxu0 0.0
    %3312 = vmatprep.subr.mxu0 0.0
    %3313 = vmatpush1.msra.mxu0 0.0
    %3314 = vmatprep.subr.mxu0 0.0
    %3315 = vmatpush1.msra.mxu0 0.0
    %3316 = vmatprep.subr.mxu0 0.0
    %3317 = vmatpush1.msra.mxu0 0.0
    %3318 = vmatprep.subr.mxu0 0.0
    %3319 = vmatpush1.msra.mxu0 0.0
    %3320 = vmatprep.subr.mxu0 0.0
    %3321 = vmatpush1.msra.mxu0 0.0
    %3322 = vmatprep.subr.mxu0 0.0
    %3323 = vmatpush1.msra.mxu0 0.0
    %3324 = vmatprep.subr.mxu0 0.0
    %3325 = vmatpush1.msra.mxu0 0.0
    %3326 = vmatprep.subr.mxu0 0.0
    %3327 = vmatpush1.msra.mxu0 0.0
    %3328 = vmatprep.subr.mxu0 0.0
    %3329 = vmatpush1.msra.mxu0 0.0
    %3330 = vmatprep.subr.mxu0 0.0
    %3331 = vmatpush1.msra.mxu0 0.0
    %3332 = vmatprep.subr.mxu0 0.0
    %3333 = vmatpush1.msra.mxu0 0.0
    %3334 = vmatprep.subr.mxu0 0.0
    %3335 = vmatpush1.msra.mxu0 0.0
    %3336 = vmatprep.subr.mxu0 0.0
    %3337 = vmatpush1.msra.mxu0 0.0
    %3338 = vmatprep.subr.mxu0 0.0
    %3339 = vmatpush1.msra.mxu0 0.0
    %3340 = vmatprep.mubr.f32.mxu0 0.0
    %3341 = vmatmul.mubr.f32.gmra.mrb[0].mxu0 %v3245
    %v3342 = vpop.f32.mrb[0].mxu0
    %v3343 = vadd.f32 %v3274, %v3342
    %v3344 = vpop.f32.mrb[0].mxu0
    %3345 = vdwg.mxu0
    %v3346 = vmax.f32 %v3343, 0.0
    %v3347 = vld [vmem:[%s8] sm:$0xff]
    %v3348 = vld [vmem:[%s8 + $0x8] sm:$0xff]
    %v3349 = vld [vmem:[%s8 + $0x10] sm:$0xff]
    %v3350 = vld [vmem:[%s8 + $0x18] sm:$0xff]
    %v3351 = vld [vmem:[%s8 + $0x20] sm:$0xff]
    %v3352 = vld [vmem:[%s8 + $0x28] sm:$0xff]
    %v3353 = vld [vmem:[%s8 + $0x30] sm:$0xff]
    %v3354 = vld [vmem:[%s8 + $0x38] sm:$0xff]
    %v3355 = vld [vmem:[%s8 + $0x40] sm:$0xff]
    %v3356 = vld [vmem:[%s8 + $0x48] sm:$0xff]
    %v3357 = vld [vmem:[%s8 + $0x50] sm:$0xff]
    %v3358 = vld [vmem:[%s8 + $0x58] sm:$0xff]
    %v3359 = vld [vmem:[%s8 + $0x60] sm:$0xff]
    %v3360 = vld [vmem:[%s8 + $0x68] sm:$0xff]
    %v3361 = vld [vmem:[%s8 + $0x70] sm:$0xff]
    %v3362 = vld [vmem:[%s8 + $0x78] sm:$0xff]
    %v3363 = vld [vmem:[%s9] sm:$0x1]
    %v3365 = vlaneseq
    %v3366 = vshrl.u32 %v3365, 7
    %v3367 = vsub.s32 0, %v3366
    %v3368 = vrot.slane %v3363, %v3367
    %3370 = vmatprep.subr.mxu0 0.0
    %3371 = vmatpush1.msra.mxu0 %v3347
    %3372 = vmatprep.subr.mxu0 0.0
    %3373 = vmatpush1.msra.mxu0 %v3348
    %3374 = vmatprep.subr.mxu0 0.0
    %3375 = vmatpush1.msra.mxu0 %v3349
    %3376 = vmatprep.subr.mxu0 0.0
    %3377 = vmatpush1.msra.mxu0 %v3350
    %3378 = vmatprep.subr.mxu0 0.0
    %3379 = vmatpush1.msra.mxu0 %v3351
    %3380 = vmatprep.subr.mxu0 0.0
    %3381 = vmatpush1.msra.mxu0 %v3352
    %3382 = vmatprep.subr.mxu0 0.0
    %3383 = vmatpush1.msra.mxu0 %v3353
    %3384 = vmatprep.subr.mxu0 0.0
    %3385 = vmatpush1.msra.mxu0 %v3354
    %3386 = vmatprep.subr.mxu0 0.0
    %3387 = vmatpush1.msra.mxu0 %v3355
    %3388 = vmatprep.subr.mxu0 0.0
    %3389 = vmatpush1.msra.mxu0 %v3356
    %3390 = vmatprep.subr.mxu0 0.0
    %3391 = vmatpush1.msra.mxu0 %v3357
    %3392 = vmatprep.subr.mxu0 0.0
    %3393 = vmatpush1.msra.mxu0 %v3358
    %3394 = vmatprep.subr.mxu0 0.0
    %3395 = vmatpush1.msra.mxu0 %v3359
    %3396 = vmatprep.subr.mxu0 0.0
    %3397 = vmatpush1.msra.mxu0 %v3360
    %3398 = vmatprep.subr.mxu0 0.0
    %3399 = vmatpush1.msra.mxu0 %v3361
    %3400 = vmatprep.subr.mxu0 0.0
    %3401 = vmatpush1.msra.mxu0 %v3362
    %3402 = vmatprep.subr.mxu0 0.0
    %3403 = vmatpush1.msra.mxu0 0.0
    %3404 = vmatprep.subr.mxu0 0.0
    %3405 = vmatpush1.msra.mxu0 0.0
    %3406 = vmatprep.subr.mxu0 0.0
    %3407 = vmatpush1.msra.mxu0 0.0
    %3408 = vmatprep.subr.mxu0 0.0
    %3409 = vmatpush1.msra.mxu0 0.0
    %3410 = vmatprep.subr.mxu0 0.0
    %3411 = vmatpush1.msra.mxu0 0.0
    %3412 = vmatprep.subr.mxu0 0.0
    %3413 = vmatpush1.msra.mxu0 0.0
    %3414 = vmatprep.subr.mxu0 0.0
    %3415 = vmatpush1.msra.mxu0 0.0
    %3416 = vmatprep.subr.mxu0 0.0
    %3417 = vmatpush1.msra.mxu0 0.0
    %3418 = vmatprep.subr.mxu0 0.0
    %3419 = vmatpush1.msra.mxu0 0.0
    %3420 = vmatprep.subr.mxu0 0.0
    %3421 = vmatpush1.msra.mxu0 0.0
    %3422 = vmatprep.subr.mxu0 0.0
    %3423 = vmatpush1.msra.mxu0 0.0
    %3424 = vmatprep.subr.mxu0 0.0
    %3425 = vmatpush1.msra.mxu0 0.0
    %3426 = vmatprep.subr.mxu0 0.0
    %3427 = vmatpush1.msra.mxu0 0.0
    %3428 = vmatprep.subr.mxu0 0.0
    %3429 = vmatpush1.msra.mxu0 0.0
    %3430 = vmatprep.subr.mxu0 0.0
    %3431 = vmatpush1.msra.mxu0 0.0
    %3432 = vmatprep.subr.mxu0 0.0
    %3433 = vmatpush1.msra.mxu0 0.0
    %3434 = vmatprep.mubr.f32.mxu0 0.0
    %3435 = vmatmul.mubr.f32.gmra.mrb[0].mxu0 %v3346
    %v3436 = vpop.f32.mrb[0].mxu0
    %v3437 = vadd.f32 %v3368, %v3436
    %v3438 = vpop.f32.mrb[0].mxu0
    %3439 = vdwg.mxu0
    %3440 = vst [vmem:[%s10] sm:$0xff] %v3437
  $region49: #{lstm_model_forward.1} parent=0 // pred_fallthru
    _
  // Predicated region
  $region50: #{lstm_model_forward.1} parent=0 // pred_check
    _
  $region51: #{lstm_model_forward.1} parent=0 // pred_check_branch
    %3442 = sbr.rel (0) target = $region53
  $region52: #{lstm_model_forward.1} parent=0 // pred_region
    _
  $region53: #{lstm_model_forward.1} parent=0 // pred_fallthru
    _
  // Predicated region
  $region54: #{lstm_model_forward.1} parent=0 // pred_check
    _
  $region55: #{lstm_model_forward.1} parent=0 // pred_check_branch
    %3444 = sbr.rel (0) target = $region57
  $region56: #{lstm_model_forward.1} parent=0 // pred_region
    _
  $region57: #{lstm_model_forward.1} parent=0 // pred_fallthru
    _

</llo_original>
